<compile_context>
chip_gen: v6e
topology: v6e:2x2x1
jax: 0.10.0
libtpu: 0.0.40
codegen_flags: <defaults>
</compile_context>

<pallas_src>
import jax
import jax.numpy as jnp
from jax import lax
from jax.experimental import pallas as pl
from jax.experimental.pallas import tpu as pltpu

# ----------------------------- model dims ---------------------------------
FC_SIZE = 16
HIDDEN_SIZE = 32
INPUT_SIZE = 768
NUM_LAYERS = 1  # single-layer GRU (matches the module's num_layers=1 usage)


# ----------------------------- Pallas kernel -------------------------------
def _triplet_gru_kernel(x_ref, len_ref, wih_ref, bx_ref,
                        whr_ref, whz_ref, whn_ref, bhn_ref,
                        wfc_ref, bfc_ref, out_ref,
                        gxr_ref, gxz_ref, gxn_ref):
    # x_ref:   (T*rows, D)  time-major, rows = 3*B padded to multiple of 8
    # len_ref: (rows, 1)    int32 true sequence length per row (0 for padding rows)
    # wih_ref: (D, 3H)      gate order [r | z | n]  (W_ih^T)
    # bx_ref:  (1, 3H)      [b_ir+b_hr | b_iz+b_hz | b_in]
    # wh*_ref: (H, H)       per-gate W_hh^T columns
    # bhn_ref: (1, H)       b_hn (must stay inside the r*(.) term)
    # wfc_ref: (H, F), bfc_ref: (1, F)
    # out_ref: (rows, F)
    # gx*_ref: (T*rows, H)  VMEM scratch, gate-aligned hoisted projection
    rows = out_ref.shape[0]
    H = whr_ref.shape[0]
    T = x_ref.shape[0] // rows

    # --- hoisted input projection: ONE big MXU matmul, outside the recurrence ---
    gx = jnp.dot(x_ref[...], wih_ref[...],
                 preferred_element_type=jnp.float32) + bx_ref[...]     # (T*rows, 3H)
    # split into gate-aligned scratch once (no per-step lane sub-slicing)
    gxr_ref[...] = gx[:, 0:H]
    gxz_ref[...] = gx[:, H:2 * H]
    gxn_ref[...] = gx[:, 2 * H:3 * H]

    # loop-invariant values held in vregs across the unrolled recurrence
    whr = whr_ref[...]
    whz = whz_ref[...]
    whn = whn_ref[...]
    bhn = jnp.broadcast_to(bhn_ref[...], (rows, H))
    lens = jnp.broadcast_to(len_ref[...], (rows, H))

    def step(t, h):
        r0 = pl.multiple_of(t * rows, rows)
        gxr = gxr_ref[pl.ds(r0, rows), :]
        gxz = gxz_ref[pl.ds(r0, rows), :]
        gxn = gxn_ref[pl.ds(r0, rows), :]
        # only the tiny H=32 recurrent matmuls remain on the serial chain
        gh_r = jnp.dot(h, whr, preferred_element_type=jnp.float32)
        gh_z = jnp.dot(h, whz, preferred_element_type=jnp.float32)
        gh_n = jnp.dot(h, whn, preferred_element_type=jnp.float32)
        r = jax.nn.sigmoid(gxr + gh_r)
        z = jax.nn.sigmoid(gxz + gh_z)
        n = jnp.tanh(gxn + r * (gh_n + bhn))
        h_new = (1.0 - z) * n + z * h
        # pack_padded_sequence semantics: freeze h once t >= length[row]
        return jnp.where(t < lens, h_new, h)

    h = lax.fori_loop(0, T, step, jnp.zeros((rows, H), jnp.float32),
                      unroll=True)

    out_ref[...] = (jnp.dot(h, wfc_ref[...], preferred_element_type=jnp.float32)
                    + bfc_ref[...]).astype(out_ref.dtype)


# ----------------------------- wrapper --------------------------------------
def triplet_gru_forward(anchor, a_len, positive, p_len, negative, n_len, params):
    """anchor/positive/negative: (B, T, D); *_len: (B,) int32.
    Returns three arrays of shape (num_layers=1, B, FC_SIZE), matching the
    PyTorch module's (gru_hidden -> fc) outputs."""
    wih, whh, bih, bhh, wfc, bfc = params
    B, T, D = anchor.shape
    H = whh.shape[0]
    F = wfc.shape[1]
    G = 3
    rows = G * B
    rows_p = ((rows + 7) // 8) * 8          # pad to a full sublane group

    # fold the three groups into the batch dim, time-major: (T, 3B, D)
    xs = jnp.stack([anchor, positive, negative], axis=0)           # (3, B, T, D)
    x_tm = jnp.transpose(xs, (2, 0, 1, 3)).reshape(T, rows, D)
    x_tm = jnp.pad(x_tm, ((0, 0), (0, rows_p - rows), (0, 0)))
    x2d = x_tm.reshape(T * rows_p, D).astype(jnp.float32)          # (T*rows_p, D)

    lens = jnp.concatenate([a_len, p_len, n_len]).astype(jnp.int32)
    lens = jnp.pad(lens, (0, rows_p - rows)).reshape(rows_p, 1)    # pad rows -> len 0

    wih_f = wih.astype(jnp.float32)
    whh_f = whh.astype(jnp.float32)
    bih_f = bih.astype(jnp.float32)
    bhh_f = bhh.astype(jnp.float32)

    # pre-fold biases: r/z gates get b_ih+b_hh; n gate gets b_in here, b_hn separately
    bx = jnp.concatenate([bih_f[0:H] + bhh_f[0:H],
                          bih_f[H:2 * H] + bhh_f[H:2 * H],
                          bih_f[2 * H:3 * H]]).reshape(1, 3 * H)
    bhn = bhh_f[2 * H:3 * H].reshape(1, H)

    # gate-aligned recurrent weights
    whr = whh_f[:, 0:H]
    whz = whh_f[:, H:2 * H]
    whn = whh_f[:, 2 * H:3 * H]

    vmem = pl.BlockSpec(memory_space=pltpu.MemorySpace.VMEM)
    out = pl.pallas_call(
        _triplet_gru_kernel,
        out_shape=jax.ShapeDtypeStruct((rows_p, F), jnp.float32),
        in_specs=[vmem] * 10,
        out_specs=vmem,
        scratch_shapes=[pltpu.VMEM((T * rows_p, H), jnp.float32)] * 3,
    )(x2d, lens, wih_f, bx, whr, whz, whn, bhn,
      wfc.astype(jnp.float32), bfc.reshape(1, F).astype(jnp.float32))

    out3 = out[:rows].reshape(G, B, F)
    # shape (num_layers=1, B, FC_SIZE) for each of the triplet
    return out3[0:1], out3[1:2], out3[2:3]


# ----------------------------- pure-JAX reference --------------------------
def _reference_single(x, lengths, params):
    wih, whh, bih, bhh, wfc, bfc = params
    B, T, D = x.shape
    H = whh.shape[0]
    h = jnp.zeros((B, H), jnp.float32)
    for t in range(T):
        gx = x[:, t].astype(jnp.float32) @ wih + bih
        gh = h @ whh + bhh
        r = jax.nn.sigmoid(gx[:, :H] + gh[:, :H])
        z = jax.nn.sigmoid(gx[:, H:2 * H] + gh[:, H:2 * H])
        n = jnp.tanh(gx[:, 2 * H:] + r * gh[:, 2 * H:])
        h_new = (1.0 - z) * n + z * h
        m = (t < lengths).astype(jnp.float32)[:, None]
        h = m * h_new + (1.0 - m) * h
    return (h @ wfc + bfc)[None]   # (1, B, F)


# ----------------------------- main ----------------------------------------
if __name__ == "__main__":
    B, T = 2, 8
    D, H, F = INPUT_SIZE, HIDDEN_SIZE, FC_SIZE

    key = jax.random.PRNGKey(0)
    ks = jax.random.split(key, 10)
    scale = 1.0 / jnp.sqrt(jnp.float32(H))

    # deterministic synthetic parameters (PyTorch-style uniform init range)
    wih = jax.random.uniform(ks[0], (D, 3 * H), jnp.float32, -scale, scale)
    whh = jax.random.uniform(ks[1], (H, 3 * H), jnp.float32, -scale, scale)
    bih = jax.random.uniform(ks[2], (3 * H,), jnp.float32, -scale, scale)
    bhh = jax.random.uniform(ks[3], (3 * H,), jnp.float32, -scale, scale)
    wfc = jax.random.uniform(ks[4], (H, F), jnp.float32, -scale, scale)
    bfc = jax.random.uniform(ks[5], (F,), jnp.float32, -scale, scale)
    params = (wih, whh, bih, bhh, wfc, bfc)

    # variable-length triplet batches, padded to max length T (pad with zeros,
    # mirroring pad_sequence in the PyTorch module)
    a_len = jnp.array([5, 8], jnp.int32)
    p_len = jnp.array([8, 3], jnp.int32)
    n_len = jnp.array([7, 6], jnp.int32)

    def make_batch(k, lengths):
        x = jax.random.normal(k, (B, T, D), jnp.float32)
        pad = (jnp.arange(T)[None, :, None] < lengths[:, None, None])
        return x * pad.astype(jnp.float32)

    anchor = make_batch(ks[6], a_len)
    positive = make_batch(ks[7], p_len)
    negative = make_batch(ks[8], n_len)

    outs = triplet_gru_forward(anchor, a_len, positive, p_len,
                               negative, n_len, params)
    outs = jax.block_until_ready(outs)

    refs = (_reference_single(anchor, a_len, params),
            _reference_single(positive, p_len, params),
            _reference_single(negative, n_len, params))

    for o, r in zip(outs, refs):
        assert o.shape == (NUM_LAYERS, B, F), o.shape
        err = float(jnp.max(jnp.abs(o - r)))
        assert err < 5e-4, err

    print("KERNEL_OK")
</pallas_src>

<mosaic_0001>
module attributes {stable_mosaic.version = 11 : i64} {
  func.func @_triplet_gru_kernel(%arg0: memref<64x768xf32, #tpu.memory_space<vmem>>, %arg1: memref<8x1xi32, #tpu.memory_space<vmem>>, %arg2: memref<768x96xf32, #tpu.memory_space<vmem>>, %arg3: memref<1x96xf32, #tpu.memory_space<vmem>>, %arg4: memref<32x32xf32, #tpu.memory_space<vmem>>, %arg5: memref<32x32xf32, #tpu.memory_space<vmem>>, %arg6: memref<32x32xf32, #tpu.memory_space<vmem>>, %arg7: memref<1x32xf32, #tpu.memory_space<vmem>>, %arg8: memref<32x16xf32, #tpu.memory_space<vmem>>, %arg9: memref<1x16xf32, #tpu.memory_space<vmem>>, %arg10: memref<8x16xf32, #tpu.memory_space<vmem>>, %arg11: memref<64x32xf32, #tpu.memory_space<vmem>>, %arg12: memref<64x32xf32, #tpu.memory_space<vmem>>, %arg13: memref<64x32xf32, #tpu.memory_space<vmem>>) attributes {dimension_semantics = [], scalar_prefetch = 0 : i64, scratch_operands = 3 : i64, tpu.core_type = #tpu.core_type<tc>} {
    %c0 = arith.constant 0 : index
    %c0_0 = arith.constant 0 : index
    %0 = vector.load %arg0[%c0, %c0_0] : memref<64x768xf32, #tpu.memory_space<vmem>>, vector<64x768xf32>
    %c0_1 = arith.constant 0 : index
    %c0_2 = arith.constant 0 : index
    %1 = vector.load %arg2[%c0_1, %c0_2] : memref<768x96xf32, #tpu.memory_space<vmem>>, vector<768x96xf32>
    %cst = arith.constant dense<0.000000e+00> : vector<64x96xf32>
    %2 = tpu.matmul %0, %1, %cst {dimension_numbers = #tpu.dot_dimension_numbers<[1], [0], [0], [1], [0, 0, 1, 1], [], []>} : vector<64x768xf32>, vector<768x96xf32>, vector<64x96xf32> -> vector<64x96xf32>
    %c0_3 = arith.constant 0 : index
    %c0_4 = arith.constant 0 : index
    %3 = vector.load %arg3[%c0_3, %c0_4] : memref<1x96xf32, #tpu.memory_space<vmem>>, vector<1x96xf32>
    %4 = vector.broadcast %3 : vector<1x96xf32> to vector<64x96xf32>
    %5 = arith.addf %2, %4 : vector<64x96xf32>
    %6 = vector.extract_strided_slice %5 {offsets = [0, 0], sizes = [64, 32], strides = [1, 1]} : vector<64x96xf32> to vector<64x32xf32>
    %c0_5 = arith.constant 0 : index
    %c0_6 = arith.constant 0 : index
    %7 = vector.load %arg11[%c0_5, %c0_6] : memref<64x32xf32, #tpu.memory_space<vmem>>, vector<64x32xf32>
    tpu.vector_store %arg11[%c0_5, %c0_6], %6 {strides = array<i32>} : memref<64x32xf32, #tpu.memory_space<vmem>>, vector<64x32xf32>,
    %8 = vector.extract_strided_slice %5 {offsets = [0, 32], sizes = [64, 32], strides = [1, 1]} : vector<64x96xf32> to vector<64x32xf32>
    %c0_7 = arith.constant 0 : index
    %c0_8 = arith.constant 0 : index
    %9 = vector.load %arg12[%c0_7, %c0_8] : memref<64x32xf32, #tpu.memory_space<vmem>>, vector<64x32xf32>
    tpu.vector_store %arg12[%c0_7, %c0_8], %8 {strides = array<i32>} : memref<64x32xf32, #tpu.memory_space<vmem>>, vector<64x32xf32>,
    %10 = vector.extract_strided_slice %5 {offsets = [0, 64], sizes = [64, 32], strides = [1, 1]} : vector<64x96xf32> to vector<64x32xf32>
    %c0_9 = arith.constant 0 : index
    %c0_10 = arith.constant 0 : index
    %11 = vector.load %arg13[%c0_9, %c0_10] : memref<64x32xf32, #tpu.memory_space<vmem>>, vector<64x32xf32>
    tpu.vector_store %arg13[%c0_9, %c0_10], %10 {strides = array<i32>} : memref<64x32xf32, #tpu.memory_space<vmem>>, vector<64x32xf32>,
    %c0_11 = arith.constant 0 : index
    %c0_12 = arith.constant 0 : index
    %12 = vector.load %arg4[%c0_11, %c0_12] : memref<32x32xf32, #tpu.memory_space<vmem>>, vector<32x32xf32>
    %c0_13 = arith.constant 0 : index
    %c0_14 = arith.constant 0 : index
    %13 = vector.load %arg5[%c0_13, %c0_14] : memref<32x32xf32, #tpu.memory_space<vmem>>, vector<32x32xf32>
    %c0_15 = arith.constant 0 : index
    %c0_16 = arith.constant 0 : index
    %14 = vector.load %arg6[%c0_15, %c0_16] : memref<32x32xf32, #tpu.memory_space<vmem>>, vector<32x32xf32>
    %c0_17 = arith.constant 0 : index
    %c0_18 = arith.constant 0 : index
    %15 = vector.load %arg7[%c0_17, %c0_18] : memref<1x32xf32, #tpu.memory_space<vmem>>, vector<1x32xf32>
    %16 = vector.shape_cast %15 : vector<1x32xf32> to vector<1x32xf32>
    %17 = vector.broadcast %16 : vector<1x32xf32> to vector<8x32xf32>
    %c0_19 = arith.constant 0 : index
    %c0_20 = arith.constant 0 : index
    %18 = vector.load %arg1[%c0_19, %c0_20] : memref<8x1xi32, #tpu.memory_space<vmem>>, vector<8x1xi32>
    %19 = vector.shape_cast %18 : vector<8x1xi32> to vector<8x1xi32>
    %20 = vector.broadcast %19 : vector<8x1xi32> to vector<8x32xi32>
    %cst_21 = arith.constant 0.000000e+00 : f32
    %21 = vector.broadcast %cst_21 : f32 to vector<8x32xf32>
    %c0_i32 = arith.constant 0 : i32
    %c8_i32 = arith.constant 8 : i32
    %22 = arith.muli %c0_i32, %c8_i32 : i32
    %23 = tpu.assume_multiple %22, 8 : i32
    %24 = arith.index_cast %23 : i32 to index
    %c0_22 = arith.constant 0 : index
    %25 = vector.load %arg11[%24, %c0_22] : memref<64x32xf32, #tpu.memory_space<vmem>>, vector<8x32xf32>
    %26 = arith.index_cast %23 : i32 to index
    %c0_23 = arith.constant 0 : index
    %27 = vector.load %arg12[%26, %c0_23] : memref<64x32xf32, #tpu.memory_space<vmem>>, vector<8x32xf32>
    %28 = arith.index_cast %23 : i32 to index
    %c0_24 = arith.constant 0 : index
    %29 = vector.load %arg13[%28, %c0_24] : memref<64x32xf32, #tpu.memory_space<vmem>>, vector<8x32xf32>
    %cst_25 = arith.constant dense<0.000000e+00> : vector<8x32xf32>
    %30 = tpu.matmul %21, %12, %cst_25 {dimension_numbers = #tpu.dot_dimension_numbers<[1], [0], [0], [1], [0, 0, 1, 1], [], []>} : vector<8x32xf32>, vector<32x32xf32>, vector<8x32xf32> -> vector<8x32xf32>
    %cst_26 = arith.constant dense<0.000000e+00> : vector<8x32xf32>
    %31 = tpu.matmul %21, %13, %cst_26 {dimension_numbers = #tpu.dot_dimension_numbers<[1], [0], [0], [1], [0, 0, 1, 1], [], []>} : vector<8x32xf32>, vector<32x32xf32>, vector<8x32xf32> -> vector<8x32xf32>
    %cst_27 = arith.constant dense<0.000000e+00> : vector<8x32xf32>
    %32 = tpu.matmul %21, %14, %cst_27 {dimension_numbers = #tpu.dot_dimension_numbers<[1], [0], [0], [1], [0, 0, 1, 1], [], []>} : vector<8x32xf32>, vector<32x32xf32>, vector<8x32xf32> -> vector<8x32xf32>
    %33 = arith.addf %25, %30 : vector<8x32xf32>
    %34 = arith.negf %33 : vector<8x32xf32>
    %35 = math.exp %34 : vector<8x32xf32>
    %cst_28 = arith.constant 1.000000e+00 : f32
    %36 = vector.broadcast %cst_28 : f32 to vector<8x32xf32>
    %37 = arith.addf %36, %35 : vector<8x32xf32>
    %38 = arith.divf %36, %37 : vector<8x32xf32>
    %39 = arith.addf %27, %31 : vector<8x32xf32>
    %40 = arith.negf %39 : vector<8x32xf32>
    %41 = math.exp %40 : vector<8x32xf32>
    %cst_29 = arith.constant 1.000000e+00 : f32
    %42 = vector.broadcast %cst_29 : f32 to vector<8x32xf32>
    %43 = arith.addf %42, %41 : vector<8x32xf32>
    %44 = arith.divf %42, %43 : vector<8x32xf32>
    %45 = arith.addf %32, %17 : vector<8x32xf32>
    %46 = arith.mulf %38, %45 : vector<8x32xf32>
    %47 = arith.addf %29, %46 : vector<8x32xf32>
    %48 = math.tanh %47 : vector<8x32xf32>
    %cst_30 = arith.constant 1.000000e+00 : f32
    %49 = vector.broadcast %cst_30 : f32 to vector<8x32xf32>
    %50 = arith.subf %49, %44 : vector<8x32xf32>
    %51 = arith.mulf %50, %48 : vector<8x32xf32>
    %52 = arith.mulf %44, %21 : vector<8x32xf32>
    %53 = arith.addf %51, %52 : vector<8x32xf32>
    %54 = vector.broadcast %c0_i32 : i32 to vector<8x32xi32>
    %55 = arith.cmpi slt, %54, %20 : vector<8x32xi32>
    %56 = arith.select %55, %53, %21 : vector<8x32xi1>, vector<8x32xf32>
    %c1_i32 = arith.constant 1 : i32
    %c8_i32_31 = arith.constant 8 : i32
    %57 = arith.muli %c1_i32, %c8_i32_31 : i32
    %58 = tpu.assume_multiple %57, 8 : i32
    %59 = arith.index_cast %58 : i32 to index
    %c0_32 = arith.constant 0 : index
    %60 = vector.load %arg11[%59, %c0_32] : memref<64x32xf32, #tpu.memory_space<vmem>>, vector<8x32xf32>
    %61 = arith.index_cast %58 : i32 to index
    %c0_33 = arith.constant 0 : index
    %62 = vector.load %arg12[%61, %c0_33] : memref<64x32xf32, #tpu.memory_space<vmem>>, vector<8x32xf32>
    %63 = arith.index_cast %58 : i32 to index
    %c0_34 = arith.constant 0 : index
    %64 = vector.load %arg13[%63, %c0_34] : memref<64x32xf32, #tpu.memory_space<vmem>>, vector<8x32xf32>
    %cst_35 = arith.constant dense<0.000000e+00> : vector<8x32xf32>
    %65 = tpu.matmul %56, %12, %cst_35 {dimension_numbers = #tpu.dot_dimension_numbers<[1], [0], [0], [1], [0, 0, 1, 1], [], []>} : vector<8x32xf32>, vector<32x32xf32>, vector<8x32xf32> -> vector<8x32xf32>
    %cst_36 = arith.constant dense<0.000000e+00> : vector<8x32xf32>
    %66 = tpu.matmul %56, %13, %cst_36 {dimension_numbers = #tpu.dot_dimension_numbers<[1], [0], [0], [1], [0, 0, 1, 1], [], []>} : vector<8x32xf32>, vector<32x32xf32>, vector<8x32xf32> -> vector<8x32xf32>
    %cst_37 = arith.constant dense<0.000000e+00> : vector<8x32xf32>
    %67 = tpu.matmul %56, %14, %cst_37 {dimension_numbers = #tpu.dot_dimension_numbers<[1], [0], [0], [1], [0, 0, 1, 1], [], []>} : vector<8x32xf32>, vector<32x32xf32>, vector<8x32xf32> -> vector<8x32xf32>
    %68 = arith.addf %60, %65 : vector<8x32xf32>
    %69 = arith.negf %68 : vector<8x32xf32>
    %70 = math.exp %69 : vector<8x32xf32>
    %cst_38 = arith.constant 1.000000e+00 : f32
    %71 = vector.broadcast %cst_38 : f32 to vector<8x32xf32>
    %72 = arith.addf %71, %70 : vector<8x32xf32>
    %73 = arith.divf %71, %72 : vector<8x32xf32>
    %74 = arith.addf %62, %66 : vector<8x32xf32>
    %75 = arith.negf %74 : vector<8x32xf32>
    %76 = math.exp %75 : vector<8x32xf32>
    %cst_39 = arith.constant 1.000000e+00 : f32
    %77 = vector.broadcast %cst_39 : f32 to vector<8x32xf32>
    %78 = arith.addf %77, %76 : vector<8x32xf32>
    %79 = arith.divf %77, %78 : vector<8x32xf32>
    %80 = arith.addf %67, %17 : vector<8x32xf32>
    %81 = arith.mulf %73, %80 : vector<8x32xf32>
    %82 = arith.addf %64, %81 : vector<8x32xf32>
    %83 = math.tanh %82 : vector<8x32xf32>
    %cst_40 = arith.constant 1.000000e+00 : f32
    %84 = vector.broadcast %cst_40 : f32 to vector<8x32xf32>
    %85 = arith.subf %84, %79 : vector<8x32xf32>
    %86 = arith.mulf %85, %83 : vector<8x32xf32>
    %87 = arith.mulf %79, %56 : vector<8x32xf32>
    %88 = arith.addf %86, %87 : vector<8x32xf32>
    %89 = vector.broadcast %c1_i32 : i32 to vector<8x32xi32>
    %90 = arith.cmpi slt, %89, %20 : vector<8x32xi32>
    %91 = arith.select %90, %88, %56 : vector<8x32xi1>, vector<8x32xf32>
    %c2_i32 = arith.constant 2 : i32
    %c8_i32_41 = arith.constant 8 : i32
    %92 = arith.muli %c2_i32, %c8_i32_41 : i32
    %93 = tpu.assume_multiple %92, 8 : i32
    %94 = arith.index_cast %93 : i32 to index
    %c0_42 = arith.constant 0 : index
    %95 = vector.load %arg11[%94, %c0_42] : memref<64x32xf32, #tpu.memory_space<vmem>>, vector<8x32xf32>
    %96 = arith.index_cast %93 : i32 to index
    %c0_43 = arith.constant 0 : index
    %97 = vector.load %arg12[%96, %c0_43] : memref<64x32xf32, #tpu.memory_space<vmem>>, vector<8x32xf32>
    %98 = arith.index_cast %93 : i32 to index
    %c0_44 = arith.constant 0 : index
    %99 = vector.load %arg13[%98, %c0_44] : memref<64x32xf32, #tpu.memory_space<vmem>>, vector<8x32xf32>
    %cst_45 = arith.constant dense<0.000000e+00> : vector<8x32xf32>
    %100 = tpu.matmul %91, %12, %cst_45 {dimension_numbers = #tpu.dot_dimension_numbers<[1], [0], [0], [1], [0, 0, 1, 1], [], []>} : vector<8x32xf32>, vector<32x32xf32>, vector<8x32xf32> -> vector<8x32xf32>
    %cst_46 = arith.constant dense<0.000000e+00> : vector<8x32xf32>
    %101 = tpu.matmul %91, %13, %cst_46 {dimension_numbers = #tpu.dot_dimension_numbers<[1], [0], [0], [1], [0, 0, 1, 1], [], []>} : vector<8x32xf32>, vector<32x32xf32>, vector<8x32xf32> -> vector<8x32xf32>
    %cst_47 = arith.constant dense<0.000000e+00> : vector<8x32xf32>
    %102 = tpu.matmul %91, %14, %cst_47 {dimension_numbers = #tpu.dot_dimension_numbers<[1], [0], [0], [1], [0, 0, 1, 1], [], []>} : vector<8x32xf32>, vector<32x32xf32>, vector<8x32xf32> -> vector<8x32xf32>
    %103 = arith.addf %95, %100 : vector<8x32xf32>
    %104 = arith.negf %103 : vector<8x32xf32>
    %105 = math.exp %104 : vector<8x32xf32>
    %cst_48 = arith.constant 1.000000e+00 : f32
    %106 = vector.broadcast %cst_48 : f32 to vector<8x32xf32>
    %107 = arith.addf %106, %105 : vector<8x32xf32>
    %108 = arith.divf %106, %107 : vector<8x32xf32>
    %109 = arith.addf %97, %101 : vector<8x32xf32>
    %110 = arith.negf %109 : vector<8x32xf32>
    %111 = math.exp %110 : vector<8x32xf32>
    %cst_49 = arith.constant 1.000000e+00 : f32
    %112 = vector.broadcast %cst_49 : f32 to vector<8x32xf32>
    %113 = arith.addf %112, %111 : vector<8x32xf32>
    %114 = arith.divf %112, %113 : vector<8x32xf32>
    %115 = arith.addf %102, %17 : vector<8x32xf32>
    %116 = arith.mulf %108, %115 : vector<8x32xf32>
    %117 = arith.addf %99, %116 : vector<8x32xf32>
    %118 = math.tanh %117 : vector<8x32xf32>
    %cst_50 = arith.constant 1.000000e+00 : f32
    %119 = vector.broadcast %cst_50 : f32 to vector<8x32xf32>
    %120 = arith.subf %119, %114 : vector<8x32xf32>
    %121 = arith.mulf %120, %118 : vector<8x32xf32>
    %122 = arith.mulf %114, %91 : vector<8x32xf32>
    %123 = arith.addf %121, %122 : vector<8x32xf32>
    %124 = vector.broadcast %c2_i32 : i32 to vector<8x32xi32>
    %125 = arith.cmpi slt, %124, %20 : vector<8x32xi32>
    %126 = arith.select %125, %123, %91 : vector<8x32xi1>, vector<8x32xf32>
    %c3_i32 = arith.constant 3 : i32
    %c8_i32_51 = arith.constant 8 : i32
    %127 = arith.muli %c3_i32, %c8_i32_51 : i32
    %128 = tpu.assume_multiple %127, 8 : i32
    %129 = arith.index_cast %128 : i32 to index
    %c0_52 = arith.constant 0 : index
    %130 = vector.load %arg11[%129, %c0_52] : memref<64x32xf32, #tpu.memory_space<vmem>>, vector<8x32xf32>
    %131 = arith.index_cast %128 : i32 to index
    %c0_53 = arith.constant 0 : index
    %132 = vector.load %arg12[%131, %c0_53] : memref<64x32xf32, #tpu.memory_space<vmem>>, vector<8x32xf32>
    %133 = arith.index_cast %128 : i32 to index
    %c0_54 = arith.constant 0 : index
    %134 = vector.load %arg13[%133, %c0_54] : memref<64x32xf32, #tpu.memory_space<vmem>>, vector<8x32xf32>
    %cst_55 = arith.constant dense<0.000000e+00> : vector<8x32xf32>
    %135 = tpu.matmul %126, %12, %cst_55 {dimension_numbers = #tpu.dot_dimension_numbers<[1], [0], [0], [1], [0, 0, 1, 1], [], []>} : vector<8x32xf32>, vector<32x32xf32>, vector<8x32xf32> -> vector<8x32xf32>
    %cst_56 = arith.constant dense<0.000000e+00> : vector<8x32xf32>
    %136 = tpu.matmul %126, %13, %cst_56 {dimension_numbers = #tpu.dot_dimension_numbers<[1], [0], [0], [1], [0, 0, 1, 1], [], []>} : vector<8x32xf32>, vector<32x32xf32>, vector<8x32xf32> -> vector<8x32xf32>
    %cst_57 = arith.constant dense<0.000000e+00> : vector<8x32xf32>
    %137 = tpu.matmul %126, %14, %cst_57 {dimension_numbers = #tpu.dot_dimension_numbers<[1], [0], [0], [1], [0, 0, 1, 1], [], []>} : vector<8x32xf32>, vector<32x32xf32>, vector<8x32xf32> -> vector<8x32xf32>
    %138 = arith.addf %130, %135 : vector<8x32xf32>
    %139 = arith.negf %138 : vector<8x32xf32>
    %140 = math.exp %139 : vector<8x32xf32>
    %cst_58 = arith.constant 1.000000e+00 : f32
    %141 = vector.broadcast %cst_58 : f32 to vector<8x32xf32>
    %142 = arith.addf %141, %140 : vector<8x32xf32>
    %143 = arith.divf %141, %142 : vector<8x32xf32>
    %144 = arith.addf %132, %136 : vector<8x32xf32>
    %145 = arith.negf %144 : vector<8x32xf32>
    %146 = math.exp %145 : vector<8x32xf32>
    %cst_59 = arith.constant 1.000000e+00 : f32
    %147 = vector.broadcast %cst_59 : f32 to vector<8x32xf32>
    %148 = arith.addf %147, %146 : vector<8x32xf32>
    %149 = arith.divf %147, %148 : vector<8x32xf32>
    %150 = arith.addf %137, %17 : vector<8x32xf32>
    %151 = arith.mulf %143, %150 : vector<8x32xf32>
    %152 = arith.addf %134, %151 : vector<8x32xf32>
    %153 = math.tanh %152 : vector<8x32xf32>
    %cst_60 = arith.constant 1.000000e+00 : f32
    %154 = vector.broadcast %cst_60 : f32 to vector<8x32xf32>
    %155 = arith.subf %154, %149 : vector<8x32xf32>
    %156 = arith.mulf %155, %153 : vector<8x32xf32>
    %157 = arith.mulf %149, %126 : vector<8x32xf32>
    %158 = arith.addf %156, %157 : vector<8x32xf32>
    %159 = vector.broadcast %c3_i32 : i32 to vector<8x32xi32>
    %160 = arith.cmpi slt, %159, %20 : vector<8x32xi32>
    %161 = arith.select %160, %158, %126 : vector<8x32xi1>, vector<8x32xf32>
    %c4_i32 = arith.constant 4 : i32
    %c8_i32_61 = arith.constant 8 : i32
    %162 = arith.muli %c4_i32, %c8_i32_61 : i32
    %163 = tpu.assume_multiple %162, 8 : i32
    %164 = arith.index_cast %163 : i32 to index
    %c0_62 = arith.constant 0 : index
    %165 = vector.load %arg11[%164, %c0_62] : memref<64x32xf32, #tpu.memory_space<vmem>>, vector<8x32xf32>
    %166 = arith.index_cast %163 : i32 to index
    %c0_63 = arith.constant 0 : index
    %167 = vector.load %arg12[%166, %c0_63] : memref<64x32xf32, #tpu.memory_space<vmem>>, vector<8x32xf32>
    %168 = arith.index_cast %163 : i32 to index
    %c0_64 = arith.constant 0 : index
    %169 = vector.load %arg13[%168, %c0_64] : memref<64x32xf32, #tpu.memory_space<vmem>>, vector<8x32xf32>
    %cst_65 = arith.constant dense<0.000000e+00> : vector<8x32xf32>
    %170 = tpu.matmul %161, %12, %cst_65 {dimension_numbers = #tpu.dot_dimension_numbers<[1], [0], [0], [1], [0, 0, 1, 1], [], []>} : vector<8x32xf32>, vector<32x32xf32>, vector<8x32xf32> -> vector<8x32xf32>
    %cst_66 = arith.constant dense<0.000000e+00> : vector<8x32xf32>
    %171 = tpu.matmul %161, %13, %cst_66 {dimension_numbers = #tpu.dot_dimension_numbers<[1], [0], [0], [1], [0, 0, 1, 1], [], []>} : vector<8x32xf32>, vector<32x32xf32>, vector<8x32xf32> -> vector<8x32xf32>
    %cst_67 = arith.constant dense<0.000000e+00> : vector<8x32xf32>
    %172 = tpu.matmul %161, %14, %cst_67 {dimension_numbers = #tpu.dot_dimension_numbers<[1], [0], [0], [1], [0, 0, 1, 1], [], []>} : vector<8x32xf32>, vector<32x32xf32>, vector<8x32xf32> -> vector<8x32xf32>
    %173 = arith.addf %165, %170 : vector<8x32xf32>
    %174 = arith.negf %173 : vector<8x32xf32>
    %175 = math.exp %174 : vector<8x32xf32>
    %cst_68 = arith.constant 1.000000e+00 : f32
    %176 = vector.broadcast %cst_68 : f32 to vector<8x32xf32>
    %177 = arith.addf %176, %175 : vector<8x32xf32>
    %178 = arith.divf %176, %177 : vector<8x32xf32>
    %179 = arith.addf %167, %171 : vector<8x32xf32>
    %180 = arith.negf %179 : vector<8x32xf32>
    %181 = math.exp %180 : vector<8x32xf32>
    %cst_69 = arith.constant 1.000000e+00 : f32
    %182 = vector.broadcast %cst_69 : f32 to vector<8x32xf32>
    %183 = arith.addf %182, %181 : vector<8x32xf32>
    %184 = arith.divf %182, %183 : vector<8x32xf32>
    %185 = arith.addf %172, %17 : vector<8x32xf32>
    %186 = arith.mulf %178, %185 : vector<8x32xf32>
    %187 = arith.addf %169, %186 : vector<8x32xf32>
    %188 = math.tanh %187 : vector<8x32xf32>
    %cst_70 = arith.constant 1.000000e+00 : f32
    %189 = vector.broadcast %cst_70 : f32 to vector<8x32xf32>
    %190 = arith.subf %189, %184 : vector<8x32xf32>
    %191 = arith.mulf %190, %188 : vector<8x32xf32>
    %192 = arith.mulf %184, %161 : vector<8x32xf32>
    %193 = arith.addf %191, %192 : vector<8x32xf32>
    %194 = vector.broadcast %c4_i32 : i32 to vector<8x32xi32>
    %195 = arith.cmpi slt, %194, %20 : vector<8x32xi32>
    %196 = arith.select %195, %193, %161 : vector<8x32xi1>, vector<8x32xf32>
    %c5_i32 = arith.constant 5 : i32
    %c8_i32_71 = arith.constant 8 : i32
    %197 = arith.muli %c5_i32, %c8_i32_71 : i32
    %198 = tpu.assume_multiple %197, 8 : i32
    %199 = arith.index_cast %198 : i32 to index
    %c0_72 = arith.constant 0 : index
    %200 = vector.load %arg11[%199, %c0_72] : memref<64x32xf32, #tpu.memory_space<vmem>>, vector<8x32xf32>
    %201 = arith.index_cast %198 : i32 to index
    %c0_73 = arith.constant 0 : index
    %202 = vector.load %arg12[%201, %c0_73] : memref<64x32xf32, #tpu.memory_space<vmem>>, vector<8x32xf32>
    %203 = arith.index_cast %198 : i32 to index
    %c0_74 = arith.constant 0 : index
    %204 = vector.load %arg13[%203, %c0_74] : memref<64x32xf32, #tpu.memory_space<vmem>>, vector<8x32xf32>
    %cst_75 = arith.constant dense<0.000000e+00> : vector<8x32xf32>
    %205 = tpu.matmul %196, %12, %cst_75 {dimension_numbers = #tpu.dot_dimension_numbers<[1], [0], [0], [1], [0, 0, 1, 1], [], []>} : vector<8x32xf32>, vector<32x32xf32>, vector<8x32xf32> -> vector<8x32xf32>
    %cst_76 = arith.constant dense<0.000000e+00> : vector<8x32xf32>
    %206 = tpu.matmul %196, %13, %cst_76 {dimension_numbers = #tpu.dot_dimension_numbers<[1], [0], [0], [1], [0, 0, 1, 1], [], []>} : vector<8x32xf32>, vector<32x32xf32>, vector<8x32xf32> -> vector<8x32xf32>
    %cst_77 = arith.constant dense<0.000000e+00> : vector<8x32xf32>
    %207 = tpu.matmul %196, %14, %cst_77 {dimension_numbers = #tpu.dot_dimension_numbers<[1], [0], [0], [1], [0, 0, 1, 1], [], []>} : vector<8x32xf32>, vector<32x32xf32>, vector<8x32xf32> -> vector<8x32xf32>
    %208 = arith.addf %200, %205 : vector<8x32xf32>
    %209 = arith.negf %208 : vector<8x32xf32>
    %210 = math.exp %209 : vector<8x32xf32>
    %cst_78 = arith.constant 1.000000e+00 : f32
    %211 = vector.broadcast %cst_78 : f32 to vector<8x32xf32>
    %212 = arith.addf %211, %210 : vector<8x32xf32>
    %213 = arith.divf %211, %212 : vector<8x32xf32>
    %214 = arith.addf %202, %206 : vector<8x32xf32>
    %215 = arith.negf %214 : vector<8x32xf32>
    %216 = math.exp %215 : vector<8x32xf32>
    %cst_79 = arith.constant 1.000000e+00 : f32
    %217 = vector.broadcast %cst_79 : f32 to vector<8x32xf32>
    %218 = arith.addf %217, %216 : vector<8x32xf32>
    %219 = arith.divf %217, %218 : vector<8x32xf32>
    %220 = arith.addf %207, %17 : vector<8x32xf32>
    %221 = arith.mulf %213, %220 : vector<8x32xf32>
    %222 = arith.addf %204, %221 : vector<8x32xf32>
    %223 = math.tanh %222 : vector<8x32xf32>
    %cst_80 = arith.constant 1.000000e+00 : f32
    %224 = vector.broadcast %cst_80 : f32 to vector<8x32xf32>
    %225 = arith.subf %224, %219 : vector<8x32xf32>
    %226 = arith.mulf %225, %223 : vector<8x32xf32>
    %227 = arith.mulf %219, %196 : vector<8x32xf32>
    %228 = arith.addf %226, %227 : vector<8x32xf32>
    %229 = vector.broadcast %c5_i32 : i32 to vector<8x32xi32>
    %230 = arith.cmpi slt, %229, %20 : vector<8x32xi32>
    %231 = arith.select %230, %228, %196 : vector<8x32xi1>, vector<8x32xf32>
    %c6_i32 = arith.constant 6 : i32
    %c8_i32_81 = arith.constant 8 : i32
    %232 = arith.muli %c6_i32, %c8_i32_81 : i32
    %233 = tpu.assume_multiple %232, 8 : i32
    %234 = arith.index_cast %233 : i32 to index
    %c0_82 = arith.constant 0 : index
    %235 = vector.load %arg11[%234, %c0_82] : memref<64x32xf32, #tpu.memory_space<vmem>>, vector<8x32xf32>
    %236 = arith.index_cast %233 : i32 to index
    %c0_83 = arith.constant 0 : index
    %237 = vector.load %arg12[%236, %c0_83] : memref<64x32xf32, #tpu.memory_space<vmem>>, vector<8x32xf32>
    %238 = arith.index_cast %233 : i32 to index
    %c0_84 = arith.constant 0 : index
    %239 = vector.load %arg13[%238, %c0_84] : memref<64x32xf32, #tpu.memory_space<vmem>>, vector<8x32xf32>
    %cst_85 = arith.constant dense<0.000000e+00> : vector<8x32xf32>
    %240 = tpu.matmul %231, %12, %cst_85 {dimension_numbers = #tpu.dot_dimension_numbers<[1], [0], [0], [1], [0, 0, 1, 1], [], []>} : vector<8x32xf32>, vector<32x32xf32>, vector<8x32xf32> -> vector<8x32xf32>
    %cst_86 = arith.constant dense<0.000000e+00> : vector<8x32xf32>
    %241 = tpu.matmul %231, %13, %cst_86 {dimension_numbers = #tpu.dot_dimension_numbers<[1], [0], [0], [1], [0, 0, 1, 1], [], []>} : vector<8x32xf32>, vector<32x32xf32>, vector<8x32xf32> -> vector<8x32xf32>
    %cst_87 = arith.constant dense<0.000000e+00> : vector<8x32xf32>
    %242 = tpu.matmul %231, %14, %cst_87 {dimension_numbers = #tpu.dot_dimension_numbers<[1], [0], [0], [1], [0, 0, 1, 1], [], []>} : vector<8x32xf32>, vector<32x32xf32>, vector<8x32xf32> -> vector<8x32xf32>
    %243 = arith.addf %235, %240 : vector<8x32xf32>
    %244 = arith.negf %243 : vector<8x32xf32>
    %245 = math.exp %244 : vector<8x32xf32>
    %cst_88 = arith.constant 1.000000e+00 : f32
    %246 = vector.broadcast %cst_88 : f32 to vector<8x32xf32>
    %247 = arith.addf %246, %245 : vector<8x32xf32>
    %248 = arith.divf %246, %247 : vector<8x32xf32>
    %249 = arith.addf %237, %241 : vector<8x32xf32>
    %250 = arith.negf %249 : vector<8x32xf32>
    %251 = math.exp %250 : vector<8x32xf32>
    %cst_89 = arith.constant 1.000000e+00 : f32
    %252 = vector.broadcast %cst_89 : f32 to vector<8x32xf32>
    %253 = arith.addf %252, %251 : vector<8x32xf32>
    %254 = arith.divf %252, %253 : vector<8x32xf32>
    %255 = arith.addf %242, %17 : vector<8x32xf32>
    %256 = arith.mulf %248, %255 : vector<8x32xf32>
    %257 = arith.addf %239, %256 : vector<8x32xf32>
    %258 = math.tanh %257 : vector<8x32xf32>
    %cst_90 = arith.constant 1.000000e+00 : f32
    %259 = vector.broadcast %cst_90 : f32 to vector<8x32xf32>
    %260 = arith.subf %259, %254 : vector<8x32xf32>
    %261 = arith.mulf %260, %258 : vector<8x32xf32>
    %262 = arith.mulf %254, %231 : vector<8x32xf32>
    %263 = arith.addf %261, %262 : vector<8x32xf32>
    %264 = vector.broadcast %c6_i32 : i32 to vector<8x32xi32>
    %265 = arith.cmpi slt, %264, %20 : vector<8x32xi32>
    %266 = arith.select %265, %263, %231 : vector<8x32xi1>, vector<8x32xf32>
    %c7_i32 = arith.constant 7 : i32
    %c8_i32_91 = arith.constant 8 : i32
    %267 = arith.muli %c7_i32, %c8_i32_91 : i32
    %268 = tpu.assume_multiple %267, 8 : i32
    %269 = arith.index_cast %268 : i32 to index
    %c0_92 = arith.constant 0 : index
    %270 = vector.load %arg11[%269, %c0_92] : memref<64x32xf32, #tpu.memory_space<vmem>>, vector<8x32xf32>
    %271 = arith.index_cast %268 : i32 to index
    %c0_93 = arith.constant 0 : index
    %272 = vector.load %arg12[%271, %c0_93] : memref<64x32xf32, #tpu.memory_space<vmem>>, vector<8x32xf32>
    %273 = arith.index_cast %268 : i32 to index
    %c0_94 = arith.constant 0 : index
    %274 = vector.load %arg13[%273, %c0_94] : memref<64x32xf32, #tpu.memory_space<vmem>>, vector<8x32xf32>
    %cst_95 = arith.constant dense<0.000000e+00> : vector<8x32xf32>
    %275 = tpu.matmul %266, %12, %cst_95 {dimension_numbers = #tpu.dot_dimension_numbers<[1], [0], [0], [1], [0, 0, 1, 1], [], []>} : vector<8x32xf32>, vector<32x32xf32>, vector<8x32xf32> -> vector<8x32xf32>
    %cst_96 = arith.constant dense<0.000000e+00> : vector<8x32xf32>
    %276 = tpu.matmul %266, %13, %cst_96 {dimension_numbers = #tpu.dot_dimension_numbers<[1], [0], [0], [1], [0, 0, 1, 1], [], []>} : vector<8x32xf32>, vector<32x32xf32>, vector<8x32xf32> -> vector<8x32xf32>
    %cst_97 = arith.constant dense<0.000000e+00> : vector<8x32xf32>
    %277 = tpu.matmul %266, %14, %cst_97 {dimension_numbers = #tpu.dot_dimension_numbers<[1], [0], [0], [1], [0, 0, 1, 1], [], []>} : vector<8x32xf32>, vector<32x32xf32>, vector<8x32xf32> -> vector<8x32xf32>
    %278 = arith.addf %270, %275 : vector<8x32xf32>
    %279 = arith.negf %278 : vector<8x32xf32>
    %280 = math.exp %279 : vector<8x32xf32>
    %cst_98 = arith.constant 1.000000e+00 : f32
    %281 = vector.broadcast %cst_98 : f32 to vector<8x32xf32>
    %282 = arith.addf %281, %280 : vector<8x32xf32>
    %283 = arith.divf %281, %282 : vector<8x32xf32>
    %284 = arith.addf %272, %276 : vector<8x32xf32>
    %285 = arith.negf %284 : vector<8x32xf32>
    %286 = math.exp %285 : vector<8x32xf32>
    %cst_99 = arith.constant 1.000000e+00 : f32
    %287 = vector.broadcast %cst_99 : f32 to vector<8x32xf32>
    %288 = arith.addf %287, %286 : vector<8x32xf32>
    %289 = arith.divf %287, %288 : vector<8x32xf32>
    %290 = arith.addf %277, %17 : vector<8x32xf32>
    %291 = arith.mulf %283, %290 : vector<8x32xf32>
    %292 = arith.addf %274, %291 : vector<8x32xf32>
    %293 = math.tanh %292 : vector<8x32xf32>
    %cst_100 = arith.constant 1.000000e+00 : f32
    %294 = vector.broadcast %cst_100 : f32 to vector<8x32xf32>
    %295 = arith.subf %294, %289 : vector<8x32xf32>
    %296 = arith.mulf %295, %293 : vector<8x32xf32>
    %297 = arith.mulf %289, %266 : vector<8x32xf32>
    %298 = arith.addf %296, %297 : vector<8x32xf32>
    %299 = vector.broadcast %c7_i32 : i32 to vector<8x32xi32>
    %300 = arith.cmpi slt, %299, %20 : vector<8x32xi32>
    %301 = arith.select %300, %298, %266 : vector<8x32xi1>, vector<8x32xf32>
    %c8_i32_101 = arith.constant 8 : i32
    %c0_102 = arith.constant 0 : index
    %c0_103 = arith.constant 0 : index
    %302 = vector.load %arg8[%c0_102, %c0_103] : memref<32x16xf32, #tpu.memory_space<vmem>>, vector<32x16xf32>
    %cst_104 = arith.constant dense<0.000000e+00> : vector<8x16xf32>
    %303 = tpu.matmul %301, %302, %cst_104 {dimension_numbers = #tpu.dot_dimension_numbers<[1], [0], [0], [1], [0, 0, 1, 1], [], []>} : vector<8x32xf32>, vector<32x16xf32>, vector<8x16xf32> -> vector<8x16xf32>
    %c0_105 = arith.constant 0 : index
    %c0_106 = arith.constant 0 : index
    %304 = vector.load %arg9[%c0_105, %c0_106] : memref<1x16xf32, #tpu.memory_space<vmem>>, vector<1x16xf32>
    %305 = vector.broadcast %304 : vector<1x16xf32> to vector<8x16xf32>
    %306 = arith.addf %303, %305 : vector<8x16xf32>
    %c0_107 = arith.constant 0 : index
    %c0_108 = arith.constant 0 : index
    %307 = vector.load %arg10[%c0_107, %c0_108] : memref<8x16xf32, #tpu.memory_space<vmem>>, vector<8x16xf32>
    tpu.vector_store %arg10[%c0_107, %c0_108], %306 {strides = array<i32>} : memref<8x16xf32, #tpu.memory_space<vmem>>, vector<8x16xf32>,
    return
  }
}

</mosaic_0001>

<llo_original>
// kernel: tpu_custom_call.1
$region0: #{tpu_custom_call.1}
  #allocation0 [shape = 'u32[]', space=smem, size = 0x4, offset = 0x4, fixed_abs, tag = 'smem constant byte address 0x4 - core index']
  #allocation1 [shape = 'u32[144,128]{1,0:T(1,128)}', space=vmem, size = 0x12000, scoped, tag = 'internal scratch']
  #allocation2 [shape = 'f32[64,32]{1,0:T(8,128)}', space=vmem, size = 0x8000, scoped, tag = 'scratch operand']
  #allocation3 [shape = 'f32[64,32]{1,0:T(8,128)}', space=vmem, size = 0x8000, scoped, tag = 'scratch operand']
  #allocation4 [shape = 'f32[64,32]{1,0:T(8,128)}', space=vmem, size = 0x8000, scoped, tag = 'scratch operand']
  %s0 = inlined_call_operand.vmem [shape: f32[64,768], index: 0, kind: input, shape index: {}]
  %s1 = inlined_call_operand.vmem [shape: s32[8,1], index: 1, kind: input, shape index: {}]
  %s2 = inlined_call_operand.vmem [shape: f32[768,96], index: 2, kind: input, shape index: {}]
  %s3 = inlined_call_operand.vmem [shape: f32[1,96], index: 3, kind: input, shape index: {}]
  %s4 = inlined_call_operand.vmem [shape: f32[32,32], index: 4, kind: input, shape index: {}]
  %s5 = inlined_call_operand.vmem [shape: f32[32,32], index: 5, kind: input, shape index: {}]
  %s6 = inlined_call_operand.vmem [shape: f32[32,32], index: 6, kind: input, shape index: {}]
  %s7 = inlined_call_operand.vmem [shape: f32[1,32], index: 7, kind: input, shape index: {}]
  %s8 = inlined_call_operand.vmem [shape: f32[32,16], index: 8, kind: input, shape index: {}]
  %s9 = inlined_call_operand.vmem [shape: f32[1,16], index: 9, kind: input, shape index: {}]
  %s10 = inlined_call_operand.hbm [shape: f32[8,16], index: 10, kind: output, shape index: {}]
  %s11 = sld [smem:[#allocation0]]
  $region50: #{tpu_custom_call.1} parent=0
    _
  %s13 = ssub.s32 1, %s11
  %s14 = scalar_select 0, %s13, %s11
  $region1: #{tpu_custom_call.1} parent=0
    #allocation5 [shape = 'u8[4096]{0}', space=vmem, size = 0x1000, scoped, tag = 'output window, operand 0, single buffered']
    #allocation6 [shape = 's32[1]{0}', space=sflag, size = 0x4, scoped, tag = 'scoped memory for tpu_custom_call.1']
    %15 = vsyncpa [#allocation6], 0
    // Predicated region
    $region2: #{tpu_custom_call.1} parent=1 // pred_check
      _
    $region3: #{tpu_custom_call.1} parent=1 // pred_check_branch
      %17 = sbr.rel (0) target = $region5
    $region4: #{tpu_custom_call.1} parent=1 // pred_region
      _
    $region5: #{tpu_custom_call.1} parent=1 // pred_fallthru
      _
    // Predicated region
    $region6: #{tpu_custom_call.1} parent=1 // pred_check
      _
    $region7: #{tpu_custom_call.1} parent=1 // pred_check_branch
      %19 = sbr.rel (0) target = $region9
    $region8: #{tpu_custom_call.1} parent=1 // pred_region
      _
    $region9: #{tpu_custom_call.1} parent=1 // pred_fallthru
      _
    // Predicated region
    $region10: #{tpu_custom_call.1} parent=1 // pred_check
      _
    $region11: #{tpu_custom_call.1} parent=1 // pred_check_branch
      %21 = sbr.rel (0) target = $region13
    $region12: #{tpu_custom_call.1} parent=1 // pred_region
      _
    $region13: #{tpu_custom_call.1} parent=1 // pred_fallthru
      _
    // Predicated region
    $region14: #{tpu_custom_call.1} parent=1 // pred_check
      _
    $region15: #{tpu_custom_call.1} parent=1 // pred_check_branch
      %23 = sbr.rel (0) target = $region17
    $region16: #{tpu_custom_call.1} parent=1 // pred_region
      _
    $region17: #{tpu_custom_call.1} parent=1 // pred_fallthru
      _
    // Predicated region
    $region18: #{tpu_custom_call.1} parent=1 // pred_check
      _
    $region19: #{tpu_custom_call.1} parent=1 // pred_check_branch
      %25 = sbr.rel (0) target = $region21
    $region20: #{tpu_custom_call.1} parent=1 // pred_region
      _
    $region21: #{tpu_custom_call.1} parent=1 // pred_fallthru
      _
    // Predicated region
    $region22: #{tpu_custom_call.1} parent=1 // pred_check
      _
    $region23: #{tpu_custom_call.1} parent=1 // pred_check_branch
      %27 = sbr.rel (0) target = $region25
    $region24: #{tpu_custom_call.1} parent=1 // pred_region
      _
    $region25: #{tpu_custom_call.1} parent=1 // pred_fallthru
      _
    // Predicated region
    $region26: #{tpu_custom_call.1} parent=1 // pred_check
      _
    $region27: #{tpu_custom_call.1} parent=1 // pred_check_branch
      %29 = sbr.rel (0) target = $region29
    $region28: #{tpu_custom_call.1} parent=1 // pred_region
      _
    $region29: #{tpu_custom_call.1} parent=1 // pred_fallthru
      _
    // Predicated region
    $region30: #{tpu_custom_call.1} parent=1 // pred_check
      _
    $region31: #{tpu_custom_call.1} parent=1 // pred_check_branch
      %31 = sbr.rel (0) target = $region33
    $region32: #{tpu_custom_call.1} parent=1 // pred_region
      _
    $region33: #{tpu_custom_call.1} parent=1 // pred_fallthru
      _
    // Predicated region
    $region34: #{tpu_custom_call.1} parent=1 // pred_check
      _
    $region35: #{tpu_custom_call.1} parent=1 // pred_check_branch
      %33 = sbr.rel (0) target = $region37
    $region36: #{tpu_custom_call.1} parent=1 // pred_region
      _
    $region37: #{tpu_custom_call.1} parent=1 // pred_fallthru
      _
    // Predicated region
    $region38: #{tpu_custom_call.1} parent=1 // pred_check
      _
    $region39: #{tpu_custom_call.1} parent=1 // pred_check_branch
      %35 = sbr.rel (0) target = $region41
    $region40: #{tpu_custom_call.1} parent=1 // pred_region
      _
    $region41: #{tpu_custom_call.1} parent=1 // pred_fallthru
      _
    %v36 = vld [vmem:[%s0] sm:$0xff]
    %v37 = vld [vmem:[%s0 + $0x8] sm:$0xff]
    %v38 = vld [vmem:[%s0 + $0x10] sm:$0xff]
    %v39 = vld [vmem:[%s0 + $0x18] sm:$0xff]
    %v40 = vld [vmem:[%s0 + $0x20] sm:$0xff]
    %v41 = vld [vmem:[%s0 + $0x28] sm:$0xff]
    %v42 = vld [vmem:[%s0 + $0x30] sm:$0xff]
    %v43 = vld [vmem:[%s0 + $0x38] sm:$0xff]
    %v44 = vld [vmem:[%s0 + $0x40] sm:$0xff]
    %v45 = vld [vmem:[%s0 + $0x48] sm:$0xff]
    %v46 = vld [vmem:[%s0 + $0x50] sm:$0xff]
    %v47 = vld [vmem:[%s0 + $0x58] sm:$0xff]
    %v48 = vld [vmem:[%s0 + $0x60] sm:$0xff]
    %v49 = vld [vmem:[%s0 + $0x68] sm:$0xff]
    %v50 = vld [vmem:[%s0 + $0x70] sm:$0xff]
    %v51 = vld [vmem:[%s0 + $0x78] sm:$0xff]
    %v52 = vld [vmem:[%s0 + $0x80] sm:$0xff]
    %v53 = vld [vmem:[%s0 + $0x88] sm:$0xff]
    %v54 = vld [vmem:[%s0 + $0x90] sm:$0xff]
    %v55 = vld [vmem:[%s0 + $0x98] sm:$0xff]
    %v56 = vld [vmem:[%s0 + $0xa0] sm:$0xff]
    %v57 = vld [vmem:[%s0 + $0xa8] sm:$0xff]
    %v58 = vld [vmem:[%s0 + $0xb0] sm:$0xff]
    %v59 = vld [vmem:[%s0 + $0xb8] sm:$0xff]
    %v60 = vld [vmem:[%s0 + $0xc0] sm:$0xff]
    %v61 = vld [vmem:[%s0 + $0xc8] sm:$0xff]
    %v62 = vld [vmem:[%s0 + $0xd0] sm:$0xff]
    %v63 = vld [vmem:[%s0 + $0xd8] sm:$0xff]
    %v64 = vld [vmem:[%s0 + $0xe0] sm:$0xff]
    %v65 = vld [vmem:[%s0 + $0xe8] sm:$0xff]
    %v66 = vld [vmem:[%s0 + $0xf0] sm:$0xff]
    %v67 = vld [vmem:[%s0 + $0xf8] sm:$0xff]
    %v68 = vld [vmem:[%s0 + $0x100] sm:$0xff]
    %v69 = vld [vmem:[%s0 + $0x108] sm:$0xff]
    %v70 = vld [vmem:[%s0 + $0x110] sm:$0xff]
    %v71 = vld [vmem:[%s0 + $0x118] sm:$0xff]
    %v72 = vld [vmem:[%s0 + $0x120] sm:$0xff]
    %v73 = vld [vmem:[%s0 + $0x128] sm:$0xff]
    %v74 = vld [vmem:[%s0 + $0x130] sm:$0xff]
    %v75 = vld [vmem:[%s0 + $0x138] sm:$0xff]
    %v76 = vld [vmem:[%s0 + $0x140] sm:$0xff]
    %v77 = vld [vmem:[%s0 + $0x148] sm:$0xff]
    %v78 = vld [vmem:[%s0 + $0x150] sm:$0xff]
    %v79 = vld [vmem:[%s0 + $0x158] sm:$0xff]
    %v80 = vld [vmem:[%s0 + $0x160] sm:$0xff]
    %v81 = vld [vmem:[%s0 + $0x168] sm:$0xff]
    %v82 = vld [vmem:[%s0 + $0x170] sm:$0xff]
    %v83 = vld [vmem:[%s0 + $0x178] sm:$0xff]
    %v84 = vld [vmem:[%s2] sm:$0xff]
    %v85 = vld [vmem:[%s2 + $0x8] sm:$0xff]
    %v86 = vld [vmem:[%s2 + $0x10] sm:$0xff]
    %v87 = vld [vmem:[%s2 + $0x18] sm:$0xff]
    %v88 = vld [vmem:[%s2 + $0x20] sm:$0xff]
    %v89 = vld [vmem:[%s2 + $0x28] sm:$0xff]
    %v90 = vld [vmem:[%s2 + $0x30] sm:$0xff]
    %v91 = vld [vmem:[%s2 + $0x38] sm:$0xff]
    %v92 = vld [vmem:[%s2 + $0x40] sm:$0xff]
    %v93 = vld [vmem:[%s2 + $0x48] sm:$0xff]
    %v94 = vld [vmem:[%s2 + $0x50] sm:$0xff]
    %v95 = vld [vmem:[%s2 + $0x58] sm:$0xff]
    %v96 = vld [vmem:[%s2 + $0x60] sm:$0xff]
    %v97 = vld [vmem:[%s2 + $0x68] sm:$0xff]
    %v98 = vld [vmem:[%s2 + $0x70] sm:$0xff]
    %v99 = vld [vmem:[%s2 + $0x78] sm:$0xff]
    %v100 = vld [vmem:[%s2 + $0x80] sm:$0xff]
    %v101 = vld [vmem:[%s2 + $0x88] sm:$0xff]
    %v102 = vld [vmem:[%s2 + $0x90] sm:$0xff]
    %v103 = vld [vmem:[%s2 + $0x98] sm:$0xff]
    %v104 = vld [vmem:[%s2 + $0xa0] sm:$0xff]
    %v105 = vld [vmem:[%s2 + $0xa8] sm:$0xff]
    %v106 = vld [vmem:[%s2 + $0xb0] sm:$0xff]
    %v107 = vld [vmem:[%s2 + $0xb8] sm:$0xff]
    %v108 = vld [vmem:[%s2 + $0xc0] sm:$0xff]
    %v109 = vld [vmem:[%s2 + $0xc8] sm:$0xff]
    %v110 = vld [vmem:[%s2 + $0xd0] sm:$0xff]
    %v111 = vld [vmem:[%s2 + $0xd8] sm:$0xff]
    %v112 = vld [vmem:[%s2 + $0xe0] sm:$0xff]
    %v113 = vld [vmem:[%s2 + $0xe8] sm:$0xff]
    %v114 = vld [vmem:[%s2 + $0xf0] sm:$0xff]
    %v115 = vld [vmem:[%s2 + $0xf8] sm:$0xff]
    %v116 = vld [vmem:[%s2 + $0x100] sm:$0xff]
    %v117 = vld [vmem:[%s2 + $0x108] sm:$0xff]
    %v118 = vld [vmem:[%s2 + $0x110] sm:$0xff]
    %v119 = vld [vmem:[%s2 + $0x118] sm:$0xff]
    %v120 = vld [vmem:[%s2 + $0x120] sm:$0xff]
    %v121 = vld [vmem:[%s2 + $0x128] sm:$0xff]
    %v122 = vld [vmem:[%s2 + $0x130] sm:$0xff]
    %v123 = vld [vmem:[%s2 + $0x138] sm:$0xff]
    %v124 = vld [vmem:[%s2 + $0x140] sm:$0xff]
    %v125 = vld [vmem:[%s2 + $0x148] sm:$0xff]
    %v126 = vld [vmem:[%s2 + $0x150] sm:$0xff]
    %v127 = vld [vmem:[%s2 + $0x158] sm:$0xff]
    %v128 = vld [vmem:[%s2 + $0x160] sm:$0xff]
    %v129 = vld [vmem:[%s2 + $0x168] sm:$0xff]
    %v130 = vld [vmem:[%s2 + $0x170] sm:$0xff]
    %v131 = vld [vmem:[%s2 + $0x178] sm:$0xff]
    %v132 = vld [vmem:[%s2 + $0x180] sm:$0xff]
    %v133 = vld [vmem:[%s2 + $0x188] sm:$0xff]
    %v134 = vld [vmem:[%s2 + $0x190] sm:$0xff]
    %v135 = vld [vmem:[%s2 + $0x198] sm:$0xff]
    %v136 = vld [vmem:[%s2 + $0x1a0] sm:$0xff]
    %v137 = vld [vmem:[%s2 + $0x1a8] sm:$0xff]
    %v138 = vld [vmem:[%s2 + $0x1b0] sm:$0xff]
    %v139 = vld [vmem:[%s2 + $0x1b8] sm:$0xff]
    %v140 = vld [vmem:[%s2 + $0x1c0] sm:$0xff]
    %v141 = vld [vmem:[%s2 + $0x1c8] sm:$0xff]
    %v142 = vld [vmem:[%s2 + $0x1d0] sm:$0xff]
    %v143 = vld [vmem:[%s2 + $0x1d8] sm:$0xff]
    %v144 = vld [vmem:[%s2 + $0x1e0] sm:$0xff]
    %v145 = vld [vmem:[%s2 + $0x1e8] sm:$0xff]
    %v146 = vld [vmem:[%s2 + $0x1f0] sm:$0xff]
    %v147 = vld [vmem:[%s2 + $0x1f8] sm:$0xff]
    %v148 = vld [vmem:[%s2 + $0x200] sm:$0xff]
    %v149 = vld [vmem:[%s2 + $0x208] sm:$0xff]
    %v150 = vld [vmem:[%s2 + $0x210] sm:$0xff]
    %v151 = vld [vmem:[%s2 + $0x218] sm:$0xff]
    %v152 = vld [vmem:[%s2 + $0x220] sm:$0xff]
    %v153 = vld [vmem:[%s2 + $0x228] sm:$0xff]
    %v154 = vld [vmem:[%s2 + $0x230] sm:$0xff]
    %v155 = vld [vmem:[%s2 + $0x238] sm:$0xff]
    %v156 = vld [vmem:[%s2 + $0x240] sm:$0xff]
    %v157 = vld [vmem:[%s2 + $0x248] sm:$0xff]
    %v158 = vld [vmem:[%s2 + $0x250] sm:$0xff]
    %v159 = vld [vmem:[%s2 + $0x258] sm:$0xff]
    %v160 = vld [vmem:[%s2 + $0x260] sm:$0xff]
    %v161 = vld [vmem:[%s2 + $0x268] sm:$0xff]
    %v162 = vld [vmem:[%s2 + $0x270] sm:$0xff]
    %v163 = vld [vmem:[%s2 + $0x278] sm:$0xff]
    %v164 = vld [vmem:[%s2 + $0x280] sm:$0xff]
    %v165 = vld [vmem:[%s2 + $0x288] sm:$0xff]
    %v166 = vld [vmem:[%s2 + $0x290] sm:$0xff]
    %v167 = vld [vmem:[%s2 + $0x298] sm:$0xff]
    %v168 = vld [vmem:[%s2 + $0x2a0] sm:$0xff]
    %v169 = vld [vmem:[%s2 + $0x2a8] sm:$0xff]
    %v170 = vld [vmem:[%s2 + $0x2b0] sm:$0xff]
    %v171 = vld [vmem:[%s2 + $0x2b8] sm:$0xff]
    %v172 = vld [vmem:[%s2 + $0x2c0] sm:$0xff]
    %v173 = vld [vmem:[%s2 + $0x2c8] sm:$0xff]
    %v174 = vld [vmem:[%s2 + $0x2d0] sm:$0xff]
    %v175 = vld [vmem:[%s2 + $0x2d8] sm:$0xff]
    %v176 = vld [vmem:[%s2 + $0x2e0] sm:$0xff]
    %v177 = vld [vmem:[%s2 + $0x2e8] sm:$0xff]
    %v178 = vld [vmem:[%s2 + $0x2f0] sm:$0xff]
    %v179 = vld [vmem:[%s2 + $0x2f8] sm:$0xff]
    %v180 = vld [vmem:[%s3] sm:$0x1]
    %v182 = vlaneseq
    %v183 = vshrl.u32 %v182, 7
    %v184 = vsub.s32 0, %v183
    %v185 = vrot.slane %v180, %v184
    %187 = vmatprep.subr.mxu0 0.0
    %188 = vmatpush1.msra.mxu0 %v99
    %189 = vmatprep.subr.mxu0 0.0
    %190 = vmatpush1.msra.mxu0 %v98
    %191 = vmatprep.subr.mxu0 0.0
    %192 = vmatpush1.msra.mxu0 %v97
    %193 = vmatprep.subr.mxu0 0.0
    %194 = vmatpush1.msra.mxu0 %v96
    %195 = vmatprep.subr.mxu0 0.0
    %196 = vmatpush1.msra.mxu0 %v95
    %197 = vmatprep.subr.mxu0 0.0
    %198 = vmatpush1.msra.mxu0 %v94
    %199 = vmatprep.subr.mxu0 0.0
    %200 = vmatpush1.msra.mxu0 %v93
    %201 = vmatprep.subr.mxu0 0.0
    %202 = vmatpush1.msra.mxu0 %v92
    %203 = vmatprep.subr.mxu0 0.0
    %204 = vmatpush1.msra.mxu0 %v91
    %205 = vmatprep.subr.mxu0 0.0
    %206 = vmatpush1.msra.mxu0 %v90
    %207 = vmatprep.subr.mxu0 0.0
    %208 = vmatpush1.msra.mxu0 %v89
    %209 = vmatprep.subr.mxu0 0.0
    %210 = vmatpush1.msra.mxu0 %v88
    %211 = vmatprep.subr.mxu0 0.0
    %212 = vmatpush1.msra.mxu0 %v87
    %213 = vmatprep.subr.mxu0 0.0
    %214 = vmatpush1.msra.mxu0 %v86
    %215 = vmatprep.subr.mxu0 0.0
    %216 = vmatpush1.msra.mxu0 %v85
    %217 = vmatprep.subr.mxu0 0.0
    %218 = vmatpush1.msra.mxu0 %v84
    %219 = vmatprep.subr.mxu0 0.0
    %220 = vmatpush2.msra.mxu0 %v115
    %221 = vmatprep.subr.mxu0 0.0
    %222 = vmatpush2.msra.mxu0 %v114
    %223 = vmatprep.subr.mxu0 0.0
    %224 = vmatpush2.msra.mxu0 %v113
    %225 = vmatprep.subr.mxu0 0.0
    %226 = vmatpush2.msra.mxu0 %v112
    %227 = vmatprep.subr.mxu0 0.0
    %228 = vmatpush2.msra.mxu0 %v111
    %229 = vmatprep.subr.mxu0 0.0
    %230 = vmatpush2.msra.mxu0 %v110
    %231 = vmatprep.subr.mxu0 0.0
    %232 = vmatpush2.msra.mxu0 %v109
    %233 = vmatprep.subr.mxu0 0.0
    %234 = vmatpush2.msra.mxu0 %v108
    %235 = vmatprep.subr.mxu0 0.0
    %236 = vmatpush2.msra.mxu0 %v107
    %237 = vmatprep.subr.mxu0 0.0
    %238 = vmatpush2.msra.mxu0 %v106
    %239 = vmatprep.subr.mxu0 0.0
    %240 = vmatpush2.msra.mxu0 %v105
    %241 = vmatprep.subr.mxu0 0.0
    %242 = vmatpush2.msra.mxu0 %v104
    %243 = vmatprep.subr.mxu0 0.0
    %244 = vmatpush2.msra.mxu0 %v103
    %245 = vmatprep.subr.mxu0 0.0
    %246 = vmatpush2.msra.mxu0 %v102
    %247 = vmatprep.subr.mxu0 0.0
    %248 = vmatpush2.msra.mxu0 %v101
    %249 = vmatprep.subr.mxu0 0.0
    %250 = vmatpush2.msra.mxu0 %v100
    %251 = vmatprep.mubr.f32.mxu0 %v37
    %252 = vmatmul.mubr.f32.gmra.mxu0 %v36
    %v253 = vpop.f32.mrf.mxu0
    %v254 = vadd.f32 %v185, %v253
    %v255 = vpop.f32.mrf.mxu0
    %256 = vmatprep.mubr.f32.mxu0 %v43
    %257 = vmatmul.mubr.f32.gmra.mxu0 %v42
    %v258 = vpop.f32.mrf.mxu0
    %v259 = vadd.f32 %v185, %v258
    %v260 = vpop.f32.mrf.mxu0
    %261 = vmatprep.mubr.f32.mxu0 %v49
    %262 = vmatmul.mubr.f32.gmra.mxu0 %v48
    %v263 = vpop.f32.mrf.mxu0
    %v264 = vadd.f32 %v185, %v263
    %v265 = vpop.f32.mrf.mxu0
    %266 = vmatprep.mubr.f32.mxu0 %v55
    %267 = vmatmul.mubr.f32.gmra.mxu0 %v54
    %v268 = vpop.f32.mrf.mxu0
    %v269 = vadd.f32 %v185, %v268
    %v270 = vpop.f32.mrf.mxu0
    %271 = vmatprep.mubr.f32.mxu0 %v61
    %272 = vmatmul.mubr.f32.gmra.mxu0 %v60
    %v273 = vpop.f32.mrf.mxu0
    %v274 = vadd.f32 %v185, %v273
    %v275 = vpop.f32.mrf.mxu0
    %276 = vmatprep.mubr.f32.mxu0 %v67
    %277 = vmatmul.mubr.f32.gmra.mxu0 %v66
    %v278 = vpop.f32.mrf.mxu0
    %v279 = vadd.f32 %v185, %v278
    %v280 = vpop.f32.mrf.mxu0
    %281 = vmatprep.mubr.f32.mxu0 %v73
    %282 = vmatmul.mubr.f32.gmra.mxu0 %v72
    %v283 = vpop.f32.mrf.mxu0
    %v284 = vadd.f32 %v185, %v283
    %v285 = vpop.f32.mrf.mxu0
    %286 = vmatprep.mubr.f32.mxu0 %v79
    %287 = vmatmul.mubr.f32.gmra.mxu0 %v78
    %v288 = vpop.f32.mrf.mxu0
    %v289 = vadd.f32 %v185, %v288
    %v290 = vpop.f32.mrf.mxu0
    %291 = vdwg.mxu0
    %292 = vmatprep.subr.mxu0 0.0
    %293 = vmatpush1.msra.mxu0 %v131
    %294 = vmatprep.subr.mxu0 0.0
    %295 = vmatpush1.msra.mxu0 %v130
    %296 = vmatprep.subr.mxu0 0.0
    %297 = vmatpush1.msra.mxu0 %v129
    %298 = vmatprep.subr.mxu0 0.0
    %299 = vmatpush1.msra.mxu0 %v128
    %300 = vmatprep.subr.mxu0 0.0
    %301 = vmatpush1.msra.mxu0 %v127
    %302 = vmatprep.subr.mxu0 0.0
    %303 = vmatpush1.msra.mxu0 %v126
    %304 = vmatprep.subr.mxu0 0.0
    %305 = vmatpush1.msra.mxu0 %v125
    %306 = vmatprep.subr.mxu0 0.0
    %307 = vmatpush1.msra.mxu0 %v124
    %308 = vmatprep.subr.mxu0 0.0
    %309 = vmatpush1.msra.mxu0 %v123
    %310 = vmatprep.subr.mxu0 0.0
    %311 = vmatpush1.msra.mxu0 %v122
    %312 = vmatprep.subr.mxu0 0.0
    %313 = vmatpush1.msra.mxu0 %v121
    %314 = vmatprep.subr.mxu0 0.0
    %315 = vmatpush1.msra.mxu0 %v120
    %316 = vmatprep.subr.mxu0 0.0
    %317 = vmatpush1.msra.mxu0 %v119
    %318 = vmatprep.subr.mxu0 0.0
    %319 = vmatpush1.msra.mxu0 %v118
    %320 = vmatprep.subr.mxu0 0.0
    %321 = vmatpush1.msra.mxu0 %v117
    %322 = vmatprep.subr.mxu0 0.0
    %323 = vmatpush1.msra.mxu0 %v116
    %324 = vmatprep.subr.mxu0 0.0
    %325 = vmatpush2.msra.mxu0 %v147
    %326 = vmatprep.subr.mxu0 0.0
    %327 = vmatpush2.msra.mxu0 %v146
    %328 = vmatprep.subr.mxu0 0.0
    %329 = vmatpush2.msra.mxu0 %v145
    %330 = vmatprep.subr.mxu0 0.0
    %331 = vmatpush2.msra.mxu0 %v144
    %332 = vmatprep.subr.mxu0 0.0
    %333 = vmatpush2.msra.mxu0 %v143
    %334 = vmatprep.subr.mxu0 0.0
    %335 = vmatpush2.msra.mxu0 %v142
    %336 = vmatprep.subr.mxu0 0.0
    %337 = vmatpush2.msra.mxu0 %v141
    %338 = vmatprep.subr.mxu0 0.0
    %339 = vmatpush2.msra.mxu0 %v140
    %340 = vmatprep.subr.mxu0 0.0
    %341 = vmatpush2.msra.mxu0 %v139
    %342 = vmatprep.subr.mxu0 0.0
    %343 = vmatpush2.msra.mxu0 %v138
    %344 = vmatprep.subr.mxu0 0.0
    %345 = vmatpush2.msra.mxu0 %v137
    %346 = vmatprep.subr.mxu0 0.0
    %347 = vmatpush2.msra.mxu0 %v136
    %348 = vmatprep.subr.mxu0 0.0
    %349 = vmatpush2.msra.mxu0 %v135
    %350 = vmatprep.subr.mxu0 0.0
    %351 = vmatpush2.msra.mxu0 %v134
    %352 = vmatprep.subr.mxu0 0.0
    %353 = vmatpush2.msra.mxu0 %v133
    %354 = vmatprep.subr.mxu0 0.0
    %355 = vmatpush2.msra.mxu0 %v132
    %356 = vmatprep.mubr.f32.mxu0 %v39
    %357 = vmatmul.mubr.f32.gmra.mxu0 %v38
    %v358 = vpop.f32.mrf.mxu0
    %v359 = vadd.f32 %v254, %v358
    %v360 = vpop.f32.mrf.mxu0
    %361 = vmatprep.mubr.f32.mxu0 %v45
    %362 = vmatmul.mubr.f32.gmra.mxu0 %v44
    %v363 = vpop.f32.mrf.mxu0
    %v364 = vadd.f32 %v259, %v363
    %v365 = vpop.f32.mrf.mxu0
    %366 = vmatprep.mubr.f32.mxu0 %v51
    %367 = vmatmul.mubr.f32.gmra.mxu0 %v50
    %v368 = vpop.f32.mrf.mxu0
    %v369 = vadd.f32 %v264, %v368
    %v370 = vpop.f32.mrf.mxu0
    %371 = vmatprep.mubr.f32.mxu0 %v57
    %372 = vmatmul.mubr.f32.gmra.mxu0 %v56
    %v373 = vpop.f32.mrf.mxu0
    %v374 = vadd.f32 %v269, %v373
    %v375 = vpop.f32.mrf.mxu0
    %376 = vmatprep.mubr.f32.mxu0 %v63
    %377 = vmatmul.mubr.f32.gmra.mxu0 %v62
    %v378 = vpop.f32.mrf.mxu0
    %v379 = vadd.f32 %v274, %v378
    %v380 = vpop.f32.mrf.mxu0
    %381 = vmatprep.mubr.f32.mxu0 %v69
    %382 = vmatmul.mubr.f32.gmra.mxu0 %v68
    %v383 = vpop.f32.mrf.mxu0
    %v384 = vadd.f32 %v279, %v383
    %v385 = vpop.f32.mrf.mxu0
    %386 = vmatprep.mubr.f32.mxu0 %v75
    %387 = vmatmul.mubr.f32.gmra.mxu0 %v74
    %v388 = vpop.f32.mrf.mxu0
    %v389 = vadd.f32 %v284, %v388
    %v390 = vpop.f32.mrf.mxu0
    %391 = vmatprep.mubr.f32.mxu0 %v81
    %392 = vmatmul.mubr.f32.gmra.mxu0 %v80
    %v393 = vpop.f32.mrf.mxu0
    %v394 = vadd.f32 %v289, %v393
    %v395 = vpop.f32.mrf.mxu0
    %396 = vdwg.mxu0
    %397 = vmatprep.subr.mxu0 0.0
    %398 = vmatpush1.msra.mxu0 %v163
    %399 = vmatprep.subr.mxu0 0.0
    %400 = vmatpush1.msra.mxu0 %v162
    %401 = vmatprep.subr.mxu0 0.0
    %402 = vmatpush1.msra.mxu0 %v161
    %403 = vmatprep.subr.mxu0 0.0
    %404 = vmatpush1.msra.mxu0 %v160
    %405 = vmatprep.subr.mxu0 0.0
    %406 = vmatpush1.msra.mxu0 %v159
    %407 = vmatprep.subr.mxu0 0.0
    %408 = vmatpush1.msra.mxu0 %v158
    %409 = vmatprep.subr.mxu0 0.0
    %410 = vmatpush1.msra.mxu0 %v157
    %411 = vmatprep.subr.mxu0 0.0
    %412 = vmatpush1.msra.mxu0 %v156
    %413 = vmatprep.subr.mxu0 0.0
    %414 = vmatpush1.msra.mxu0 %v155
    %415 = vmatprep.subr.mxu0 0.0
    %416 = vmatpush1.msra.mxu0 %v154
    %417 = vmatprep.subr.mxu0 0.0
    %418 = vmatpush1.msra.mxu0 %v153
    %419 = vmatprep.subr.mxu0 0.0
    %420 = vmatpush1.msra.mxu0 %v152
    %421 = vmatprep.subr.mxu0 0.0
    %422 = vmatpush1.msra.mxu0 %v151
    %423 = vmatprep.subr.mxu0 0.0
    %424 = vmatpush1.msra.mxu0 %v150
    %425 = vmatprep.subr.mxu0 0.0
    %426 = vmatpush1.msra.mxu0 %v149
    %427 = vmatprep.subr.mxu0 0.0
    %428 = vmatpush1.msra.mxu0 %v148
    %429 = vmatprep.subr.mxu0 0.0
    %430 = vmatpush2.msra.mxu0 %v179
    %431 = vmatprep.subr.mxu0 0.0
    %432 = vmatpush2.msra.mxu0 %v178
    %433 = vmatprep.subr.mxu0 0.0
    %434 = vmatpush2.msra.mxu0 %v177
    %435 = vmatprep.subr.mxu0 0.0
    %436 = vmatpush2.msra.mxu0 %v176
    %437 = vmatprep.subr.mxu0 0.0
    %438 = vmatpush2.msra.mxu0 %v175
    %439 = vmatprep.subr.mxu0 0.0
    %440 = vmatpush2.msra.mxu0 %v174
    %441 = vmatprep.subr.mxu0 0.0
    %442 = vmatpush2.msra.mxu0 %v173
    %443 = vmatprep.subr.mxu0 0.0
    %444 = vmatpush2.msra.mxu0 %v172
    %445 = vmatprep.subr.mxu0 0.0
    %446 = vmatpush2.msra.mxu0 %v171
    %447 = vmatprep.subr.mxu0 0.0
    %448 = vmatpush2.msra.mxu0 %v170
    %449 = vmatprep.subr.mxu0 0.0
    %450 = vmatpush2.msra.mxu0 %v169
    %451 = vmatprep.subr.mxu0 0.0
    %452 = vmatpush2.msra.mxu0 %v168
    %453 = vmatprep.subr.mxu0 0.0
    %454 = vmatpush2.msra.mxu0 %v167
    %455 = vmatprep.subr.mxu0 0.0
    %456 = vmatpush2.msra.mxu0 %v166
    %457 = vmatprep.subr.mxu0 0.0
    %458 = vmatpush2.msra.mxu0 %v165
    %459 = vmatprep.subr.mxu0 0.0
    %460 = vmatpush2.msra.mxu0 %v164
    %461 = vmatprep.mubr.f32.mxu0 %v41
    %462 = vmatmul.mubr.f32.gmra.mxu0 %v40
    %v463 = vpop.f32.mrf.mxu0
    %v464 = vadd.f32 %v359, %v463
    %v465 = vpop.f32.mrf.mxu0
    %466 = vmatprep.mubr.f32.mxu0 %v47
    %467 = vmatmul.mubr.f32.gmra.mxu0 %v46
    %v468 = vpop.f32.mrf.mxu0
    %v469 = vadd.f32 %v364, %v468
    %v470 = vpop.f32.mrf.mxu0
    %471 = vmatprep.mubr.f32.mxu0 %v53
    %472 = vmatmul.mubr.f32.gmra.mxu0 %v52
    %v473 = vpop.f32.mrf.mxu0
    %v474 = vadd.f32 %v369, %v473
    %v475 = vpop.f32.mrf.mxu0
    %476 = vmatprep.mubr.f32.mxu0 %v59
    %477 = vmatmul.mubr.f32.gmra.mxu0 %v58
    %v478 = vpop.f32.mrf.mxu0
    %v479 = vadd.f32 %v374, %v478
    %v480 = vpop.f32.mrf.mxu0
    %481 = vmatprep.mubr.f32.mxu0 %v65
    %482 = vmatmul.mubr.f32.gmra.mxu0 %v64
    %v483 = vpop.f32.mrf.mxu0
    %v484 = vadd.f32 %v379, %v483
    %v485 = vpop.f32.mrf.mxu0
    %486 = vmatprep.mubr.f32.mxu0 %v71
    %487 = vmatmul.mubr.f32.gmra.mxu0 %v70
    %v488 = vpop.f32.mrf.mxu0
    %v489 = vadd.f32 %v384, %v488
    %v490 = vpop.f32.mrf.mxu0
    %491 = vmatprep.mubr.f32.mxu0 %v77
    %492 = vmatmul.mubr.f32.gmra.mxu0 %v76
    %v493 = vpop.f32.mrf.mxu0
    %v494 = vadd.f32 %v389, %v493
    %v495 = vpop.f32.mrf.mxu0
    %496 = vmatprep.mubr.f32.mxu0 %v83
    %497 = vmatmul.mubr.f32.gmra.mxu0 %v82
    %v498 = vpop.f32.mrf.mxu0
    %v499 = vadd.f32 %v394, %v498
    %v500 = vpop.f32.mrf.mxu0
    %501 = vdwg.mxu0
    %vm502 = vcmask 261120
    %503 = vst.msk [vmem:[#allocation2] sm:$0xff] %vm502, %v464
    %504 = vst.msk [vmem:[#allocation2 + $0x8] sm:$0xff] %vm502, %v469
    %505 = vst.msk [vmem:[#allocation2 + $0x10] sm:$0xff] %vm502, %v474
    %506 = vst.msk [vmem:[#allocation2 + $0x18] sm:$0xff] %vm502, %v479
    %507 = vst.msk [vmem:[#allocation2 + $0x20] sm:$0xff] %vm502, %v484
    %508 = vst.msk [vmem:[#allocation2 + $0x28] sm:$0xff] %vm502, %v489
    %509 = vst.msk [vmem:[#allocation2 + $0x30] sm:$0xff] %vm502, %v494
    %510 = vst.msk [vmem:[#allocation2 + $0x38] sm:$0xff] %vm502, %v499
    %519 = vrot.lane.b32.xlu0 %v464, 96
    %v520 = vpop.permute.xlu0 %519
    %521 = vrot.lane.b32.xlu0 %v469, 96
    %v522 = vpop.permute.xlu0 %521
    %523 = vrot.lane.b32.xlu0 %v474, 96
    %v524 = vpop.permute.xlu0 %523
    %525 = vrot.lane.b32.xlu0 %v479, 96
    %v526 = vpop.permute.xlu0 %525
    %527 = vrot.lane.b32.xlu0 %v484, 96
    %v528 = vpop.permute.xlu0 %527
    %529 = vrot.lane.b32.xlu0 %v489, 96
    %v530 = vpop.permute.xlu0 %529
    %531 = vrot.lane.b32.xlu0 %v494, 96
    %v532 = vpop.permute.xlu0 %531
    %533 = vrot.lane.b32.xlu0 %v499, 96
    %v534 = vpop.permute.xlu0 %533
    %543 = vst.msk [vmem:[#allocation3] sm:$0xff] %vm502, %v520
    %544 = vst.msk [vmem:[#allocation3 + $0x8] sm:$0xff] %vm502, %v522
    %545 = vst.msk [vmem:[#allocation3 + $0x10] sm:$0xff] %vm502, %v524
    %546 = vst.msk [vmem:[#allocation3 + $0x18] sm:$0xff] %vm502, %v526
    %547 = vst.msk [vmem:[#allocation3 + $0x20] sm:$0xff] %vm502, %v528
    %548 = vst.msk [vmem:[#allocation3 + $0x28] sm:$0xff] %vm502, %v530
    %549 = vst.msk [vmem:[#allocation3 + $0x30] sm:$0xff] %vm502, %v532
    %550 = vst.msk [vmem:[#allocation3 + $0x38] sm:$0xff] %vm502, %v534
    %551 = vrot.lane.b32.xlu0 %v464, 64
    %v552 = vpop.permute.xlu0 %551
    %553 = vrot.lane.b32.xlu0 %v469, 64
    %v554 = vpop.permute.xlu0 %553
    %555 = vrot.lane.b32.xlu0 %v474, 64
    %v556 = vpop.permute.xlu0 %555
    %557 = vrot.lane.b32.xlu0 %v479, 64
    %v558 = vpop.permute.xlu0 %557
    %559 = vrot.lane.b32.xlu0 %v484, 64
    %v560 = vpop.permute.xlu0 %559
    %561 = vrot.lane.b32.xlu0 %v489, 64
    %v562 = vpop.permute.xlu0 %561
    %563 = vrot.lane.b32.xlu0 %v494, 64
    %v564 = vpop.permute.xlu0 %563
    %565 = vrot.lane.b32.xlu0 %v499, 64
    %v566 = vpop.permute.xlu0 %565
    %575 = vst.msk [vmem:[#allocation4] sm:$0xff] %vm502, %v552
    %576 = vst.msk [vmem:[#allocation4 + $0x8] sm:$0xff] %vm502, %v554
    %577 = vst.msk [vmem:[#allocation4 + $0x10] sm:$0xff] %vm502, %v556
    %578 = vst.msk [vmem:[#allocation4 + $0x18] sm:$0xff] %vm502, %v558
    %579 = vst.msk [vmem:[#allocation4 + $0x20] sm:$0xff] %vm502, %v560
    %580 = vst.msk [vmem:[#allocation4 + $0x28] sm:$0xff] %vm502, %v562
    %581 = vst.msk [vmem:[#allocation4 + $0x30] sm:$0xff] %vm502, %v564
    %582 = vst.msk [vmem:[#allocation4 + $0x38] sm:$0xff] %vm502, %v566
    %v583 = vld [vmem:[%s4] sm:$0xff]
    %v584 = vld [vmem:[%s4 + $0x8] sm:$0xff]
    %v585 = vld [vmem:[%s4 + $0x10] sm:$0xff]
    %v586 = vld [vmem:[%s4 + $0x18] sm:$0xff]
    %v587 = vld [vmem:[%s5] sm:$0xff]
    %v588 = vld [vmem:[%s5 + $0x8] sm:$0xff]
    %v589 = vld [vmem:[%s5 + $0x10] sm:$0xff]
    %v590 = vld [vmem:[%s5 + $0x18] sm:$0xff]
    %v591 = vld [vmem:[%s6] sm:$0xff]
    %v592 = vld [vmem:[%s6 + $0x8] sm:$0xff]
    %v593 = vld [vmem:[%s6 + $0x10] sm:$0xff]
    %v594 = vld [vmem:[%s6 + $0x18] sm:$0xff]
    %v595 = vld [vmem:[%s7] sm:$0x1]
    %v597 = vlaneseq
    %v598 = vshrl.u32 %v597, 7
    %v599 = vsub.s32 0, %v598
    %v600 = vrot.slane %v595, %v599
    %v602 = vld [vmem:[%s1] sm:$0xff]
    %603 = vset.pattern.permute.xlu0 0
    %604 = vperm.xlu0 %603, %v602
    %v605 = vpop.permute.xlu0 %604
    %v606 = vld [vmem:[#allocation2] sm:$0xff]
    %v607 = vld [vmem:[#allocation3] sm:$0xff]
    %v608 = vld [vmem:[#allocation4] sm:$0xff]
    %v610 = vsel %vm502, 0.0, 0
    %612 = vmatprep.subr.mxu0 0.0
    %613 = vmatpush1.msra.mxu0 0.0
    %614 = vmatprep.subr.mxu0 0.0
    %615 = vmatpush1.msra.mxu0 0.0
    %616 = vmatprep.subr.mxu0 0.0
    %617 = vmatpush1.msra.mxu0 0.0
    %618 = vmatprep.subr.mxu0 0.0
    %619 = vmatpush1.msra.mxu0 0.0
    %620 = vmatprep.subr.mxu0 0.0
    %621 = vmatpush1.msra.mxu0 0.0
    %622 = vmatprep.subr.mxu0 0.0
    %623 = vmatpush1.msra.mxu0 0.0
    %624 = vmatprep.subr.mxu0 0.0
    %625 = vmatpush1.msra.mxu0 0.0
    %626 = vmatprep.subr.mxu0 0.0
    %627 = vmatpush1.msra.mxu0 0.0
    %628 = vmatprep.subr.mxu0 0.0
    %629 = vmatpush1.msra.mxu0 0.0
    %630 = vmatprep.subr.mxu0 0.0
    %631 = vmatpush1.msra.mxu0 0.0
    %632 = vmatprep.subr.mxu0 0.0
    %633 = vmatpush1.msra.mxu0 0.0
    %634 = vmatprep.subr.mxu0 0.0
    %635 = vmatpush1.msra.mxu0 0.0
    %636 = vmatprep.subr.mxu0 0.0
    %637 = vmatpush1.msra.mxu0 %v586
    %638 = vmatprep.subr.mxu0 0.0
    %639 = vmatpush1.msra.mxu0 %v585
    %640 = vmatprep.subr.mxu0 0.0
    %641 = vmatpush1.msra.mxu0 %v584
    %642 = vmatprep.subr.mxu0 0.0
    %643 = vmatpush1.msra.mxu0 %v583
    %644 = vmatprep.subr.mxu0 0.0
    %645 = vmatpush2.msra.mxu0 0.0
    %646 = vmatprep.subr.mxu0 0.0
    %647 = vmatpush2.msra.mxu0 0.0
    %648 = vmatprep.subr.mxu0 0.0
    %649 = vmatpush2.msra.mxu0 0.0
    %650 = vmatprep.subr.mxu0 0.0
    %651 = vmatpush2.msra.mxu0 0.0
    %652 = vmatprep.subr.mxu0 0.0
    %653 = vmatpush2.msra.mxu0 0.0
    %654 = vmatprep.subr.mxu0 0.0
    %655 = vmatpush2.msra.mxu0 0.0
    %656 = vmatprep.subr.mxu0 0.0
    %657 = vmatpush2.msra.mxu0 0.0
    %658 = vmatprep.subr.mxu0 0.0
    %659 = vmatpush2.msra.mxu0 0.0
    %660 = vmatprep.subr.mxu0 0.0
    %661 = vmatpush2.msra.mxu0 0.0
    %662 = vmatprep.subr.mxu0 0.0
    %663 = vmatpush2.msra.mxu0 0.0
    %664 = vmatprep.subr.mxu0 0.0
    %665 = vmatpush2.msra.mxu0 0.0
    %666 = vmatprep.subr.mxu0 0.0
    %667 = vmatpush2.msra.mxu0 0.0
    %668 = vmatprep.subr.mxu0 0.0
    %669 = vmatpush2.msra.mxu0 0.0
    %670 = vmatprep.subr.mxu0 0.0
    %671 = vmatpush2.msra.mxu0 0.0
    %672 = vmatprep.subr.mxu0 0.0
    %673 = vmatpush2.msra.mxu0 0.0
    %674 = vmatprep.subr.mxu0 0.0
    %675 = vmatpush2.msra.mxu0 0.0
    %676 = vmatprep.mubr.f32.mxu0 0.0
    %677 = vmatmul.mubr.f32.gmra.mxu0 %v610
    %v678 = vpop.f32.mrf.mxu0
    %v679 = vadd.f32 0.0, %v678
    %v680 = vpop.f32.mrf.mxu0
    %681 = vdwg.mxu0
    %682 = vmatprep.subr.mxu0 0.0
    %683 = vmatpush1.msra.mxu0 0.0
    %684 = vmatprep.subr.mxu0 0.0
    %685 = vmatpush1.msra.mxu0 0.0
    %686 = vmatprep.subr.mxu0 0.0
    %687 = vmatpush1.msra.mxu0 0.0
    %688 = vmatprep.subr.mxu0 0.0
    %689 = vmatpush1.msra.mxu0 0.0
    %690 = vmatprep.subr.mxu0 0.0
    %691 = vmatpush1.msra.mxu0 0.0
    %692 = vmatprep.subr.mxu0 0.0
    %693 = vmatpush1.msra.mxu0 0.0
    %694 = vmatprep.subr.mxu0 0.0
    %695 = vmatpush1.msra.mxu0 0.0
    %696 = vmatprep.subr.mxu0 0.0
    %697 = vmatpush1.msra.mxu0 0.0
    %698 = vmatprep.subr.mxu0 0.0
    %699 = vmatpush1.msra.mxu0 0.0
    %700 = vmatprep.subr.mxu0 0.0
    %701 = vmatpush1.msra.mxu0 0.0
    %702 = vmatprep.subr.mxu0 0.0
    %703 = vmatpush1.msra.mxu0 0.0
    %704 = vmatprep.subr.mxu0 0.0
    %705 = vmatpush1.msra.mxu0 0.0
    %706 = vmatprep.subr.mxu0 0.0
    %707 = vmatpush1.msra.mxu0 %v590
    %708 = vmatprep.subr.mxu0 0.0
    %709 = vmatpush1.msra.mxu0 %v589
    %710 = vmatprep.subr.mxu0 0.0
    %711 = vmatpush1.msra.mxu0 %v588
    %712 = vmatprep.subr.mxu0 0.0
    %713 = vmatpush1.msra.mxu0 %v587
    %714 = vmatprep.subr.mxu0 0.0
    %715 = vmatpush2.msra.mxu0 0.0
    %716 = vmatprep.subr.mxu0 0.0
    %717 = vmatpush2.msra.mxu0 0.0
    %718 = vmatprep.subr.mxu0 0.0
    %719 = vmatpush2.msra.mxu0 0.0
    %720 = vmatprep.subr.mxu0 0.0
    %721 = vmatpush2.msra.mxu0 0.0
    %722 = vmatprep.subr.mxu0 0.0
    %723 = vmatpush2.msra.mxu0 0.0
    %724 = vmatprep.subr.mxu0 0.0
    %725 = vmatpush2.msra.mxu0 0.0
    %726 = vmatprep.subr.mxu0 0.0
    %727 = vmatpush2.msra.mxu0 0.0
    %728 = vmatprep.subr.mxu0 0.0
    %729 = vmatpush2.msra.mxu0 0.0
    %730 = vmatprep.subr.mxu0 0.0
    %731 = vmatpush2.msra.mxu0 0.0
    %732 = vmatprep.subr.mxu0 0.0
    %733 = vmatpush2.msra.mxu0 0.0
    %734 = vmatprep.subr.mxu0 0.0
    %735 = vmatpush2.msra.mxu0 0.0
    %736 = vmatprep.subr.mxu0 0.0
    %737 = vmatpush2.msra.mxu0 0.0
    %738 = vmatprep.subr.mxu0 0.0
    %739 = vmatpush2.msra.mxu0 0.0
    %740 = vmatprep.subr.mxu0 0.0
    %741 = vmatpush2.msra.mxu0 0.0
    %742 = vmatprep.subr.mxu0 0.0
    %743 = vmatpush2.msra.mxu0 0.0
    %744 = vmatprep.subr.mxu0 0.0
    %745 = vmatpush2.msra.mxu0 0.0
    %746 = vmatprep.mubr.f32.mxu0 0.0
    %747 = vmatmul.mubr.f32.gmra.mxu0 %v610
    %v748 = vpop.f32.mrf.mxu0
    %v749 = vadd.f32 0.0, %v748
    %v750 = vpop.f32.mrf.mxu0
    %751 = vdwg.mxu0
    %v752 = vadd.f32 %v606, %v679
    %v753 = vxor.u32 %v752, 2147483648
    %v754 = vmul.f32 %v753, 1.442695
    %v755 = vpow.pop %v754
    %v756 = vadd.f32 %v755, 1.0
    %v757 = vrcp.pop %v756
    %v758 = vmul.f32 1.0, %v757
    %v759 = vadd.f32 %v607, %v749
    %v760 = vxor.u32 %v759, 2147483648
    %v761 = vmul.f32 %v760, 1.442695
    %v762 = vpow.pop %v761
    %v763 = vadd.f32 %v762, 1.0
    %v764 = vrcp.pop %v763
    %v765 = vmul.f32 1.0, %v764
    %766 = vmatprep.subr.mxu0 0.0
    %767 = vmatpush1.msra.mxu0 0.0
    %768 = vmatprep.subr.mxu0 0.0
    %769 = vmatpush1.msra.mxu0 0.0
    %770 = vmatprep.subr.mxu0 0.0
    %771 = vmatpush1.msra.mxu0 0.0
    %772 = vmatprep.subr.mxu0 0.0
    %773 = vmatpush1.msra.mxu0 0.0
    %774 = vmatprep.subr.mxu0 0.0
    %775 = vmatpush1.msra.mxu0 0.0
    %776 = vmatprep.subr.mxu0 0.0
    %777 = vmatpush1.msra.mxu0 0.0
    %778 = vmatprep.subr.mxu0 0.0
    %779 = vmatpush1.msra.mxu0 0.0
    %780 = vmatprep.subr.mxu0 0.0
    %781 = vmatpush1.msra.mxu0 0.0
    %782 = vmatprep.subr.mxu0 0.0
    %783 = vmatpush1.msra.mxu0 0.0
    %784 = vmatprep.subr.mxu0 0.0
    %785 = vmatpush1.msra.mxu0 0.0
    %786 = vmatprep.subr.mxu0 0.0
    %787 = vmatpush1.msra.mxu0 0.0
    %788 = vmatprep.subr.mxu0 0.0
    %789 = vmatpush1.msra.mxu0 0.0
    %790 = vmatprep.subr.mxu0 0.0
    %791 = vmatpush1.msra.mxu0 %v594
    %792 = vmatprep.subr.mxu0 0.0
    %793 = vmatpush1.msra.mxu0 %v593
    %794 = vmatprep.subr.mxu0 0.0
    %795 = vmatpush1.msra.mxu0 %v592
    %796 = vmatprep.subr.mxu0 0.0
    %797 = vmatpush1.msra.mxu0 %v591
    %798 = vmatprep.subr.mxu0 0.0
    %799 = vmatpush2.msra.mxu0 0.0
    %800 = vmatprep.subr.mxu0 0.0
    %801 = vmatpush2.msra.mxu0 0.0
    %802 = vmatprep.subr.mxu0 0.0
    %803 = vmatpush2.msra.mxu0 0.0
    %804 = vmatprep.subr.mxu0 0.0
    %805 = vmatpush2.msra.mxu0 0.0
    %806 = vmatprep.subr.mxu0 0.0
    %807 = vmatpush2.msra.mxu0 0.0
    %808 = vmatprep.subr.mxu0 0.0
    %809 = vmatpush2.msra.mxu0 0.0
    %810 = vmatprep.subr.mxu0 0.0
    %811 = vmatpush2.msra.mxu0 0.0
    %812 = vmatprep.subr.mxu0 0.0
    %813 = vmatpush2.msra.mxu0 0.0
    %814 = vmatprep.subr.mxu0 0.0
    %815 = vmatpush2.msra.mxu0 0.0
    %816 = vmatprep.subr.mxu0 0.0
    %817 = vmatpush2.msra.mxu0 0.0
    %818 = vmatprep.subr.mxu0 0.0
    %819 = vmatpush2.msra.mxu0 0.0
    %820 = vmatprep.subr.mxu0 0.0
    %821 = vmatpush2.msra.mxu0 0.0
    %822 = vmatprep.subr.mxu0 0.0
    %823 = vmatpush2.msra.mxu0 0.0
    %824 = vmatprep.subr.mxu0 0.0
    %825 = vmatpush2.msra.mxu0 0.0
    %826 = vmatprep.subr.mxu0 0.0
    %827 = vmatpush2.msra.mxu0 0.0
    %828 = vmatprep.subr.mxu0 0.0
    %829 = vmatpush2.msra.mxu0 0.0
    %830 = vmatprep.mubr.f32.mxu0 0.0
    %831 = vmatmul.mubr.f32.gmra.mxu0 %v610
    %v832 = vpop.f32.mrf.mxu0
    %v833 = vadd.f32 %v600, %v832
    %v834 = vpop.f32.mrf.mxu0
    %835 = vdwg.mxu0
    %v836 = vmul.f32 %v758, %v833
    %v837 = vadd.f32 %v608, %v836
    %v838 = vtanh.pop %v837
    %v839 = vsub.f32 1.0, %v765
    %v840 = vmul.f32 %v839, %v838
    %v841 = vmul.f32 %v765, 0.0
    %v842 = vadd.f32 %v840, %v841
    %vm843 = vcmp.gt.s32.totalorder %v605, 0
    %v844 = vsel %vm843, %v842, 0.0
    %s845 = scalar_lea.vmem [#allocation2], 8
    %v846 = vld [vmem:[%s845] sm:$0xff]
    %s847 = scalar_lea.vmem [#allocation3], 8
    %v848 = vld [vmem:[%s847] sm:$0xff]
    %s849 = scalar_lea.vmem [#allocation4], 8
    %v850 = vld [vmem:[%s849] sm:$0xff]
    %v852 = vsel %vm502, %v844, 0
    %854 = vmatprep.subr.mxu0 0.0
    %855 = vmatpush1.msra.mxu0 0.0
    %856 = vmatprep.subr.mxu0 0.0
    %857 = vmatpush1.msra.mxu0 0.0
    %858 = vmatprep.subr.mxu0 0.0
    %859 = vmatpush1.msra.mxu0 0.0
    %860 = vmatprep.subr.mxu0 0.0
    %861 = vmatpush1.msra.mxu0 0.0
    %862 = vmatprep.subr.mxu0 0.0
    %863 = vmatpush1.msra.mxu0 0.0
    %864 = vmatprep.subr.mxu0 0.0
    %865 = vmatpush1.msra.mxu0 0.0
    %866 = vmatprep.subr.mxu0 0.0
    %867 = vmatpush1.msra.mxu0 0.0
    %868 = vmatprep.subr.mxu0 0.0
    %869 = vmatpush1.msra.mxu0 0.0
    %870 = vmatprep.subr.mxu0 0.0
    %871 = vmatpush1.msra.mxu0 0.0
    %872 = vmatprep.subr.mxu0 0.0
    %873 = vmatpush1.msra.mxu0 0.0
    %874 = vmatprep.subr.mxu0 0.0
    %875 = vmatpush1.msra.mxu0 0.0
    %876 = vmatprep.subr.mxu0 0.0
    %877 = vmatpush1.msra.mxu0 0.0
    %878 = vmatprep.subr.mxu0 0.0
    %879 = vmatpush1.msra.mxu0 %v586
    %880 = vmatprep.subr.mxu0 0.0
    %881 = vmatpush1.msra.mxu0 %v585
    %882 = vmatprep.subr.mxu0 0.0
    %883 = vmatpush1.msra.mxu0 %v584
    %884 = vmatprep.subr.mxu0 0.0
    %885 = vmatpush1.msra.mxu0 %v583
    %886 = vmatprep.subr.mxu0 0.0
    %887 = vmatpush2.msra.mxu0 0.0
    %888 = vmatprep.subr.mxu0 0.0
    %889 = vmatpush2.msra.mxu0 0.0
    %890 = vmatprep.subr.mxu0 0.0
    %891 = vmatpush2.msra.mxu0 0.0
    %892 = vmatprep.subr.mxu0 0.0
    %893 = vmatpush2.msra.mxu0 0.0
    %894 = vmatprep.subr.mxu0 0.0
    %895 = vmatpush2.msra.mxu0 0.0
    %896 = vmatprep.subr.mxu0 0.0
    %897 = vmatpush2.msra.mxu0 0.0
    %898 = vmatprep.subr.mxu0 0.0
    %899 = vmatpush2.msra.mxu0 0.0
    %900 = vmatprep.subr.mxu0 0.0
    %901 = vmatpush2.msra.mxu0 0.0
    %902 = vmatprep.subr.mxu0 0.0
    %903 = vmatpush2.msra.mxu0 0.0
    %904 = vmatprep.subr.mxu0 0.0
    %905 = vmatpush2.msra.mxu0 0.0
    %906 = vmatprep.subr.mxu0 0.0
    %907 = vmatpush2.msra.mxu0 0.0
    %908 = vmatprep.subr.mxu0 0.0
    %909 = vmatpush2.msra.mxu0 0.0
    %910 = vmatprep.subr.mxu0 0.0
    %911 = vmatpush2.msra.mxu0 0.0
    %912 = vmatprep.subr.mxu0 0.0
    %913 = vmatpush2.msra.mxu0 0.0
    %914 = vmatprep.subr.mxu0 0.0
    %915 = vmatpush2.msra.mxu0 0.0
    %916 = vmatprep.subr.mxu0 0.0
    %917 = vmatpush2.msra.mxu0 0.0
    %918 = vmatprep.mubr.f32.mxu0 0.0
    %919 = vmatmul.mubr.f32.gmra.mxu0 %v852
    %v920 = vpop.f32.mrf.mxu0
    %v921 = vadd.f32 0.0, %v920
    %v922 = vpop.f32.mrf.mxu0
    %923 = vdwg.mxu0
    %924 = vmatprep.subr.mxu0 0.0
    %925 = vmatpush1.msra.mxu0 0.0
    %926 = vmatprep.subr.mxu0 0.0
    %927 = vmatpush1.msra.mxu0 0.0
    %928 = vmatprep.subr.mxu0 0.0
    %929 = vmatpush1.msra.mxu0 0.0
    %930 = vmatprep.subr.mxu0 0.0
    %931 = vmatpush1.msra.mxu0 0.0
    %932 = vmatprep.subr.mxu0 0.0
    %933 = vmatpush1.msra.mxu0 0.0
    %934 = vmatprep.subr.mxu0 0.0
    %935 = vmatpush1.msra.mxu0 0.0
    %936 = vmatprep.subr.mxu0 0.0
    %937 = vmatpush1.msra.mxu0 0.0
    %938 = vmatprep.subr.mxu0 0.0
    %939 = vmatpush1.msra.mxu0 0.0
    %940 = vmatprep.subr.mxu0 0.0
    %941 = vmatpush1.msra.mxu0 0.0
    %942 = vmatprep.subr.mxu0 0.0
    %943 = vmatpush1.msra.mxu0 0.0
    %944 = vmatprep.subr.mxu0 0.0
    %945 = vmatpush1.msra.mxu0 0.0
    %946 = vmatprep.subr.mxu0 0.0
    %947 = vmatpush1.msra.mxu0 0.0
    %948 = vmatprep.subr.mxu0 0.0
    %949 = vmatpush1.msra.mxu0 %v590
    %950 = vmatprep.subr.mxu0 0.0
    %951 = vmatpush1.msra.mxu0 %v589
    %952 = vmatprep.subr.mxu0 0.0
    %953 = vmatpush1.msra.mxu0 %v588
    %954 = vmatprep.subr.mxu0 0.0
    %955 = vmatpush1.msra.mxu0 %v587
    %956 = vmatprep.subr.mxu0 0.0
    %957 = vmatpush2.msra.mxu0 0.0
    %958 = vmatprep.subr.mxu0 0.0
    %959 = vmatpush2.msra.mxu0 0.0
    %960 = vmatprep.subr.mxu0 0.0
    %961 = vmatpush2.msra.mxu0 0.0
    %962 = vmatprep.subr.mxu0 0.0
    %963 = vmatpush2.msra.mxu0 0.0
    %964 = vmatprep.subr.mxu0 0.0
    %965 = vmatpush2.msra.mxu0 0.0
    %966 = vmatprep.subr.mxu0 0.0
    %967 = vmatpush2.msra.mxu0 0.0
    %968 = vmatprep.subr.mxu0 0.0
    %969 = vmatpush2.msra.mxu0 0.0
    %970 = vmatprep.subr.mxu0 0.0
    %971 = vmatpush2.msra.mxu0 0.0
    %972 = vmatprep.subr.mxu0 0.0
    %973 = vmatpush2.msra.mxu0 0.0
    %974 = vmatprep.subr.mxu0 0.0
    %975 = vmatpush2.msra.mxu0 0.0
    %976 = vmatprep.subr.mxu0 0.0
    %977 = vmatpush2.msra.mxu0 0.0
    %978 = vmatprep.subr.mxu0 0.0
    %979 = vmatpush2.msra.mxu0 0.0
    %980 = vmatprep.subr.mxu0 0.0
    %981 = vmatpush2.msra.mxu0 0.0
    %982 = vmatprep.subr.mxu0 0.0
    %983 = vmatpush2.msra.mxu0 0.0
    %984 = vmatprep.subr.mxu0 0.0
    %985 = vmatpush2.msra.mxu0 0.0
    %986 = vmatprep.subr.mxu0 0.0
    %987 = vmatpush2.msra.mxu0 0.0
    %988 = vmatprep.mubr.f32.mxu0 0.0
    %989 = vmatmul.mubr.f32.gmra.mxu0 %v852
    %v990 = vpop.f32.mrf.mxu0
    %v991 = vadd.f32 0.0, %v990
    %v992 = vpop.f32.mrf.mxu0
    %993 = vdwg.mxu0
    %v994 = vadd.f32 %v846, %v921
    %v995 = vxor.u32 %v994, 2147483648
    %v996 = vmul.f32 %v995, 1.442695
    %v997 = vpow.pop %v996
    %v998 = vadd.f32 %v997, 1.0
    %v999 = vrcp.pop %v998
    %v1000 = vmul.f32 1.0, %v999
    %v1001 = vadd.f32 %v848, %v991
    %v1002 = vxor.u32 %v1001, 2147483648
    %v1003 = vmul.f32 %v1002, 1.442695
    %v1004 = vpow.pop %v1003
    %v1005 = vadd.f32 %v1004, 1.0
    %v1006 = vrcp.pop %v1005
    %v1007 = vmul.f32 1.0, %v1006
    %1008 = vmatprep.subr.mxu0 0.0
    %1009 = vmatpush1.msra.mxu0 0.0
    %1010 = vmatprep.subr.mxu0 0.0
    %1011 = vmatpush1.msra.mxu0 0.0
    %1012 = vmatprep.subr.mxu0 0.0
    %1013 = vmatpush1.msra.mxu0 0.0
    %1014 = vmatprep.subr.mxu0 0.0
    %1015 = vmatpush1.msra.mxu0 0.0
    %1016 = vmatprep.subr.mxu0 0.0
    %1017 = vmatpush1.msra.mxu0 0.0
    %1018 = vmatprep.subr.mxu0 0.0
    %1019 = vmatpush1.msra.mxu0 0.0
    %1020 = vmatprep.subr.mxu0 0.0
    %1021 = vmatpush1.msra.mxu0 0.0
    %1022 = vmatprep.subr.mxu0 0.0
    %1023 = vmatpush1.msra.mxu0 0.0
    %1024 = vmatprep.subr.mxu0 0.0
    %1025 = vmatpush1.msra.mxu0 0.0
    %1026 = vmatprep.subr.mxu0 0.0
    %1027 = vmatpush1.msra.mxu0 0.0
    %1028 = vmatprep.subr.mxu0 0.0
    %1029 = vmatpush1.msra.mxu0 0.0
    %1030 = vmatprep.subr.mxu0 0.0
    %1031 = vmatpush1.msra.mxu0 0.0
    %1032 = vmatprep.subr.mxu0 0.0
    %1033 = vmatpush1.msra.mxu0 %v594
    %1034 = vmatprep.subr.mxu0 0.0
    %1035 = vmatpush1.msra.mxu0 %v593
    %1036 = vmatprep.subr.mxu0 0.0
    %1037 = vmatpush1.msra.mxu0 %v592
    %1038 = vmatprep.subr.mxu0 0.0
    %1039 = vmatpush1.msra.mxu0 %v591
    %1040 = vmatprep.subr.mxu0 0.0
    %1041 = vmatpush2.msra.mxu0 0.0
    %1042 = vmatprep.subr.mxu0 0.0
    %1043 = vmatpush2.msra.mxu0 0.0
    %1044 = vmatprep.subr.mxu0 0.0
    %1045 = vmatpush2.msra.mxu0 0.0
    %1046 = vmatprep.subr.mxu0 0.0
    %1047 = vmatpush2.msra.mxu0 0.0
    %1048 = vmatprep.subr.mxu0 0.0
    %1049 = vmatpush2.msra.mxu0 0.0
    %1050 = vmatprep.subr.mxu0 0.0
    %1051 = vmatpush2.msra.mxu0 0.0
    %1052 = vmatprep.subr.mxu0 0.0
    %1053 = vmatpush2.msra.mxu0 0.0
    %1054 = vmatprep.subr.mxu0 0.0
    %1055 = vmatpush2.msra.mxu0 0.0
    %1056 = vmatprep.subr.mxu0 0.0
    %1057 = vmatpush2.msra.mxu0 0.0
    %1058 = vmatprep.subr.mxu0 0.0
    %1059 = vmatpush2.msra.mxu0 0.0
    %1060 = vmatprep.subr.mxu0 0.0
    %1061 = vmatpush2.msra.mxu0 0.0
    %1062 = vmatprep.subr.mxu0 0.0
    %1063 = vmatpush2.msra.mxu0 0.0
    %1064 = vmatprep.subr.mxu0 0.0
    %1065 = vmatpush2.msra.mxu0 0.0
    %1066 = vmatprep.subr.mxu0 0.0
    %1067 = vmatpush2.msra.mxu0 0.0
    %1068 = vmatprep.subr.mxu0 0.0
    %1069 = vmatpush2.msra.mxu0 0.0
    %1070 = vmatprep.subr.mxu0 0.0
    %1071 = vmatpush2.msra.mxu0 0.0
    %1072 = vmatprep.mubr.f32.mxu0 0.0
    %1073 = vmatmul.mubr.f32.gmra.mxu0 %v852
    %v1074 = vpop.f32.mrf.mxu0
    %v1075 = vadd.f32 %v600, %v1074
    %v1076 = vpop.f32.mrf.mxu0
    %1077 = vdwg.mxu0
    %v1078 = vmul.f32 %v1000, %v1075
    %v1079 = vadd.f32 %v850, %v1078
    %v1080 = vtanh.pop %v1079
    %v1081 = vsub.f32 1.0, %v1007
    %v1082 = vmul.f32 %v1081, %v1080
    %v1083 = vmul.f32 %v1007, %v844
    %v1084 = vadd.f32 %v1082, %v1083
    %vm1085 = vcmp.gt.s32.totalorder %v605, 1
    %v1086 = vsel %vm1085, %v1084, %v844
    %s1087 = scalar_lea.vmem [#allocation2], 16
    %v1088 = vld [vmem:[%s1087] sm:$0xff]
    %s1089 = scalar_lea.vmem [#allocation3], 16
    %v1090 = vld [vmem:[%s1089] sm:$0xff]
    %s1091 = scalar_lea.vmem [#allocation4], 16
    %v1092 = vld [vmem:[%s1091] sm:$0xff]
    %v1094 = vsel %vm502, %v1086, 0
    %1096 = vmatprep.subr.mxu0 0.0
    %1097 = vmatpush1.msra.mxu0 0.0
    %1098 = vmatprep.subr.mxu0 0.0
    %1099 = vmatpush1.msra.mxu0 0.0
    %1100 = vmatprep.subr.mxu0 0.0
    %1101 = vmatpush1.msra.mxu0 0.0
    %1102 = vmatprep.subr.mxu0 0.0
    %1103 = vmatpush1.msra.mxu0 0.0
    %1104 = vmatprep.subr.mxu0 0.0
    %1105 = vmatpush1.msra.mxu0 0.0
    %1106 = vmatprep.subr.mxu0 0.0
    %1107 = vmatpush1.msra.mxu0 0.0
    %1108 = vmatprep.subr.mxu0 0.0
    %1109 = vmatpush1.msra.mxu0 0.0
    %1110 = vmatprep.subr.mxu0 0.0
    %1111 = vmatpush1.msra.mxu0 0.0
    %1112 = vmatprep.subr.mxu0 0.0
    %1113 = vmatpush1.msra.mxu0 0.0
    %1114 = vmatprep.subr.mxu0 0.0
    %1115 = vmatpush1.msra.mxu0 0.0
    %1116 = vmatprep.subr.mxu0 0.0
    %1117 = vmatpush1.msra.mxu0 0.0
    %1118 = vmatprep.subr.mxu0 0.0
    %1119 = vmatpush1.msra.mxu0 0.0
    %1120 = vmatprep.subr.mxu0 0.0
    %1121 = vmatpush1.msra.mxu0 %v586
    %1122 = vmatprep.subr.mxu0 0.0
    %1123 = vmatpush1.msra.mxu0 %v585
    %1124 = vmatprep.subr.mxu0 0.0
    %1125 = vmatpush1.msra.mxu0 %v584
    %1126 = vmatprep.subr.mxu0 0.0
    %1127 = vmatpush1.msra.mxu0 %v583
    %1128 = vmatprep.subr.mxu0 0.0
    %1129 = vmatpush2.msra.mxu0 0.0
    %1130 = vmatprep.subr.mxu0 0.0
    %1131 = vmatpush2.msra.mxu0 0.0
    %1132 = vmatprep.subr.mxu0 0.0
    %1133 = vmatpush2.msra.mxu0 0.0
    %1134 = vmatprep.subr.mxu0 0.0
    %1135 = vmatpush2.msra.mxu0 0.0
    %1136 = vmatprep.subr.mxu0 0.0
    %1137 = vmatpush2.msra.mxu0 0.0
    %1138 = vmatprep.subr.mxu0 0.0
    %1139 = vmatpush2.msra.mxu0 0.0
    %1140 = vmatprep.subr.mxu0 0.0
    %1141 = vmatpush2.msra.mxu0 0.0
    %1142 = vmatprep.subr.mxu0 0.0
    %1143 = vmatpush2.msra.mxu0 0.0
    %1144 = vmatprep.subr.mxu0 0.0
    %1145 = vmatpush2.msra.mxu0 0.0
    %1146 = vmatprep.subr.mxu0 0.0
    %1147 = vmatpush2.msra.mxu0 0.0
    %1148 = vmatprep.subr.mxu0 0.0
    %1149 = vmatpush2.msra.mxu0 0.0
    %1150 = vmatprep.subr.mxu0 0.0
    %1151 = vmatpush2.msra.mxu0 0.0
    %1152 = vmatprep.subr.mxu0 0.0
    %1153 = vmatpush2.msra.mxu0 0.0
    %1154 = vmatprep.subr.mxu0 0.0
    %1155 = vmatpush2.msra.mxu0 0.0
    %1156 = vmatprep.subr.mxu0 0.0
    %1157 = vmatpush2.msra.mxu0 0.0
    %1158 = vmatprep.subr.mxu0 0.0
    %1159 = vmatpush2.msra.mxu0 0.0
    %1160 = vmatprep.mubr.f32.mxu0 0.0
    %1161 = vmatmul.mubr.f32.gmra.mxu0 %v1094
    %v1162 = vpop.f32.mrf.mxu0
    %v1163 = vadd.f32 0.0, %v1162
    %v1164 = vpop.f32.mrf.mxu0
    %1165 = vdwg.mxu0
    %1166 = vmatprep.subr.mxu0 0.0
    %1167 = vmatpush1.msra.mxu0 0.0
    %1168 = vmatprep.subr.mxu0 0.0
    %1169 = vmatpush1.msra.mxu0 0.0
    %1170 = vmatprep.subr.mxu0 0.0
    %1171 = vmatpush1.msra.mxu0 0.0
    %1172 = vmatprep.subr.mxu0 0.0
    %1173 = vmatpush1.msra.mxu0 0.0
    %1174 = vmatprep.subr.mxu0 0.0
    %1175 = vmatpush1.msra.mxu0 0.0
    %1176 = vmatprep.subr.mxu0 0.0
    %1177 = vmatpush1.msra.mxu0 0.0
    %1178 = vmatprep.subr.mxu0 0.0
    %1179 = vmatpush1.msra.mxu0 0.0
    %1180 = vmatprep.subr.mxu0 0.0
    %1181 = vmatpush1.msra.mxu0 0.0
    %1182 = vmatprep.subr.mxu0 0.0
    %1183 = vmatpush1.msra.mxu0 0.0
    %1184 = vmatprep.subr.mxu0 0.0
    %1185 = vmatpush1.msra.mxu0 0.0
    %1186 = vmatprep.subr.mxu0 0.0
    %1187 = vmatpush1.msra.mxu0 0.0
    %1188 = vmatprep.subr.mxu0 0.0
    %1189 = vmatpush1.msra.mxu0 0.0
    %1190 = vmatprep.subr.mxu0 0.0
    %1191 = vmatpush1.msra.mxu0 %v590
    %1192 = vmatprep.subr.mxu0 0.0
    %1193 = vmatpush1.msra.mxu0 %v589
    %1194 = vmatprep.subr.mxu0 0.0
    %1195 = vmatpush1.msra.mxu0 %v588
    %1196 = vmatprep.subr.mxu0 0.0
    %1197 = vmatpush1.msra.mxu0 %v587
    %1198 = vmatprep.subr.mxu0 0.0
    %1199 = vmatpush2.msra.mxu0 0.0
    %1200 = vmatprep.subr.mxu0 0.0
    %1201 = vmatpush2.msra.mxu0 0.0
    %1202 = vmatprep.subr.mxu0 0.0
    %1203 = vmatpush2.msra.mxu0 0.0
    %1204 = vmatprep.subr.mxu0 0.0
    %1205 = vmatpush2.msra.mxu0 0.0
    %1206 = vmatprep.subr.mxu0 0.0
    %1207 = vmatpush2.msra.mxu0 0.0
    %1208 = vmatprep.subr.mxu0 0.0
    %1209 = vmatpush2.msra.mxu0 0.0
    %1210 = vmatprep.subr.mxu0 0.0
    %1211 = vmatpush2.msra.mxu0 0.0
    %1212 = vmatprep.subr.mxu0 0.0
    %1213 = vmatpush2.msra.mxu0 0.0
    %1214 = vmatprep.subr.mxu0 0.0
    %1215 = vmatpush2.msra.mxu0 0.0
    %1216 = vmatprep.subr.mxu0 0.0
    %1217 = vmatpush2.msra.mxu0 0.0
    %1218 = vmatprep.subr.mxu0 0.0
    %1219 = vmatpush2.msra.mxu0 0.0
    %1220 = vmatprep.subr.mxu0 0.0
    %1221 = vmatpush2.msra.mxu0 0.0
    %1222 = vmatprep.subr.mxu0 0.0
    %1223 = vmatpush2.msra.mxu0 0.0
    %1224 = vmatprep.subr.mxu0 0.0
    %1225 = vmatpush2.msra.mxu0 0.0
    %1226 = vmatprep.subr.mxu0 0.0
    %1227 = vmatpush2.msra.mxu0 0.0
    %1228 = vmatprep.subr.mxu0 0.0
    %1229 = vmatpush2.msra.mxu0 0.0
    %1230 = vmatprep.mubr.f32.mxu0 0.0
    %1231 = vmatmul.mubr.f32.gmra.mxu0 %v1094
    %v1232 = vpop.f32.mrf.mxu0
    %v1233 = vadd.f32 0.0, %v1232
    %v1234 = vpop.f32.mrf.mxu0
    %1235 = vdwg.mxu0
    %v1236 = vadd.f32 %v1088, %v1163
    %v1237 = vxor.u32 %v1236, 2147483648
    %v1238 = vmul.f32 %v1237, 1.442695
    %v1239 = vpow.pop %v1238
    %v1240 = vadd.f32 %v1239, 1.0
    %v1241 = vrcp.pop %v1240
    %v1242 = vmul.f32 1.0, %v1241
    %v1243 = vadd.f32 %v1090, %v1233
    %v1244 = vxor.u32 %v1243, 2147483648
    %v1245 = vmul.f32 %v1244, 1.442695
    %v1246 = vpow.pop %v1245
    %v1247 = vadd.f32 %v1246, 1.0
    %v1248 = vrcp.pop %v1247
    %v1249 = vmul.f32 1.0, %v1248
    %1250 = vmatprep.subr.mxu0 0.0
    %1251 = vmatpush1.msra.mxu0 0.0
    %1252 = vmatprep.subr.mxu0 0.0
    %1253 = vmatpush1.msra.mxu0 0.0
    %1254 = vmatprep.subr.mxu0 0.0
    %1255 = vmatpush1.msra.mxu0 0.0
    %1256 = vmatprep.subr.mxu0 0.0
    %1257 = vmatpush1.msra.mxu0 0.0
    %1258 = vmatprep.subr.mxu0 0.0
    %1259 = vmatpush1.msra.mxu0 0.0
    %1260 = vmatprep.subr.mxu0 0.0
    %1261 = vmatpush1.msra.mxu0 0.0
    %1262 = vmatprep.subr.mxu0 0.0
    %1263 = vmatpush1.msra.mxu0 0.0
    %1264 = vmatprep.subr.mxu0 0.0
    %1265 = vmatpush1.msra.mxu0 0.0
    %1266 = vmatprep.subr.mxu0 0.0
    %1267 = vmatpush1.msra.mxu0 0.0
    %1268 = vmatprep.subr.mxu0 0.0
    %1269 = vmatpush1.msra.mxu0 0.0
    %1270 = vmatprep.subr.mxu0 0.0
    %1271 = vmatpush1.msra.mxu0 0.0
    %1272 = vmatprep.subr.mxu0 0.0
    %1273 = vmatpush1.msra.mxu0 0.0
    %1274 = vmatprep.subr.mxu0 0.0
    %1275 = vmatpush1.msra.mxu0 %v594
    %1276 = vmatprep.subr.mxu0 0.0
    %1277 = vmatpush1.msra.mxu0 %v593
    %1278 = vmatprep.subr.mxu0 0.0
    %1279 = vmatpush1.msra.mxu0 %v592
    %1280 = vmatprep.subr.mxu0 0.0
    %1281 = vmatpush1.msra.mxu0 %v591
    %1282 = vmatprep.subr.mxu0 0.0
    %1283 = vmatpush2.msra.mxu0 0.0
    %1284 = vmatprep.subr.mxu0 0.0
    %1285 = vmatpush2.msra.mxu0 0.0
    %1286 = vmatprep.subr.mxu0 0.0
    %1287 = vmatpush2.msra.mxu0 0.0
    %1288 = vmatprep.subr.mxu0 0.0
    %1289 = vmatpush2.msra.mxu0 0.0
    %1290 = vmatprep.subr.mxu0 0.0
    %1291 = vmatpush2.msra.mxu0 0.0
    %1292 = vmatprep.subr.mxu0 0.0
    %1293 = vmatpush2.msra.mxu0 0.0
    %1294 = vmatprep.subr.mxu0 0.0
    %1295 = vmatpush2.msra.mxu0 0.0
    %1296 = vmatprep.subr.mxu0 0.0
    %1297 = vmatpush2.msra.mxu0 0.0
    %1298 = vmatprep.subr.mxu0 0.0
    %1299 = vmatpush2.msra.mxu0 0.0
    %1300 = vmatprep.subr.mxu0 0.0
    %1301 = vmatpush2.msra.mxu0 0.0
    %1302 = vmatprep.subr.mxu0 0.0
    %1303 = vmatpush2.msra.mxu0 0.0
    %1304 = vmatprep.subr.mxu0 0.0
    %1305 = vmatpush2.msra.mxu0 0.0
    %1306 = vmatprep.subr.mxu0 0.0
    %1307 = vmatpush2.msra.mxu0 0.0
    %1308 = vmatprep.subr.mxu0 0.0
    %1309 = vmatpush2.msra.mxu0 0.0
    %1310 = vmatprep.subr.mxu0 0.0
    %1311 = vmatpush2.msra.mxu0 0.0
    %1312 = vmatprep.subr.mxu0 0.0
    %1313 = vmatpush2.msra.mxu0 0.0
    %1314 = vmatprep.mubr.f32.mxu0 0.0
    %1315 = vmatmul.mubr.f32.gmra.mxu0 %v1094
    %v1316 = vpop.f32.mrf.mxu0
    %v1317 = vadd.f32 %v600, %v1316
    %v1318 = vpop.f32.mrf.mxu0
    %1319 = vdwg.mxu0
    %v1320 = vmul.f32 %v1242, %v1317
    %v1321 = vadd.f32 %v1092, %v1320
    %v1322 = vtanh.pop %v1321
    %v1323 = vsub.f32 1.0, %v1249
    %v1324 = vmul.f32 %v1323, %v1322
    %v1325 = vmul.f32 %v1249, %v1086
    %v1326 = vadd.f32 %v1324, %v1325
    %vm1327 = vcmp.gt.s32.totalorder %v605, 2
    %v1328 = vsel %vm1327, %v1326, %v1086
    %s1329 = scalar_lea.vmem [#allocation2], 24
    %v1330 = vld [vmem:[%s1329] sm:$0xff]
    %s1331 = scalar_lea.vmem [#allocation3], 24
    %v1332 = vld [vmem:[%s1331] sm:$0xff]
    %s1333 = scalar_lea.vmem [#allocation4], 24
    %v1334 = vld [vmem:[%s1333] sm:$0xff]
    %v1336 = vsel %vm502, %v1328, 0
    %1338 = vmatprep.subr.mxu0 0.0
    %1339 = vmatpush1.msra.mxu0 0.0
    %1340 = vmatprep.subr.mxu0 0.0
    %1341 = vmatpush1.msra.mxu0 0.0
    %1342 = vmatprep.subr.mxu0 0.0
    %1343 = vmatpush1.msra.mxu0 0.0
    %1344 = vmatprep.subr.mxu0 0.0
    %1345 = vmatpush1.msra.mxu0 0.0
    %1346 = vmatprep.subr.mxu0 0.0
    %1347 = vmatpush1.msra.mxu0 0.0
    %1348 = vmatprep.subr.mxu0 0.0
    %1349 = vmatpush1.msra.mxu0 0.0
    %1350 = vmatprep.subr.mxu0 0.0
    %1351 = vmatpush1.msra.mxu0 0.0
    %1352 = vmatprep.subr.mxu0 0.0
    %1353 = vmatpush1.msra.mxu0 0.0
    %1354 = vmatprep.subr.mxu0 0.0
    %1355 = vmatpush1.msra.mxu0 0.0
    %1356 = vmatprep.subr.mxu0 0.0
    %1357 = vmatpush1.msra.mxu0 0.0
    %1358 = vmatprep.subr.mxu0 0.0
    %1359 = vmatpush1.msra.mxu0 0.0
    %1360 = vmatprep.subr.mxu0 0.0
    %1361 = vmatpush1.msra.mxu0 0.0
    %1362 = vmatprep.subr.mxu0 0.0
    %1363 = vmatpush1.msra.mxu0 %v586
    %1364 = vmatprep.subr.mxu0 0.0
    %1365 = vmatpush1.msra.mxu0 %v585
    %1366 = vmatprep.subr.mxu0 0.0
    %1367 = vmatpush1.msra.mxu0 %v584
    %1368 = vmatprep.subr.mxu0 0.0
    %1369 = vmatpush1.msra.mxu0 %v583
    %1370 = vmatprep.subr.mxu0 0.0
    %1371 = vmatpush2.msra.mxu0 0.0
    %1372 = vmatprep.subr.mxu0 0.0
    %1373 = vmatpush2.msra.mxu0 0.0
    %1374 = vmatprep.subr.mxu0 0.0
    %1375 = vmatpush2.msra.mxu0 0.0
    %1376 = vmatprep.subr.mxu0 0.0
    %1377 = vmatpush2.msra.mxu0 0.0
    %1378 = vmatprep.subr.mxu0 0.0
    %1379 = vmatpush2.msra.mxu0 0.0
    %1380 = vmatprep.subr.mxu0 0.0
    %1381 = vmatpush2.msra.mxu0 0.0
    %1382 = vmatprep.subr.mxu0 0.0
    %1383 = vmatpush2.msra.mxu0 0.0
    %1384 = vmatprep.subr.mxu0 0.0
    %1385 = vmatpush2.msra.mxu0 0.0
    %1386 = vmatprep.subr.mxu0 0.0
    %1387 = vmatpush2.msra.mxu0 0.0
    %1388 = vmatprep.subr.mxu0 0.0
    %1389 = vmatpush2.msra.mxu0 0.0
    %1390 = vmatprep.subr.mxu0 0.0
    %1391 = vmatpush2.msra.mxu0 0.0
    %1392 = vmatprep.subr.mxu0 0.0
    %1393 = vmatpush2.msra.mxu0 0.0
    %1394 = vmatprep.subr.mxu0 0.0
    %1395 = vmatpush2.msra.mxu0 0.0
    %1396 = vmatprep.subr.mxu0 0.0
    %1397 = vmatpush2.msra.mxu0 0.0
    %1398 = vmatprep.subr.mxu0 0.0
    %1399 = vmatpush2.msra.mxu0 0.0
    %1400 = vmatprep.subr.mxu0 0.0
    %1401 = vmatpush2.msra.mxu0 0.0
    %1402 = vmatprep.mubr.f32.mxu0 0.0
    %1403 = vmatmul.mubr.f32.gmra.mxu0 %v1336
    %v1404 = vpop.f32.mrf.mxu0
    %v1405 = vadd.f32 0.0, %v1404
    %v1406 = vpop.f32.mrf.mxu0
    %1407 = vdwg.mxu0
    %1408 = vmatprep.subr.mxu0 0.0
    %1409 = vmatpush1.msra.mxu0 0.0
    %1410 = vmatprep.subr.mxu0 0.0
    %1411 = vmatpush1.msra.mxu0 0.0
    %1412 = vmatprep.subr.mxu0 0.0
    %1413 = vmatpush1.msra.mxu0 0.0
    %1414 = vmatprep.subr.mxu0 0.0
    %1415 = vmatpush1.msra.mxu0 0.0
    %1416 = vmatprep.subr.mxu0 0.0
    %1417 = vmatpush1.msra.mxu0 0.0
    %1418 = vmatprep.subr.mxu0 0.0
    %1419 = vmatpush1.msra.mxu0 0.0
    %1420 = vmatprep.subr.mxu0 0.0
    %1421 = vmatpush1.msra.mxu0 0.0
    %1422 = vmatprep.subr.mxu0 0.0
    %1423 = vmatpush1.msra.mxu0 0.0
    %1424 = vmatprep.subr.mxu0 0.0
    %1425 = vmatpush1.msra.mxu0 0.0
    %1426 = vmatprep.subr.mxu0 0.0
    %1427 = vmatpush1.msra.mxu0 0.0
    %1428 = vmatprep.subr.mxu0 0.0
    %1429 = vmatpush1.msra.mxu0 0.0
    %1430 = vmatprep.subr.mxu0 0.0
    %1431 = vmatpush1.msra.mxu0 0.0
    %1432 = vmatprep.subr.mxu0 0.0
    %1433 = vmatpush1.msra.mxu0 %v590
    %1434 = vmatprep.subr.mxu0 0.0
    %1435 = vmatpush1.msra.mxu0 %v589
    %1436 = vmatprep.subr.mxu0 0.0
    %1437 = vmatpush1.msra.mxu0 %v588
    %1438 = vmatprep.subr.mxu0 0.0
    %1439 = vmatpush1.msra.mxu0 %v587
    %1440 = vmatprep.subr.mxu0 0.0
    %1441 = vmatpush2.msra.mxu0 0.0
    %1442 = vmatprep.subr.mxu0 0.0
    %1443 = vmatpush2.msra.mxu0 0.0
    %1444 = vmatprep.subr.mxu0 0.0
    %1445 = vmatpush2.msra.mxu0 0.0
    %1446 = vmatprep.subr.mxu0 0.0
    %1447 = vmatpush2.msra.mxu0 0.0
    %1448 = vmatprep.subr.mxu0 0.0
    %1449 = vmatpush2.msra.mxu0 0.0
    %1450 = vmatprep.subr.mxu0 0.0
    %1451 = vmatpush2.msra.mxu0 0.0
    %1452 = vmatprep.subr.mxu0 0.0
    %1453 = vmatpush2.msra.mxu0 0.0
    %1454 = vmatprep.subr.mxu0 0.0
    %1455 = vmatpush2.msra.mxu0 0.0
    %1456 = vmatprep.subr.mxu0 0.0
    %1457 = vmatpush2.msra.mxu0 0.0
    %1458 = vmatprep.subr.mxu0 0.0
    %1459 = vmatpush2.msra.mxu0 0.0
    %1460 = vmatprep.subr.mxu0 0.0
    %1461 = vmatpush2.msra.mxu0 0.0
    %1462 = vmatprep.subr.mxu0 0.0
    %1463 = vmatpush2.msra.mxu0 0.0
    %1464 = vmatprep.subr.mxu0 0.0
    %1465 = vmatpush2.msra.mxu0 0.0
    %1466 = vmatprep.subr.mxu0 0.0
    %1467 = vmatpush2.msra.mxu0 0.0
    %1468 = vmatprep.subr.mxu0 0.0
    %1469 = vmatpush2.msra.mxu0 0.0
    %1470 = vmatprep.subr.mxu0 0.0
    %1471 = vmatpush2.msra.mxu0 0.0
    %1472 = vmatprep.mubr.f32.mxu0 0.0
    %1473 = vmatmul.mubr.f32.gmra.mxu0 %v1336
    %v1474 = vpop.f32.mrf.mxu0
    %v1475 = vadd.f32 0.0, %v1474
    %v1476 = vpop.f32.mrf.mxu0
    %1477 = vdwg.mxu0
    %v1478 = vadd.f32 %v1330, %v1405
    %v1479 = vxor.u32 %v1478, 2147483648
    %v1480 = vmul.f32 %v1479, 1.442695
    %v1481 = vpow.pop %v1480
    %v1482 = vadd.f32 %v1481, 1.0
    %v1483 = vrcp.pop %v1482
    %v1484 = vmul.f32 1.0, %v1483
    %v1485 = vadd.f32 %v1332, %v1475
    %v1486 = vxor.u32 %v1485, 2147483648
    %v1487 = vmul.f32 %v1486, 1.442695
    %v1488 = vpow.pop %v1487
    %v1489 = vadd.f32 %v1488, 1.0
    %v1490 = vrcp.pop %v1489
    %v1491 = vmul.f32 1.0, %v1490
    %1492 = vmatprep.subr.mxu0 0.0
    %1493 = vmatpush1.msra.mxu0 0.0
    %1494 = vmatprep.subr.mxu0 0.0
    %1495 = vmatpush1.msra.mxu0 0.0
    %1496 = vmatprep.subr.mxu0 0.0
    %1497 = vmatpush1.msra.mxu0 0.0
    %1498 = vmatprep.subr.mxu0 0.0
    %1499 = vmatpush1.msra.mxu0 0.0
    %1500 = vmatprep.subr.mxu0 0.0
    %1501 = vmatpush1.msra.mxu0 0.0
    %1502 = vmatprep.subr.mxu0 0.0
    %1503 = vmatpush1.msra.mxu0 0.0
    %1504 = vmatprep.subr.mxu0 0.0
    %1505 = vmatpush1.msra.mxu0 0.0
    %1506 = vmatprep.subr.mxu0 0.0
    %1507 = vmatpush1.msra.mxu0 0.0
    %1508 = vmatprep.subr.mxu0 0.0
    %1509 = vmatpush1.msra.mxu0 0.0
    %1510 = vmatprep.subr.mxu0 0.0
    %1511 = vmatpush1.msra.mxu0 0.0
    %1512 = vmatprep.subr.mxu0 0.0
    %1513 = vmatpush1.msra.mxu0 0.0
    %1514 = vmatprep.subr.mxu0 0.0
    %1515 = vmatpush1.msra.mxu0 0.0
    %1516 = vmatprep.subr.mxu0 0.0
    %1517 = vmatpush1.msra.mxu0 %v594
    %1518 = vmatprep.subr.mxu0 0.0
    %1519 = vmatpush1.msra.mxu0 %v593
    %1520 = vmatprep.subr.mxu0 0.0
    %1521 = vmatpush1.msra.mxu0 %v592
    %1522 = vmatprep.subr.mxu0 0.0
    %1523 = vmatpush1.msra.mxu0 %v591
    %1524 = vmatprep.subr.mxu0 0.0
    %1525 = vmatpush2.msra.mxu0 0.0
    %1526 = vmatprep.subr.mxu0 0.0
    %1527 = vmatpush2.msra.mxu0 0.0
    %1528 = vmatprep.subr.mxu0 0.0
    %1529 = vmatpush2.msra.mxu0 0.0
    %1530 = vmatprep.subr.mxu0 0.0
    %1531 = vmatpush2.msra.mxu0 0.0
    %1532 = vmatprep.subr.mxu0 0.0
    %1533 = vmatpush2.msra.mxu0 0.0
    %1534 = vmatprep.subr.mxu0 0.0
    %1535 = vmatpush2.msra.mxu0 0.0
    %1536 = vmatprep.subr.mxu0 0.0
    %1537 = vmatpush2.msra.mxu0 0.0
    %1538 = vmatprep.subr.mxu0 0.0
    %1539 = vmatpush2.msra.mxu0 0.0
    %1540 = vmatprep.subr.mxu0 0.0
    %1541 = vmatpush2.msra.mxu0 0.0
    %1542 = vmatprep.subr.mxu0 0.0
    %1543 = vmatpush2.msra.mxu0 0.0
    %1544 = vmatprep.subr.mxu0 0.0
    %1545 = vmatpush2.msra.mxu0 0.0
    %1546 = vmatprep.subr.mxu0 0.0
    %1547 = vmatpush2.msra.mxu0 0.0
    %1548 = vmatprep.subr.mxu0 0.0
    %1549 = vmatpush2.msra.mxu0 0.0
    %1550 = vmatprep.subr.mxu0 0.0
    %1551 = vmatpush2.msra.mxu0 0.0
    %1552 = vmatprep.subr.mxu0 0.0
    %1553 = vmatpush2.msra.mxu0 0.0
    %1554 = vmatprep.subr.mxu0 0.0
    %1555 = vmatpush2.msra.mxu0 0.0
    %1556 = vmatprep.mubr.f32.mxu0 0.0
    %1557 = vmatmul.mubr.f32.gmra.mxu0 %v1336
    %v1558 = vpop.f32.mrf.mxu0
    %v1559 = vadd.f32 %v600, %v1558
    %v1560 = vpop.f32.mrf.mxu0
    %1561 = vdwg.mxu0
    %v1562 = vmul.f32 %v1484, %v1559
    %v1563 = vadd.f32 %v1334, %v1562
    %v1564 = vtanh.pop %v1563
    %v1565 = vsub.f32 1.0, %v1491
    %v1566 = vmul.f32 %v1565, %v1564
    %v1567 = vmul.f32 %v1491, %v1328
    %v1568 = vadd.f32 %v1566, %v1567
    %vm1569 = vcmp.gt.s32.totalorder %v605, 3
    %v1570 = vsel %vm1569, %v1568, %v1328
    %s1571 = scalar_lea.vmem [#allocation2], 32
    %v1572 = vld [vmem:[%s1571] sm:$0xff]
    %s1573 = scalar_lea.vmem [#allocation3], 32
    %v1574 = vld [vmem:[%s1573] sm:$0xff]
    %s1575 = scalar_lea.vmem [#allocation4], 32
    %v1576 = vld [vmem:[%s1575] sm:$0xff]
    %v1578 = vsel %vm502, %v1570, 0
    %1580 = vmatprep.subr.mxu0 0.0
    %1581 = vmatpush1.msra.mxu0 0.0
    %1582 = vmatprep.subr.mxu0 0.0
    %1583 = vmatpush1.msra.mxu0 0.0
    %1584 = vmatprep.subr.mxu0 0.0
    %1585 = vmatpush1.msra.mxu0 0.0
    %1586 = vmatprep.subr.mxu0 0.0
    %1587 = vmatpush1.msra.mxu0 0.0
    %1588 = vmatprep.subr.mxu0 0.0
    %1589 = vmatpush1.msra.mxu0 0.0
    %1590 = vmatprep.subr.mxu0 0.0
    %1591 = vmatpush1.msra.mxu0 0.0
    %1592 = vmatprep.subr.mxu0 0.0
    %1593 = vmatpush1.msra.mxu0 0.0
    %1594 = vmatprep.subr.mxu0 0.0
    %1595 = vmatpush1.msra.mxu0 0.0
    %1596 = vmatprep.subr.mxu0 0.0
    %1597 = vmatpush1.msra.mxu0 0.0
    %1598 = vmatprep.subr.mxu0 0.0
    %1599 = vmatpush1.msra.mxu0 0.0
    %1600 = vmatprep.subr.mxu0 0.0
    %1601 = vmatpush1.msra.mxu0 0.0
    %1602 = vmatprep.subr.mxu0 0.0
    %1603 = vmatpush1.msra.mxu0 0.0
    %1604 = vmatprep.subr.mxu0 0.0
    %1605 = vmatpush1.msra.mxu0 %v586
    %1606 = vmatprep.subr.mxu0 0.0
    %1607 = vmatpush1.msra.mxu0 %v585
    %1608 = vmatprep.subr.mxu0 0.0
    %1609 = vmatpush1.msra.mxu0 %v584
    %1610 = vmatprep.subr.mxu0 0.0
    %1611 = vmatpush1.msra.mxu0 %v583
    %1612 = vmatprep.subr.mxu0 0.0
    %1613 = vmatpush2.msra.mxu0 0.0
    %1614 = vmatprep.subr.mxu0 0.0
    %1615 = vmatpush2.msra.mxu0 0.0
    %1616 = vmatprep.subr.mxu0 0.0
    %1617 = vmatpush2.msra.mxu0 0.0
    %1618 = vmatprep.subr.mxu0 0.0
    %1619 = vmatpush2.msra.mxu0 0.0
    %1620 = vmatprep.subr.mxu0 0.0
    %1621 = vmatpush2.msra.mxu0 0.0
    %1622 = vmatprep.subr.mxu0 0.0
    %1623 = vmatpush2.msra.mxu0 0.0
    %1624 = vmatprep.subr.mxu0 0.0
    %1625 = vmatpush2.msra.mxu0 0.0
    %1626 = vmatprep.subr.mxu0 0.0
    %1627 = vmatpush2.msra.mxu0 0.0
    %1628 = vmatprep.subr.mxu0 0.0
    %1629 = vmatpush2.msra.mxu0 0.0
    %1630 = vmatprep.subr.mxu0 0.0
    %1631 = vmatpush2.msra.mxu0 0.0
    %1632 = vmatprep.subr.mxu0 0.0
    %1633 = vmatpush2.msra.mxu0 0.0
    %1634 = vmatprep.subr.mxu0 0.0
    %1635 = vmatpush2.msra.mxu0 0.0
    %1636 = vmatprep.subr.mxu0 0.0
    %1637 = vmatpush2.msra.mxu0 0.0
    %1638 = vmatprep.subr.mxu0 0.0
    %1639 = vmatpush2.msra.mxu0 0.0
    %1640 = vmatprep.subr.mxu0 0.0
    %1641 = vmatpush2.msra.mxu0 0.0
    %1642 = vmatprep.subr.mxu0 0.0
    %1643 = vmatpush2.msra.mxu0 0.0
    %1644 = vmatprep.mubr.f32.mxu0 0.0
    %1645 = vmatmul.mubr.f32.gmra.mxu0 %v1578
    %v1646 = vpop.f32.mrf.mxu0
    %v1647 = vadd.f32 0.0, %v1646
    %v1648 = vpop.f32.mrf.mxu0
    %1649 = vdwg.mxu0
    %1650 = vmatprep.subr.mxu0 0.0
    %1651 = vmatpush1.msra.mxu0 0.0
    %1652 = vmatprep.subr.mxu0 0.0
    %1653 = vmatpush1.msra.mxu0 0.0
    %1654 = vmatprep.subr.mxu0 0.0
    %1655 = vmatpush1.msra.mxu0 0.0
    %1656 = vmatprep.subr.mxu0 0.0
    %1657 = vmatpush1.msra.mxu0 0.0
    %1658 = vmatprep.subr.mxu0 0.0
    %1659 = vmatpush1.msra.mxu0 0.0
    %1660 = vmatprep.subr.mxu0 0.0
    %1661 = vmatpush1.msra.mxu0 0.0
    %1662 = vmatprep.subr.mxu0 0.0
    %1663 = vmatpush1.msra.mxu0 0.0
    %1664 = vmatprep.subr.mxu0 0.0
    %1665 = vmatpush1.msra.mxu0 0.0
    %1666 = vmatprep.subr.mxu0 0.0
    %1667 = vmatpush1.msra.mxu0 0.0
    %1668 = vmatprep.subr.mxu0 0.0
    %1669 = vmatpush1.msra.mxu0 0.0
    %1670 = vmatprep.subr.mxu0 0.0
    %1671 = vmatpush1.msra.mxu0 0.0
    %1672 = vmatprep.subr.mxu0 0.0
    %1673 = vmatpush1.msra.mxu0 0.0
    %1674 = vmatprep.subr.mxu0 0.0
    %1675 = vmatpush1.msra.mxu0 %v590
    %1676 = vmatprep.subr.mxu0 0.0
    %1677 = vmatpush1.msra.mxu0 %v589
    %1678 = vmatprep.subr.mxu0 0.0
    %1679 = vmatpush1.msra.mxu0 %v588
    %1680 = vmatprep.subr.mxu0 0.0
    %1681 = vmatpush1.msra.mxu0 %v587
    %1682 = vmatprep.subr.mxu0 0.0
    %1683 = vmatpush2.msra.mxu0 0.0
    %1684 = vmatprep.subr.mxu0 0.0
    %1685 = vmatpush2.msra.mxu0 0.0
    %1686 = vmatprep.subr.mxu0 0.0
    %1687 = vmatpush2.msra.mxu0 0.0
    %1688 = vmatprep.subr.mxu0 0.0
    %1689 = vmatpush2.msra.mxu0 0.0
    %1690 = vmatprep.subr.mxu0 0.0
    %1691 = vmatpush2.msra.mxu0 0.0
    %1692 = vmatprep.subr.mxu0 0.0
    %1693 = vmatpush2.msra.mxu0 0.0
    %1694 = vmatprep.subr.mxu0 0.0
    %1695 = vmatpush2.msra.mxu0 0.0
    %1696 = vmatprep.subr.mxu0 0.0
    %1697 = vmatpush2.msra.mxu0 0.0
    %1698 = vmatprep.subr.mxu0 0.0
    %1699 = vmatpush2.msra.mxu0 0.0
    %1700 = vmatprep.subr.mxu0 0.0
    %1701 = vmatpush2.msra.mxu0 0.0
    %1702 = vmatprep.subr.mxu0 0.0
    %1703 = vmatpush2.msra.mxu0 0.0
    %1704 = vmatprep.subr.mxu0 0.0
    %1705 = vmatpush2.msra.mxu0 0.0
    %1706 = vmatprep.subr.mxu0 0.0
    %1707 = vmatpush2.msra.mxu0 0.0
    %1708 = vmatprep.subr.mxu0 0.0
    %1709 = vmatpush2.msra.mxu0 0.0
    %1710 = vmatprep.subr.mxu0 0.0
    %1711 = vmatpush2.msra.mxu0 0.0
    %1712 = vmatprep.subr.mxu0 0.0
    %1713 = vmatpush2.msra.mxu0 0.0
    %1714 = vmatprep.mubr.f32.mxu0 0.0
    %1715 = vmatmul.mubr.f32.gmra.mxu0 %v1578
    %v1716 = vpop.f32.mrf.mxu0
    %v1717 = vadd.f32 0.0, %v1716
    %v1718 = vpop.f32.mrf.mxu0
    %1719 = vdwg.mxu0
    %v1720 = vadd.f32 %v1572, %v1647
    %v1721 = vxor.u32 %v1720, 2147483648
    %v1722 = vmul.f32 %v1721, 1.442695
    %v1723 = vpow.pop %v1722
    %v1724 = vadd.f32 %v1723, 1.0
    %v1725 = vrcp.pop %v1724
    %v1726 = vmul.f32 1.0, %v1725
    %v1727 = vadd.f32 %v1574, %v1717
    %v1728 = vxor.u32 %v1727, 2147483648
    %v1729 = vmul.f32 %v1728, 1.442695
    %v1730 = vpow.pop %v1729
    %v1731 = vadd.f32 %v1730, 1.0
    %v1732 = vrcp.pop %v1731
    %v1733 = vmul.f32 1.0, %v1732
    %1734 = vmatprep.subr.mxu0 0.0
    %1735 = vmatpush1.msra.mxu0 0.0
    %1736 = vmatprep.subr.mxu0 0.0
    %1737 = vmatpush1.msra.mxu0 0.0
    %1738 = vmatprep.subr.mxu0 0.0
    %1739 = vmatpush1.msra.mxu0 0.0
    %1740 = vmatprep.subr.mxu0 0.0
    %1741 = vmatpush1.msra.mxu0 0.0
    %1742 = vmatprep.subr.mxu0 0.0
    %1743 = vmatpush1.msra.mxu0 0.0
    %1744 = vmatprep.subr.mxu0 0.0
    %1745 = vmatpush1.msra.mxu0 0.0
    %1746 = vmatprep.subr.mxu0 0.0
    %1747 = vmatpush1.msra.mxu0 0.0
    %1748 = vmatprep.subr.mxu0 0.0
    %1749 = vmatpush1.msra.mxu0 0.0
    %1750 = vmatprep.subr.mxu0 0.0
    %1751 = vmatpush1.msra.mxu0 0.0
    %1752 = vmatprep.subr.mxu0 0.0
    %1753 = vmatpush1.msra.mxu0 0.0
    %1754 = vmatprep.subr.mxu0 0.0
    %1755 = vmatpush1.msra.mxu0 0.0
    %1756 = vmatprep.subr.mxu0 0.0
    %1757 = vmatpush1.msra.mxu0 0.0
    %1758 = vmatprep.subr.mxu0 0.0
    %1759 = vmatpush1.msra.mxu0 %v594
    %1760 = vmatprep.subr.mxu0 0.0
    %1761 = vmatpush1.msra.mxu0 %v593
    %1762 = vmatprep.subr.mxu0 0.0
    %1763 = vmatpush1.msra.mxu0 %v592
    %1764 = vmatprep.subr.mxu0 0.0
    %1765 = vmatpush1.msra.mxu0 %v591
    %1766 = vmatprep.subr.mxu0 0.0
    %1767 = vmatpush2.msra.mxu0 0.0
    %1768 = vmatprep.subr.mxu0 0.0
    %1769 = vmatpush2.msra.mxu0 0.0
    %1770 = vmatprep.subr.mxu0 0.0
    %1771 = vmatpush2.msra.mxu0 0.0
    %1772 = vmatprep.subr.mxu0 0.0
    %1773 = vmatpush2.msra.mxu0 0.0
    %1774 = vmatprep.subr.mxu0 0.0
    %1775 = vmatpush2.msra.mxu0 0.0
    %1776 = vmatprep.subr.mxu0 0.0
    %1777 = vmatpush2.msra.mxu0 0.0
    %1778 = vmatprep.subr.mxu0 0.0
    %1779 = vmatpush2.msra.mxu0 0.0
    %1780 = vmatprep.subr.mxu0 0.0
    %1781 = vmatpush2.msra.mxu0 0.0
    %1782 = vmatprep.subr.mxu0 0.0
    %1783 = vmatpush2.msra.mxu0 0.0
    %1784 = vmatprep.subr.mxu0 0.0
    %1785 = vmatpush2.msra.mxu0 0.0
    %1786 = vmatprep.subr.mxu0 0.0
    %1787 = vmatpush2.msra.mxu0 0.0
    %1788 = vmatprep.subr.mxu0 0.0
    %1789 = vmatpush2.msra.mxu0 0.0
    %1790 = vmatprep.subr.mxu0 0.0
    %1791 = vmatpush2.msra.mxu0 0.0
    %1792 = vmatprep.subr.mxu0 0.0
    %1793 = vmatpush2.msra.mxu0 0.0
    %1794 = vmatprep.subr.mxu0 0.0
    %1795 = vmatpush2.msra.mxu0 0.0
    %1796 = vmatprep.subr.mxu0 0.0
    %1797 = vmatpush2.msra.mxu0 0.0
    %1798 = vmatprep.mubr.f32.mxu0 0.0
    %1799 = vmatmul.mubr.f32.gmra.mxu0 %v1578
    %v1800 = vpop.f32.mrf.mxu0
    %v1801 = vadd.f32 %v600, %v1800
    %v1802 = vpop.f32.mrf.mxu0
    %1803 = vdwg.mxu0
    %v1804 = vmul.f32 %v1726, %v1801
    %v1805 = vadd.f32 %v1576, %v1804
    %v1806 = vtanh.pop %v1805
    %v1807 = vsub.f32 1.0, %v1733
    %v1808 = vmul.f32 %v1807, %v1806
    %v1809 = vmul.f32 %v1733, %v1570
    %v1810 = vadd.f32 %v1808, %v1809
    %vm1811 = vcmp.gt.s32.totalorder %v605, 4
    %v1812 = vsel %vm1811, %v1810, %v1570
    %s1813 = scalar_lea.vmem [#allocation2], 40
    %v1814 = vld [vmem:[%s1813] sm:$0xff]
    %s1815 = scalar_lea.vmem [#allocation3], 40
    %v1816 = vld [vmem:[%s1815] sm:$0xff]
    %s1817 = scalar_lea.vmem [#allocation4], 40
    %v1818 = vld [vmem:[%s1817] sm:$0xff]
    %v1820 = vsel %vm502, %v1812, 0
    %1822 = vmatprep.subr.mxu0 0.0
    %1823 = vmatpush1.msra.mxu0 0.0
    %1824 = vmatprep.subr.mxu0 0.0
    %1825 = vmatpush1.msra.mxu0 0.0
    %1826 = vmatprep.subr.mxu0 0.0
    %1827 = vmatpush1.msra.mxu0 0.0
    %1828 = vmatprep.subr.mxu0 0.0
    %1829 = vmatpush1.msra.mxu0 0.0
    %1830 = vmatprep.subr.mxu0 0.0
    %1831 = vmatpush1.msra.mxu0 0.0
    %1832 = vmatprep.subr.mxu0 0.0
    %1833 = vmatpush1.msra.mxu0 0.0
    %1834 = vmatprep.subr.mxu0 0.0
    %1835 = vmatpush1.msra.mxu0 0.0
    %1836 = vmatprep.subr.mxu0 0.0
    %1837 = vmatpush1.msra.mxu0 0.0
    %1838 = vmatprep.subr.mxu0 0.0
    %1839 = vmatpush1.msra.mxu0 0.0
    %1840 = vmatprep.subr.mxu0 0.0
    %1841 = vmatpush1.msra.mxu0 0.0
    %1842 = vmatprep.subr.mxu0 0.0
    %1843 = vmatpush1.msra.mxu0 0.0
    %1844 = vmatprep.subr.mxu0 0.0
    %1845 = vmatpush1.msra.mxu0 0.0
    %1846 = vmatprep.subr.mxu0 0.0
    %1847 = vmatpush1.msra.mxu0 %v586
    %1848 = vmatprep.subr.mxu0 0.0
    %1849 = vmatpush1.msra.mxu0 %v585
    %1850 = vmatprep.subr.mxu0 0.0
    %1851 = vmatpush1.msra.mxu0 %v584
    %1852 = vmatprep.subr.mxu0 0.0
    %1853 = vmatpush1.msra.mxu0 %v583
    %1854 = vmatprep.subr.mxu0 0.0
    %1855 = vmatpush2.msra.mxu0 0.0
    %1856 = vmatprep.subr.mxu0 0.0
    %1857 = vmatpush2.msra.mxu0 0.0
    %1858 = vmatprep.subr.mxu0 0.0
    %1859 = vmatpush2.msra.mxu0 0.0
    %1860 = vmatprep.subr.mxu0 0.0
    %1861 = vmatpush2.msra.mxu0 0.0
    %1862 = vmatprep.subr.mxu0 0.0
    %1863 = vmatpush2.msra.mxu0 0.0
    %1864 = vmatprep.subr.mxu0 0.0
    %1865 = vmatpush2.msra.mxu0 0.0
    %1866 = vmatprep.subr.mxu0 0.0
    %1867 = vmatpush2.msra.mxu0 0.0
    %1868 = vmatprep.subr.mxu0 0.0
    %1869 = vmatpush2.msra.mxu0 0.0
    %1870 = vmatprep.subr.mxu0 0.0
    %1871 = vmatpush2.msra.mxu0 0.0
    %1872 = vmatprep.subr.mxu0 0.0
    %1873 = vmatpush2.msra.mxu0 0.0
    %1874 = vmatprep.subr.mxu0 0.0
    %1875 = vmatpush2.msra.mxu0 0.0
    %1876 = vmatprep.subr.mxu0 0.0
    %1877 = vmatpush2.msra.mxu0 0.0
    %1878 = vmatprep.subr.mxu0 0.0
    %1879 = vmatpush2.msra.mxu0 0.0
    %1880 = vmatprep.subr.mxu0 0.0
    %1881 = vmatpush2.msra.mxu0 0.0
    %1882 = vmatprep.subr.mxu0 0.0
    %1883 = vmatpush2.msra.mxu0 0.0
    %1884 = vmatprep.subr.mxu0 0.0
    %1885 = vmatpush2.msra.mxu0 0.0
    %1886 = vmatprep.mubr.f32.mxu0 0.0
    %1887 = vmatmul.mubr.f32.gmra.mxu0 %v1820
    %v1888 = vpop.f32.mrf.mxu0
    %v1889 = vadd.f32 0.0, %v1888
    %v1890 = vpop.f32.mrf.mxu0
    %1891 = vdwg.mxu0
    %1892 = vmatprep.subr.mxu0 0.0
    %1893 = vmatpush1.msra.mxu0 0.0
    %1894 = vmatprep.subr.mxu0 0.0
    %1895 = vmatpush1.msra.mxu0 0.0
    %1896 = vmatprep.subr.mxu0 0.0
    %1897 = vmatpush1.msra.mxu0 0.0
    %1898 = vmatprep.subr.mxu0 0.0
    %1899 = vmatpush1.msra.mxu0 0.0
    %1900 = vmatprep.subr.mxu0 0.0
    %1901 = vmatpush1.msra.mxu0 0.0
    %1902 = vmatprep.subr.mxu0 0.0
    %1903 = vmatpush1.msra.mxu0 0.0
    %1904 = vmatprep.subr.mxu0 0.0
    %1905 = vmatpush1.msra.mxu0 0.0
    %1906 = vmatprep.subr.mxu0 0.0
    %1907 = vmatpush1.msra.mxu0 0.0
    %1908 = vmatprep.subr.mxu0 0.0
    %1909 = vmatpush1.msra.mxu0 0.0
    %1910 = vmatprep.subr.mxu0 0.0
    %1911 = vmatpush1.msra.mxu0 0.0
    %1912 = vmatprep.subr.mxu0 0.0
    %1913 = vmatpush1.msra.mxu0 0.0
    %1914 = vmatprep.subr.mxu0 0.0
    %1915 = vmatpush1.msra.mxu0 0.0
    %1916 = vmatprep.subr.mxu0 0.0
    %1917 = vmatpush1.msra.mxu0 %v590
    %1918 = vmatprep.subr.mxu0 0.0
    %1919 = vmatpush1.msra.mxu0 %v589
    %1920 = vmatprep.subr.mxu0 0.0
    %1921 = vmatpush1.msra.mxu0 %v588
    %1922 = vmatprep.subr.mxu0 0.0
    %1923 = vmatpush1.msra.mxu0 %v587
    %1924 = vmatprep.subr.mxu0 0.0
    %1925 = vmatpush2.msra.mxu0 0.0
    %1926 = vmatprep.subr.mxu0 0.0
    %1927 = vmatpush2.msra.mxu0 0.0
    %1928 = vmatprep.subr.mxu0 0.0
    %1929 = vmatpush2.msra.mxu0 0.0
    %1930 = vmatprep.subr.mxu0 0.0
    %1931 = vmatpush2.msra.mxu0 0.0
    %1932 = vmatprep.subr.mxu0 0.0
    %1933 = vmatpush2.msra.mxu0 0.0
    %1934 = vmatprep.subr.mxu0 0.0
    %1935 = vmatpush2.msra.mxu0 0.0
    %1936 = vmatprep.subr.mxu0 0.0
    %1937 = vmatpush2.msra.mxu0 0.0
    %1938 = vmatprep.subr.mxu0 0.0
    %1939 = vmatpush2.msra.mxu0 0.0
    %1940 = vmatprep.subr.mxu0 0.0
    %1941 = vmatpush2.msra.mxu0 0.0
    %1942 = vmatprep.subr.mxu0 0.0
    %1943 = vmatpush2.msra.mxu0 0.0
    %1944 = vmatprep.subr.mxu0 0.0
    %1945 = vmatpush2.msra.mxu0 0.0
    %1946 = vmatprep.subr.mxu0 0.0
    %1947 = vmatpush2.msra.mxu0 0.0
    %1948 = vmatprep.subr.mxu0 0.0
    %1949 = vmatpush2.msra.mxu0 0.0
    %1950 = vmatprep.subr.mxu0 0.0
    %1951 = vmatpush2.msra.mxu0 0.0
    %1952 = vmatprep.subr.mxu0 0.0
    %1953 = vmatpush2.msra.mxu0 0.0
    %1954 = vmatprep.subr.mxu0 0.0
    %1955 = vmatpush2.msra.mxu0 0.0
    %1956 = vmatprep.mubr.f32.mxu0 0.0
    %1957 = vmatmul.mubr.f32.gmra.mxu0 %v1820
    %v1958 = vpop.f32.mrf.mxu0
    %v1959 = vadd.f32 0.0, %v1958
    %v1960 = vpop.f32.mrf.mxu0
    %1961 = vdwg.mxu0
    %v1962 = vadd.f32 %v1814, %v1889
    %v1963 = vxor.u32 %v1962, 2147483648
    %v1964 = vmul.f32 %v1963, 1.442695
    %v1965 = vpow.pop %v1964
    %v1966 = vadd.f32 %v1965, 1.0
    %v1967 = vrcp.pop %v1966
    %v1968 = vmul.f32 1.0, %v1967
    %v1969 = vadd.f32 %v1816, %v1959
    %v1970 = vxor.u32 %v1969, 2147483648
    %v1971 = vmul.f32 %v1970, 1.442695
    %v1972 = vpow.pop %v1971
    %v1973 = vadd.f32 %v1972, 1.0
    %v1974 = vrcp.pop %v1973
    %v1975 = vmul.f32 1.0, %v1974
    %1976 = vmatprep.subr.mxu0 0.0
    %1977 = vmatpush1.msra.mxu0 0.0
    %1978 = vmatprep.subr.mxu0 0.0
    %1979 = vmatpush1.msra.mxu0 0.0
    %1980 = vmatprep.subr.mxu0 0.0
    %1981 = vmatpush1.msra.mxu0 0.0
    %1982 = vmatprep.subr.mxu0 0.0
    %1983 = vmatpush1.msra.mxu0 0.0
    %1984 = vmatprep.subr.mxu0 0.0
    %1985 = vmatpush1.msra.mxu0 0.0
    %1986 = vmatprep.subr.mxu0 0.0
    %1987 = vmatpush1.msra.mxu0 0.0
    %1988 = vmatprep.subr.mxu0 0.0
    %1989 = vmatpush1.msra.mxu0 0.0
    %1990 = vmatprep.subr.mxu0 0.0
    %1991 = vmatpush1.msra.mxu0 0.0
    %1992 = vmatprep.subr.mxu0 0.0
    %1993 = vmatpush1.msra.mxu0 0.0
    %1994 = vmatprep.subr.mxu0 0.0
    %1995 = vmatpush1.msra.mxu0 0.0
    %1996 = vmatprep.subr.mxu0 0.0
    %1997 = vmatpush1.msra.mxu0 0.0
    %1998 = vmatprep.subr.mxu0 0.0
    %1999 = vmatpush1.msra.mxu0 0.0
    %2000 = vmatprep.subr.mxu0 0.0
    %2001 = vmatpush1.msra.mxu0 %v594
    %2002 = vmatprep.subr.mxu0 0.0
    %2003 = vmatpush1.msra.mxu0 %v593
    %2004 = vmatprep.subr.mxu0 0.0
    %2005 = vmatpush1.msra.mxu0 %v592
    %2006 = vmatprep.subr.mxu0 0.0
    %2007 = vmatpush1.msra.mxu0 %v591
    %2008 = vmatprep.subr.mxu0 0.0
    %2009 = vmatpush2.msra.mxu0 0.0
    %2010 = vmatprep.subr.mxu0 0.0
    %2011 = vmatpush2.msra.mxu0 0.0
    %2012 = vmatprep.subr.mxu0 0.0
    %2013 = vmatpush2.msra.mxu0 0.0
    %2014 = vmatprep.subr.mxu0 0.0
    %2015 = vmatpush2.msra.mxu0 0.0
    %2016 = vmatprep.subr.mxu0 0.0
    %2017 = vmatpush2.msra.mxu0 0.0
    %2018 = vmatprep.subr.mxu0 0.0
    %2019 = vmatpush2.msra.mxu0 0.0
    %2020 = vmatprep.subr.mxu0 0.0
    %2021 = vmatpush2.msra.mxu0 0.0
    %2022 = vmatprep.subr.mxu0 0.0
    %2023 = vmatpush2.msra.mxu0 0.0
    %2024 = vmatprep.subr.mxu0 0.0
    %2025 = vmatpush2.msra.mxu0 0.0
    %2026 = vmatprep.subr.mxu0 0.0
    %2027 = vmatpush2.msra.mxu0 0.0
    %2028 = vmatprep.subr.mxu0 0.0
    %2029 = vmatpush2.msra.mxu0 0.0
    %2030 = vmatprep.subr.mxu0 0.0
    %2031 = vmatpush2.msra.mxu0 0.0
    %2032 = vmatprep.subr.mxu0 0.0
    %2033 = vmatpush2.msra.mxu0 0.0
    %2034 = vmatprep.subr.mxu0 0.0
    %2035 = vmatpush2.msra.mxu0 0.0
    %2036 = vmatprep.subr.mxu0 0.0
    %2037 = vmatpush2.msra.mxu0 0.0
    %2038 = vmatprep.subr.mxu0 0.0
    %2039 = vmatpush2.msra.mxu0 0.0
    %2040 = vmatprep.mubr.f32.mxu0 0.0
    %2041 = vmatmul.mubr.f32.gmra.mxu0 %v1820
    %v2042 = vpop.f32.mrf.mxu0
    %v2043 = vadd.f32 %v600, %v2042
    %v2044 = vpop.f32.mrf.mxu0
    %2045 = vdwg.mxu0
    %v2046 = vmul.f32 %v1968, %v2043
    %v2047 = vadd.f32 %v1818, %v2046
    %v2048 = vtanh.pop %v2047
    %v2049 = vsub.f32 1.0, %v1975
    %v2050 = vmul.f32 %v2049, %v2048
    %v2051 = vmul.f32 %v1975, %v1812
    %v2052 = vadd.f32 %v2050, %v2051
    %vm2053 = vcmp.gt.s32.totalorder %v605, 5
    %v2054 = vsel %vm2053, %v2052, %v1812
    %s2055 = scalar_lea.vmem [#allocation2], 48
    %v2056 = vld [vmem:[%s2055] sm:$0xff]
    %s2057 = scalar_lea.vmem [#allocation3], 48
    %v2058 = vld [vmem:[%s2057] sm:$0xff]
    %s2059 = scalar_lea.vmem [#allocation4], 48
    %v2060 = vld [vmem:[%s2059] sm:$0xff]
    %v2062 = vsel %vm502, %v2054, 0
    %2064 = vmatprep.subr.mxu0 0.0
    %2065 = vmatpush1.msra.mxu0 0.0
    %2066 = vmatprep.subr.mxu0 0.0
    %2067 = vmatpush1.msra.mxu0 0.0
    %2068 = vmatprep.subr.mxu0 0.0
    %2069 = vmatpush1.msra.mxu0 0.0
    %2070 = vmatprep.subr.mxu0 0.0
    %2071 = vmatpush1.msra.mxu0 0.0
    %2072 = vmatprep.subr.mxu0 0.0
    %2073 = vmatpush1.msra.mxu0 0.0
    %2074 = vmatprep.subr.mxu0 0.0
    %2075 = vmatpush1.msra.mxu0 0.0
    %2076 = vmatprep.subr.mxu0 0.0
    %2077 = vmatpush1.msra.mxu0 0.0
    %2078 = vmatprep.subr.mxu0 0.0
    %2079 = vmatpush1.msra.mxu0 0.0
    %2080 = vmatprep.subr.mxu0 0.0
    %2081 = vmatpush1.msra.mxu0 0.0
    %2082 = vmatprep.subr.mxu0 0.0
    %2083 = vmatpush1.msra.mxu0 0.0
    %2084 = vmatprep.subr.mxu0 0.0
    %2085 = vmatpush1.msra.mxu0 0.0
    %2086 = vmatprep.subr.mxu0 0.0
    %2087 = vmatpush1.msra.mxu0 0.0
    %2088 = vmatprep.subr.mxu0 0.0
    %2089 = vmatpush1.msra.mxu0 %v586
    %2090 = vmatprep.subr.mxu0 0.0
    %2091 = vmatpush1.msra.mxu0 %v585
    %2092 = vmatprep.subr.mxu0 0.0
    %2093 = vmatpush1.msra.mxu0 %v584
    %2094 = vmatprep.subr.mxu0 0.0
    %2095 = vmatpush1.msra.mxu0 %v583
    %2096 = vmatprep.subr.mxu0 0.0
    %2097 = vmatpush2.msra.mxu0 0.0
    %2098 = vmatprep.subr.mxu0 0.0
    %2099 = vmatpush2.msra.mxu0 0.0
    %2100 = vmatprep.subr.mxu0 0.0
    %2101 = vmatpush2.msra.mxu0 0.0
    %2102 = vmatprep.subr.mxu0 0.0
    %2103 = vmatpush2.msra.mxu0 0.0
    %2104 = vmatprep.subr.mxu0 0.0
    %2105 = vmatpush2.msra.mxu0 0.0
    %2106 = vmatprep.subr.mxu0 0.0
    %2107 = vmatpush2.msra.mxu0 0.0
    %2108 = vmatprep.subr.mxu0 0.0
    %2109 = vmatpush2.msra.mxu0 0.0
    %2110 = vmatprep.subr.mxu0 0.0
    %2111 = vmatpush2.msra.mxu0 0.0
    %2112 = vmatprep.subr.mxu0 0.0
    %2113 = vmatpush2.msra.mxu0 0.0
    %2114 = vmatprep.subr.mxu0 0.0
    %2115 = vmatpush2.msra.mxu0 0.0
    %2116 = vmatprep.subr.mxu0 0.0
    %2117 = vmatpush2.msra.mxu0 0.0
    %2118 = vmatprep.subr.mxu0 0.0
    %2119 = vmatpush2.msra.mxu0 0.0
    %2120 = vmatprep.subr.mxu0 0.0
    %2121 = vmatpush2.msra.mxu0 0.0
    %2122 = vmatprep.subr.mxu0 0.0
    %2123 = vmatpush2.msra.mxu0 0.0
    %2124 = vmatprep.subr.mxu0 0.0
    %2125 = vmatpush2.msra.mxu0 0.0
    %2126 = vmatprep.subr.mxu0 0.0
    %2127 = vmatpush2.msra.mxu0 0.0
    %2128 = vmatprep.mubr.f32.mxu0 0.0
    %2129 = vmatmul.mubr.f32.gmra.mxu0 %v2062
    %v2130 = vpop.f32.mrf.mxu0
    %v2131 = vadd.f32 0.0, %v2130
    %v2132 = vpop.f32.mrf.mxu0
    %2133 = vdwg.mxu0
    %2134 = vmatprep.subr.mxu0 0.0
    %2135 = vmatpush1.msra.mxu0 0.0
    %2136 = vmatprep.subr.mxu0 0.0
    %2137 = vmatpush1.msra.mxu0 0.0
    %2138 = vmatprep.subr.mxu0 0.0
    %2139 = vmatpush1.msra.mxu0 0.0
    %2140 = vmatprep.subr.mxu0 0.0
    %2141 = vmatpush1.msra.mxu0 0.0
    %2142 = vmatprep.subr.mxu0 0.0
    %2143 = vmatpush1.msra.mxu0 0.0
    %2144 = vmatprep.subr.mxu0 0.0
    %2145 = vmatpush1.msra.mxu0 0.0
    %2146 = vmatprep.subr.mxu0 0.0
    %2147 = vmatpush1.msra.mxu0 0.0
    %2148 = vmatprep.subr.mxu0 0.0
    %2149 = vmatpush1.msra.mxu0 0.0
    %2150 = vmatprep.subr.mxu0 0.0
    %2151 = vmatpush1.msra.mxu0 0.0
    %2152 = vmatprep.subr.mxu0 0.0
    %2153 = vmatpush1.msra.mxu0 0.0
    %2154 = vmatprep.subr.mxu0 0.0
    %2155 = vmatpush1.msra.mxu0 0.0
    %2156 = vmatprep.subr.mxu0 0.0
    %2157 = vmatpush1.msra.mxu0 0.0
    %2158 = vmatprep.subr.mxu0 0.0
    %2159 = vmatpush1.msra.mxu0 %v590
    %2160 = vmatprep.subr.mxu0 0.0
    %2161 = vmatpush1.msra.mxu0 %v589
    %2162 = vmatprep.subr.mxu0 0.0
    %2163 = vmatpush1.msra.mxu0 %v588
    %2164 = vmatprep.subr.mxu0 0.0
    %2165 = vmatpush1.msra.mxu0 %v587
    %2166 = vmatprep.subr.mxu0 0.0
    %2167 = vmatpush2.msra.mxu0 0.0
    %2168 = vmatprep.subr.mxu0 0.0
    %2169 = vmatpush2.msra.mxu0 0.0
    %2170 = vmatprep.subr.mxu0 0.0
    %2171 = vmatpush2.msra.mxu0 0.0
    %2172 = vmatprep.subr.mxu0 0.0
    %2173 = vmatpush2.msra.mxu0 0.0
    %2174 = vmatprep.subr.mxu0 0.0
    %2175 = vmatpush2.msra.mxu0 0.0
    %2176 = vmatprep.subr.mxu0 0.0
    %2177 = vmatpush2.msra.mxu0 0.0
    %2178 = vmatprep.subr.mxu0 0.0
    %2179 = vmatpush2.msra.mxu0 0.0
    %2180 = vmatprep.subr.mxu0 0.0
    %2181 = vmatpush2.msra.mxu0 0.0
    %2182 = vmatprep.subr.mxu0 0.0
    %2183 = vmatpush2.msra.mxu0 0.0
    %2184 = vmatprep.subr.mxu0 0.0
    %2185 = vmatpush2.msra.mxu0 0.0
    %2186 = vmatprep.subr.mxu0 0.0
    %2187 = vmatpush2.msra.mxu0 0.0
    %2188 = vmatprep.subr.mxu0 0.0
    %2189 = vmatpush2.msra.mxu0 0.0
    %2190 = vmatprep.subr.mxu0 0.0
    %2191 = vmatpush2.msra.mxu0 0.0
    %2192 = vmatprep.subr.mxu0 0.0
    %2193 = vmatpush2.msra.mxu0 0.0
    %2194 = vmatprep.subr.mxu0 0.0
    %2195 = vmatpush2.msra.mxu0 0.0
    %2196 = vmatprep.subr.mxu0 0.0
    %2197 = vmatpush2.msra.mxu0 0.0
    %2198 = vmatprep.mubr.f32.mxu0 0.0
    %2199 = vmatmul.mubr.f32.gmra.mxu0 %v2062
    %v2200 = vpop.f32.mrf.mxu0
    %v2201 = vadd.f32 0.0, %v2200
    %v2202 = vpop.f32.mrf.mxu0
    %2203 = vdwg.mxu0
    %v2204 = vadd.f32 %v2056, %v2131
    %v2205 = vxor.u32 %v2204, 2147483648
    %v2206 = vmul.f32 %v2205, 1.442695
    %v2207 = vpow.pop %v2206
    %v2208 = vadd.f32 %v2207, 1.0
    %v2209 = vrcp.pop %v2208
    %v2210 = vmul.f32 1.0, %v2209
    %v2211 = vadd.f32 %v2058, %v2201
    %v2212 = vxor.u32 %v2211, 2147483648
    %v2213 = vmul.f32 %v2212, 1.442695
    %v2214 = vpow.pop %v2213
    %v2215 = vadd.f32 %v2214, 1.0
    %v2216 = vrcp.pop %v2215
    %v2217 = vmul.f32 1.0, %v2216
    %2218 = vmatprep.subr.mxu0 0.0
    %2219 = vmatpush1.msra.mxu0 0.0
    %2220 = vmatprep.subr.mxu0 0.0
    %2221 = vmatpush1.msra.mxu0 0.0
    %2222 = vmatprep.subr.mxu0 0.0
    %2223 = vmatpush1.msra.mxu0 0.0
    %2224 = vmatprep.subr.mxu0 0.0
    %2225 = vmatpush1.msra.mxu0 0.0
    %2226 = vmatprep.subr.mxu0 0.0
    %2227 = vmatpush1.msra.mxu0 0.0
    %2228 = vmatprep.subr.mxu0 0.0
    %2229 = vmatpush1.msra.mxu0 0.0
    %2230 = vmatprep.subr.mxu0 0.0
    %2231 = vmatpush1.msra.mxu0 0.0
    %2232 = vmatprep.subr.mxu0 0.0
    %2233 = vmatpush1.msra.mxu0 0.0
    %2234 = vmatprep.subr.mxu0 0.0
    %2235 = vmatpush1.msra.mxu0 0.0
    %2236 = vmatprep.subr.mxu0 0.0
    %2237 = vmatpush1.msra.mxu0 0.0
    %2238 = vmatprep.subr.mxu0 0.0
    %2239 = vmatpush1.msra.mxu0 0.0
    %2240 = vmatprep.subr.mxu0 0.0
    %2241 = vmatpush1.msra.mxu0 0.0
    %2242 = vmatprep.subr.mxu0 0.0
    %2243 = vmatpush1.msra.mxu0 %v594
    %2244 = vmatprep.subr.mxu0 0.0
    %2245 = vmatpush1.msra.mxu0 %v593
    %2246 = vmatprep.subr.mxu0 0.0
    %2247 = vmatpush1.msra.mxu0 %v592
    %2248 = vmatprep.subr.mxu0 0.0
    %2249 = vmatpush1.msra.mxu0 %v591
    %2250 = vmatprep.subr.mxu0 0.0
    %2251 = vmatpush2.msra.mxu0 0.0
    %2252 = vmatprep.subr.mxu0 0.0
    %2253 = vmatpush2.msra.mxu0 0.0
    %2254 = vmatprep.subr.mxu0 0.0
    %2255 = vmatpush2.msra.mxu0 0.0
    %2256 = vmatprep.subr.mxu0 0.0
    %2257 = vmatpush2.msra.mxu0 0.0
    %2258 = vmatprep.subr.mxu0 0.0
    %2259 = vmatpush2.msra.mxu0 0.0
    %2260 = vmatprep.subr.mxu0 0.0
    %2261 = vmatpush2.msra.mxu0 0.0
    %2262 = vmatprep.subr.mxu0 0.0
    %2263 = vmatpush2.msra.mxu0 0.0
    %2264 = vmatprep.subr.mxu0 0.0
    %2265 = vmatpush2.msra.mxu0 0.0
    %2266 = vmatprep.subr.mxu0 0.0
    %2267 = vmatpush2.msra.mxu0 0.0
    %2268 = vmatprep.subr.mxu0 0.0
    %2269 = vmatpush2.msra.mxu0 0.0
    %2270 = vmatprep.subr.mxu0 0.0
    %2271 = vmatpush2.msra.mxu0 0.0
    %2272 = vmatprep.subr.mxu0 0.0
    %2273 = vmatpush2.msra.mxu0 0.0
    %2274 = vmatprep.subr.mxu0 0.0
    %2275 = vmatpush2.msra.mxu0 0.0
    %2276 = vmatprep.subr.mxu0 0.0
    %2277 = vmatpush2.msra.mxu0 0.0
    %2278 = vmatprep.subr.mxu0 0.0
    %2279 = vmatpush2.msra.mxu0 0.0
    %2280 = vmatprep.subr.mxu0 0.0
    %2281 = vmatpush2.msra.mxu0 0.0
    %2282 = vmatprep.mubr.f32.mxu0 0.0
    %2283 = vmatmul.mubr.f32.gmra.mxu0 %v2062
    %v2284 = vpop.f32.mrf.mxu0
    %v2285 = vadd.f32 %v600, %v2284
    %v2286 = vpop.f32.mrf.mxu0
    %2287 = vdwg.mxu0
    %v2288 = vmul.f32 %v2210, %v2285
    %v2289 = vadd.f32 %v2060, %v2288
    %v2290 = vtanh.pop %v2289
    %v2291 = vsub.f32 1.0, %v2217
    %v2292 = vmul.f32 %v2291, %v2290
    %v2293 = vmul.f32 %v2217, %v2054
    %v2294 = vadd.f32 %v2292, %v2293
    %vm2295 = vcmp.gt.s32.totalorder %v605, 6
    %v2296 = vsel %vm2295, %v2294, %v2054
    %s2297 = scalar_lea.vmem [#allocation2], 56
    %v2298 = vld [vmem:[%s2297] sm:$0xff]
    %s2299 = scalar_lea.vmem [#allocation3], 56
    %v2300 = vld [vmem:[%s2299] sm:$0xff]
    %s2301 = scalar_lea.vmem [#allocation4], 56
    %v2302 = vld [vmem:[%s2301] sm:$0xff]
    %v2304 = vsel %vm502, %v2296, 0
    %2306 = vmatprep.subr.mxu0 0.0
    %2307 = vmatpush1.msra.mxu0 0.0
    %2308 = vmatprep.subr.mxu0 0.0
    %2309 = vmatpush1.msra.mxu0 0.0
    %2310 = vmatprep.subr.mxu0 0.0
    %2311 = vmatpush1.msra.mxu0 0.0
    %2312 = vmatprep.subr.mxu0 0.0
    %2313 = vmatpush1.msra.mxu0 0.0
    %2314 = vmatprep.subr.mxu0 0.0
    %2315 = vmatpush1.msra.mxu0 0.0
    %2316 = vmatprep.subr.mxu0 0.0
    %2317 = vmatpush1.msra.mxu0 0.0
    %2318 = vmatprep.subr.mxu0 0.0
    %2319 = vmatpush1.msra.mxu0 0.0
    %2320 = vmatprep.subr.mxu0 0.0
    %2321 = vmatpush1.msra.mxu0 0.0
    %2322 = vmatprep.subr.mxu0 0.0
    %2323 = vmatpush1.msra.mxu0 0.0
    %2324 = vmatprep.subr.mxu0 0.0
    %2325 = vmatpush1.msra.mxu0 0.0
    %2326 = vmatprep.subr.mxu0 0.0
    %2327 = vmatpush1.msra.mxu0 0.0
    %2328 = vmatprep.subr.mxu0 0.0
    %2329 = vmatpush1.msra.mxu0 0.0
    %2330 = vmatprep.subr.mxu0 0.0
    %2331 = vmatpush1.msra.mxu0 %v586
    %2332 = vmatprep.subr.mxu0 0.0
    %2333 = vmatpush1.msra.mxu0 %v585
    %2334 = vmatprep.subr.mxu0 0.0
    %2335 = vmatpush1.msra.mxu0 %v584
    %2336 = vmatprep.subr.mxu0 0.0
    %2337 = vmatpush1.msra.mxu0 %v583
    %2338 = vmatprep.subr.mxu0 0.0
    %2339 = vmatpush2.msra.mxu0 0.0
    %2340 = vmatprep.subr.mxu0 0.0
    %2341 = vmatpush2.msra.mxu0 0.0
    %2342 = vmatprep.subr.mxu0 0.0
    %2343 = vmatpush2.msra.mxu0 0.0
    %2344 = vmatprep.subr.mxu0 0.0
    %2345 = vmatpush2.msra.mxu0 0.0
    %2346 = vmatprep.subr.mxu0 0.0
    %2347 = vmatpush2.msra.mxu0 0.0
    %2348 = vmatprep.subr.mxu0 0.0
    %2349 = vmatpush2.msra.mxu0 0.0
    %2350 = vmatprep.subr.mxu0 0.0
    %2351 = vmatpush2.msra.mxu0 0.0
    %2352 = vmatprep.subr.mxu0 0.0
    %2353 = vmatpush2.msra.mxu0 0.0
    %2354 = vmatprep.subr.mxu0 0.0
    %2355 = vmatpush2.msra.mxu0 0.0
    %2356 = vmatprep.subr.mxu0 0.0
    %2357 = vmatpush2.msra.mxu0 0.0
    %2358 = vmatprep.subr.mxu0 0.0
    %2359 = vmatpush2.msra.mxu0 0.0
    %2360 = vmatprep.subr.mxu0 0.0
    %2361 = vmatpush2.msra.mxu0 0.0
    %2362 = vmatprep.subr.mxu0 0.0
    %2363 = vmatpush2.msra.mxu0 0.0
    %2364 = vmatprep.subr.mxu0 0.0
    %2365 = vmatpush2.msra.mxu0 0.0
    %2366 = vmatprep.subr.mxu0 0.0
    %2367 = vmatpush2.msra.mxu0 0.0
    %2368 = vmatprep.subr.mxu0 0.0
    %2369 = vmatpush2.msra.mxu0 0.0
    %2370 = vmatprep.mubr.f32.mxu0 0.0
    %2371 = vmatmul.mubr.f32.gmra.mxu0 %v2304
    %v2372 = vpop.f32.mrf.mxu0
    %v2373 = vadd.f32 0.0, %v2372
    %v2374 = vpop.f32.mrf.mxu0
    %2375 = vdwg.mxu0
    %2376 = vmatprep.subr.mxu0 0.0
    %2377 = vmatpush1.msra.mxu0 0.0
    %2378 = vmatprep.subr.mxu0 0.0
    %2379 = vmatpush1.msra.mxu0 0.0
    %2380 = vmatprep.subr.mxu0 0.0
    %2381 = vmatpush1.msra.mxu0 0.0
    %2382 = vmatprep.subr.mxu0 0.0
    %2383 = vmatpush1.msra.mxu0 0.0
    %2384 = vmatprep.subr.mxu0 0.0
    %2385 = vmatpush1.msra.mxu0 0.0
    %2386 = vmatprep.subr.mxu0 0.0
    %2387 = vmatpush1.msra.mxu0 0.0
    %2388 = vmatprep.subr.mxu0 0.0
    %2389 = vmatpush1.msra.mxu0 0.0
    %2390 = vmatprep.subr.mxu0 0.0
    %2391 = vmatpush1.msra.mxu0 0.0
    %2392 = vmatprep.subr.mxu0 0.0
    %2393 = vmatpush1.msra.mxu0 0.0
    %2394 = vmatprep.subr.mxu0 0.0
    %2395 = vmatpush1.msra.mxu0 0.0
    %2396 = vmatprep.subr.mxu0 0.0
    %2397 = vmatpush1.msra.mxu0 0.0
    %2398 = vmatprep.subr.mxu0 0.0
    %2399 = vmatpush1.msra.mxu0 0.0
    %2400 = vmatprep.subr.mxu0 0.0
    %2401 = vmatpush1.msra.mxu0 %v590
    %2402 = vmatprep.subr.mxu0 0.0
    %2403 = vmatpush1.msra.mxu0 %v589
    %2404 = vmatprep.subr.mxu0 0.0
    %2405 = vmatpush1.msra.mxu0 %v588
    %2406 = vmatprep.subr.mxu0 0.0
    %2407 = vmatpush1.msra.mxu0 %v587
    %2408 = vmatprep.subr.mxu0 0.0
    %2409 = vmatpush2.msra.mxu0 0.0
    %2410 = vmatprep.subr.mxu0 0.0
    %2411 = vmatpush2.msra.mxu0 0.0
    %2412 = vmatprep.subr.mxu0 0.0
    %2413 = vmatpush2.msra.mxu0 0.0
    %2414 = vmatprep.subr.mxu0 0.0
    %2415 = vmatpush2.msra.mxu0 0.0
    %2416 = vmatprep.subr.mxu0 0.0
    %2417 = vmatpush2.msra.mxu0 0.0
    %2418 = vmatprep.subr.mxu0 0.0
    %2419 = vmatpush2.msra.mxu0 0.0
    %2420 = vmatprep.subr.mxu0 0.0
    %2421 = vmatpush2.msra.mxu0 0.0
    %2422 = vmatprep.subr.mxu0 0.0
    %2423 = vmatpush2.msra.mxu0 0.0
    %2424 = vmatprep.subr.mxu0 0.0
    %2425 = vmatpush2.msra.mxu0 0.0
    %2426 = vmatprep.subr.mxu0 0.0
    %2427 = vmatpush2.msra.mxu0 0.0
    %2428 = vmatprep.subr.mxu0 0.0
    %2429 = vmatpush2.msra.mxu0 0.0
    %2430 = vmatprep.subr.mxu0 0.0
    %2431 = vmatpush2.msra.mxu0 0.0
    %2432 = vmatprep.subr.mxu0 0.0
    %2433 = vmatpush2.msra.mxu0 0.0
    %2434 = vmatprep.subr.mxu0 0.0
    %2435 = vmatpush2.msra.mxu0 0.0
    %2436 = vmatprep.subr.mxu0 0.0
    %2437 = vmatpush2.msra.mxu0 0.0
    %2438 = vmatprep.subr.mxu0 0.0
    %2439 = vmatpush2.msra.mxu0 0.0
    %2440 = vmatprep.mubr.f32.mxu0 0.0
    %2441 = vmatmul.mubr.f32.gmra.mxu0 %v2304
    %v2442 = vpop.f32.mrf.mxu0
    %v2443 = vadd.f32 0.0, %v2442
    %v2444 = vpop.f32.mrf.mxu0
    %2445 = vdwg.mxu0
    %v2446 = vadd.f32 %v2298, %v2373
    %v2447 = vxor.u32 %v2446, 2147483648
    %v2448 = vmul.f32 %v2447, 1.442695
    %v2449 = vpow.pop %v2448
    %v2450 = vadd.f32 %v2449, 1.0
    %v2451 = vrcp.pop %v2450
    %v2452 = vmul.f32 1.0, %v2451
    %v2453 = vadd.f32 %v2300, %v2443
    %v2454 = vxor.u32 %v2453, 2147483648
    %v2455 = vmul.f32 %v2454, 1.442695
    %v2456 = vpow.pop %v2455
    %v2457 = vadd.f32 %v2456, 1.0
    %v2458 = vrcp.pop %v2457
    %v2459 = vmul.f32 1.0, %v2458
    %2460 = vmatprep.subr.mxu0 0.0
    %2461 = vmatpush1.msra.mxu0 0.0
    %2462 = vmatprep.subr.mxu0 0.0
    %2463 = vmatpush1.msra.mxu0 0.0
    %2464 = vmatprep.subr.mxu0 0.0
    %2465 = vmatpush1.msra.mxu0 0.0
    %2466 = vmatprep.subr.mxu0 0.0
    %2467 = vmatpush1.msra.mxu0 0.0
    %2468 = vmatprep.subr.mxu0 0.0
    %2469 = vmatpush1.msra.mxu0 0.0
    %2470 = vmatprep.subr.mxu0 0.0
    %2471 = vmatpush1.msra.mxu0 0.0
    %2472 = vmatprep.subr.mxu0 0.0
    %2473 = vmatpush1.msra.mxu0 0.0
    %2474 = vmatprep.subr.mxu0 0.0
    %2475 = vmatpush1.msra.mxu0 0.0
    %2476 = vmatprep.subr.mxu0 0.0
    %2477 = vmatpush1.msra.mxu0 0.0
    %2478 = vmatprep.subr.mxu0 0.0
    %2479 = vmatpush1.msra.mxu0 0.0
    %2480 = vmatprep.subr.mxu0 0.0
    %2481 = vmatpush1.msra.mxu0 0.0
    %2482 = vmatprep.subr.mxu0 0.0
    %2483 = vmatpush1.msra.mxu0 0.0
    %2484 = vmatprep.subr.mxu0 0.0
    %2485 = vmatpush1.msra.mxu0 %v594
    %2486 = vmatprep.subr.mxu0 0.0
    %2487 = vmatpush1.msra.mxu0 %v593
    %2488 = vmatprep.subr.mxu0 0.0
    %2489 = vmatpush1.msra.mxu0 %v592
    %2490 = vmatprep.subr.mxu0 0.0
    %2491 = vmatpush1.msra.mxu0 %v591
    %2492 = vmatprep.subr.mxu0 0.0
    %2493 = vmatpush2.msra.mxu0 0.0
    %2494 = vmatprep.subr.mxu0 0.0
    %2495 = vmatpush2.msra.mxu0 0.0
    %2496 = vmatprep.subr.mxu0 0.0
    %2497 = vmatpush2.msra.mxu0 0.0
    %2498 = vmatprep.subr.mxu0 0.0
    %2499 = vmatpush2.msra.mxu0 0.0
    %2500 = vmatprep.subr.mxu0 0.0
    %2501 = vmatpush2.msra.mxu0 0.0
    %2502 = vmatprep.subr.mxu0 0.0
    %2503 = vmatpush2.msra.mxu0 0.0
    %2504 = vmatprep.subr.mxu0 0.0
    %2505 = vmatpush2.msra.mxu0 0.0
    %2506 = vmatprep.subr.mxu0 0.0
    %2507 = vmatpush2.msra.mxu0 0.0
    %2508 = vmatprep.subr.mxu0 0.0
    %2509 = vmatpush2.msra.mxu0 0.0
    %2510 = vmatprep.subr.mxu0 0.0
    %2511 = vmatpush2.msra.mxu0 0.0
    %2512 = vmatprep.subr.mxu0 0.0
    %2513 = vmatpush2.msra.mxu0 0.0
    %2514 = vmatprep.subr.mxu0 0.0
    %2515 = vmatpush2.msra.mxu0 0.0
    %2516 = vmatprep.subr.mxu0 0.0
    %2517 = vmatpush2.msra.mxu0 0.0
    %2518 = vmatprep.subr.mxu0 0.0
    %2519 = vmatpush2.msra.mxu0 0.0
    %2520 = vmatprep.subr.mxu0 0.0
    %2521 = vmatpush2.msra.mxu0 0.0
    %2522 = vmatprep.subr.mxu0 0.0
    %2523 = vmatpush2.msra.mxu0 0.0
    %2524 = vmatprep.mubr.f32.mxu0 0.0
    %2525 = vmatmul.mubr.f32.gmra.mxu0 %v2304
    %v2526 = vpop.f32.mrf.mxu0
    %v2527 = vadd.f32 %v600, %v2526
    %v2528 = vpop.f32.mrf.mxu0
    %2529 = vdwg.mxu0
    %v2530 = vmul.f32 %v2452, %v2527
    %v2531 = vadd.f32 %v2302, %v2530
    %v2532 = vtanh.pop %v2531
    %v2533 = vsub.f32 1.0, %v2459
    %v2534 = vmul.f32 %v2533, %v2532
    %v2535 = vmul.f32 %v2459, %v2296
    %v2536 = vadd.f32 %v2534, %v2535
    %vm2537 = vcmp.gt.s32.totalorder %v605, 7
    %v2538 = vsel %vm2537, %v2536, %v2296
    %v2539 = vld [vmem:[%s8] sm:$0xff]
    %v2540 = vld [vmem:[%s8 + $0x8] sm:$0xff]
    %v2541 = vld [vmem:[%s8 + $0x10] sm:$0xff]
    %v2542 = vld [vmem:[%s8 + $0x18] sm:$0xff]
    %v2543 = vld [vmem:[%s9] sm:$0x1]
    %v2545 = vlaneseq
    %v2546 = vshrl.u32 %v2545, 7
    %v2547 = vsub.s32 0, %v2546
    %v2548 = vrot.slane %v2543, %v2547
    %v2551 = vsel %vm502, %v2538, 0
    %2553 = vmatprep.subr.mxu0 0.0
    %2554 = vmatpush1.msra.mxu0 0.0
    %2555 = vmatprep.subr.mxu0 0.0
    %2556 = vmatpush1.msra.mxu0 0.0
    %2557 = vmatprep.subr.mxu0 0.0
    %2558 = vmatpush1.msra.mxu0 0.0
    %2559 = vmatprep.subr.mxu0 0.0
    %2560 = vmatpush1.msra.mxu0 0.0
    %2561 = vmatprep.subr.mxu0 0.0
    %2562 = vmatpush1.msra.mxu0 0.0
    %2563 = vmatprep.subr.mxu0 0.0
    %2564 = vmatpush1.msra.mxu0 0.0
    %2565 = vmatprep.subr.mxu0 0.0
    %2566 = vmatpush1.msra.mxu0 0.0
    %2567 = vmatprep.subr.mxu0 0.0
    %2568 = vmatpush1.msra.mxu0 0.0
    %2569 = vmatprep.subr.mxu0 0.0
    %2570 = vmatpush1.msra.mxu0 0.0
    %2571 = vmatprep.subr.mxu0 0.0
    %2572 = vmatpush1.msra.mxu0 0.0
    %2573 = vmatprep.subr.mxu0 0.0
    %2574 = vmatpush1.msra.mxu0 0.0
    %2575 = vmatprep.subr.mxu0 0.0
    %2576 = vmatpush1.msra.mxu0 0.0
    %2577 = vmatprep.subr.mxu0 0.0
    %2578 = vmatpush1.msra.mxu0 %v2542
    %2579 = vmatprep.subr.mxu0 0.0
    %2580 = vmatpush1.msra.mxu0 %v2541
    %2581 = vmatprep.subr.mxu0 0.0
    %2582 = vmatpush1.msra.mxu0 %v2540
    %2583 = vmatprep.subr.mxu0 0.0
    %2584 = vmatpush1.msra.mxu0 %v2539
    %2585 = vmatprep.subr.mxu0 0.0
    %2586 = vmatpush2.msra.mxu0 0.0
    %2587 = vmatprep.subr.mxu0 0.0
    %2588 = vmatpush2.msra.mxu0 0.0
    %2589 = vmatprep.subr.mxu0 0.0
    %2590 = vmatpush2.msra.mxu0 0.0
    %2591 = vmatprep.subr.mxu0 0.0
    %2592 = vmatpush2.msra.mxu0 0.0
    %2593 = vmatprep.subr.mxu0 0.0
    %2594 = vmatpush2.msra.mxu0 0.0
    %2595 = vmatprep.subr.mxu0 0.0
    %2596 = vmatpush2.msra.mxu0 0.0
    %2597 = vmatprep.subr.mxu0 0.0
    %2598 = vmatpush2.msra.mxu0 0.0
    %2599 = vmatprep.subr.mxu0 0.0
    %2600 = vmatpush2.msra.mxu0 0.0
    %2601 = vmatprep.subr.mxu0 0.0
    %2602 = vmatpush2.msra.mxu0 0.0
    %2603 = vmatprep.subr.mxu0 0.0
    %2604 = vmatpush2.msra.mxu0 0.0
    %2605 = vmatprep.subr.mxu0 0.0
    %2606 = vmatpush2.msra.mxu0 0.0
    %2607 = vmatprep.subr.mxu0 0.0
    %2608 = vmatpush2.msra.mxu0 0.0
    %2609 = vmatprep.subr.mxu0 0.0
    %2610 = vmatpush2.msra.mxu0 0.0
    %2611 = vmatprep.subr.mxu0 0.0
    %2612 = vmatpush2.msra.mxu0 0.0
    %2613 = vmatprep.subr.mxu0 0.0
    %2614 = vmatpush2.msra.mxu0 0.0
    %2615 = vmatprep.subr.mxu0 0.0
    %2616 = vmatpush2.msra.mxu0 0.0
    %2617 = vmatprep.mubr.f32.mxu0 0.0
    %2618 = vmatmul.mubr.f32.gmra.mxu0 %v2551
    %v2619 = vpop.f32.mrf.mxu0
    %v2620 = vadd.f32 %v2548, %v2619
    %v2621 = vpop.f32.mrf.mxu0
    %2622 = vdwg.mxu0
    %vm2623 = vcmask 130048
    %2624 = vst.msk [vmem:[#allocation5] sm:$0xff] %vm2623, %v2620
    // Predicated region
    $region42: #{tpu_custom_call.1} parent=1 // pred_check
      _
    $region43: #{tpu_custom_call.1} parent=1 // pred_check_branch
      %2626 = sbr.rel (0) target = $region45
    $region44: #{tpu_custom_call.1} parent=1 // pred_region
      %s2628 = ssub.s32 128, 128
      %2629 = vsyncadd [#allocation6], %s2628
      %s2631 = sshll.u32 [#allocation5], 4
      %s2632 = int_to_ptr.vmem [resolvable:$true] %s2631
      %2634 = dma.vmem_to_hbm [thread:$0]  %s2632, 128, %s10, [#allocation6]
    $region45: #{tpu_custom_call.1} parent=1 // pred_fallthru
      _
    // Predicated region
    $region46: #{tpu_custom_call.1} parent=1 // pred_check
      _
    $region47: #{tpu_custom_call.1} parent=1 // pred_check_branch
      %2636 = sbr.rel (0) target = $region49
    $region48: #{tpu_custom_call.1} parent=1 // pred_region
      %2637 = dma.done [#allocation6], 128
    $region49: #{tpu_custom_call.1} parent=1 // pred_fallthru
      _
    %2638 = vsyncpa [#allocation6], 1

</llo_original>
